<compile_context>
chip_gen: v5e
topology: v5e:2x2
jax: 0.10.0
libtpu: 0.0.40
codegen_flags: <defaults>
</compile_context>

<pallas_src>
import jax
import jax.numpy as jnp
from jax.experimental import pallas as pl
from jax.experimental.pallas import tpu as pltpu

_TM_MAX = 1024   # conv tile rows (block is a VMEM temp; 1024-row conv2 block ~2.3 MB bf16)
_TB_MAX = 512    # mlp tile rows


# ----------------------------- Pallas kernels --------------------------------

def conv_relu_pool_kernel(p_ref, w_ref, b_ref, o_ref):
    """Fused conv (im2col matmul) + 2x2 max-pool + bias + ReLU for one TM-row tile.

    p_ref: [4, TM, K]  bf16 im2col patches; leading axis enumerates the 2x2 pool window
    w_ref: [K, Cout]   bf16 conv weights (resident across the grid)
    b_ref: [1, Cout]   f32 bias (resident)
    o_ref: [TM, Cout]  bf16 pooled + ReLU'd activations (rows = (b, hp, wp))
    """
    four, tm, k = p_ref.shape
    c_out = w_ref.shape[1]
    # One stacked matmul keeps the MXU streaming (single weight push / drain), then a
    # cheap VPU max-reduce over the 4 pool positions.  Bias is added once after the max
    # (max(a+b, c+b) = max(a, c)+b) and max_pool(relu(.)) == relu(max_pool(.)).
    z = jnp.dot(p_ref[...].reshape(four * tm, k), w_ref[...],
                preferred_element_type=jnp.float32)
    z = jnp.max(z.reshape(four, tm, c_out), axis=0)
    o_ref[...] = jnp.maximum(z + b_ref[...], 0.0).astype(o_ref.dtype)


def mlp_kernel(x_ref, w1_ref, b1_ref, w2_ref, b2_ref, o_ref):
    """Fused fc1 + ReLU + fc2 for one TB-row batch tile (weights resident, bf16 MXU inputs)."""
    h = jnp.dot(x_ref[...], w1_ref[...], preferred_element_type=jnp.float32) + b1_ref[...]
    h = jnp.maximum(h, 0.0).astype(w2_ref.dtype)
    o_ref[...] = (jnp.dot(h, w2_ref[...], preferred_element_type=jnp.float32)
                  + b2_ref[...]).astype(o_ref.dtype)


# ------------------------------ wrappers --------------------------------------

def _pick_tile(m, max_tile):
    """Multiple-of-8 row tile, capped at max_tile, preferring >= 2 grid steps (v7x megacore)."""
    half = ((m + 1) // 2 + 7) // 8 * 8
    return max(8, min(max_tile, half))


def _conv_relu_pool(patches, w_mat, bias, out_dtype=jnp.bfloat16):
    four, m, k = patches.shape
    c_out = w_mat.shape[1]
    tm = _pick_tile(m, _TM_MAX)
    grid = (pl.cdiv(m, tm),)
    cost = pl.CostEstimate(
        flops=2 * four * m * k * c_out,
        transcendentals=0,
        bytes_accessed=(patches.size * patches.dtype.itemsize
                        + w_mat.size * w_mat.dtype.itemsize
                        + c_out * 4
                        + m * c_out * jnp.dtype(out_dtype).itemsize))
    return pl.pallas_call(
        conv_relu_pool_kernel,
        out_shape=jax.ShapeDtypeStruct((m, c_out), out_dtype),
        grid=grid,
        in_specs=[
            pl.BlockSpec((four, tm, k), lambda i: (0, i, 0)),     # patch tile, pipelined
            pl.BlockSpec((k, c_out), lambda i: (0, 0)),           # weights resident
            pl.BlockSpec((1, c_out), lambda i: (0, 0)),           # bias resident
        ],
        out_specs=pl.BlockSpec((tm, c_out), lambda i: (i, 0)),
        compiler_params=pltpu.CompilerParams(dimension_semantics=("parallel",)),
        cost_estimate=cost,
    )(patches, w_mat, bias.reshape(1, -1).astype(jnp.float32))


def _mlp(x, w1, b1, w2, b2):
    batch, d_in = x.shape
    d_hid = w1.shape[1]
    d_out = w2.shape[1]
    tb = _pick_tile(batch, _TB_MAX)
    grid = (pl.cdiv(batch, tb),)
    cost = pl.CostEstimate(
        flops=2 * batch * (d_in * d_hid + d_hid * d_out),
        transcendentals=0,
        bytes_accessed=(x.size * x.dtype.itemsize
                        + w1.size * w1.dtype.itemsize + d_hid * 4
                        + w2.size * w2.dtype.itemsize + d_out * 4
                        + batch * d_out * 4))
    return pl.pallas_call(
        mlp_kernel,
        out_shape=jax.ShapeDtypeStruct((batch, d_out), jnp.float32),
        grid=grid,
        in_specs=[
            pl.BlockSpec((tb, d_in), lambda i: (i, 0)),           # batch tile, pipelined
            pl.BlockSpec((d_in, d_hid), lambda i: (0, 0)),        # fc1 weights resident
            pl.BlockSpec((1, d_hid), lambda i: (0, 0)),
            pl.BlockSpec((d_hid, d_out), lambda i: (0, 0)),       # fc2 weights resident
            pl.BlockSpec((1, d_out), lambda i: (0, 0)),
        ],
        out_specs=pl.BlockSpec((tb, d_out), lambda i: (i, 0)),    # 128 lanes -> dense stores
        compiler_params=pltpu.CompilerParams(dimension_semantics=("parallel",)),
        cost_estimate=cost,
    )(x, w1, b1.reshape(1, -1).astype(jnp.float32), w2, b2.reshape(1, -1).astype(jnp.float32))


def _im2col_pool_groups(x_nhwc, ksize=3, pad_k_to=None):
    """Glue: rearrange NHWC input into [4, B*Hp*Wp, K] patch matrices (K = ksize*ksize*Cin).

    Group index p = 2*dh + dw enumerates the 2x2 max-pool window positions of the (VALID)
    conv output. K ordering is (kh, kw, cin), matching OIHW->(kh,kw,ci,co) weights.
    Optionally zero-pads K up to `pad_k_to` (aligned DMA rows / less MXU under-fill).
    """
    B, H, W, Cin = x_nhwc.shape
    Ho, Wo = H - ksize + 1, W - ksize + 1
    cols = [x_nhwc[:, kh:kh + Ho, kw:kw + Wo, :]
            for kh in range(ksize) for kw in range(ksize)]
    patches = jnp.concatenate(cols, axis=-1)                  # [B, Ho, Wo, K]
    Hp, Wp = Ho // 2, Wo // 2                                 # floor, like torch.max_pool2d
    patches = patches[:, :Hp * 2, :Wp * 2, :]
    K = patches.shape[-1]
    patches = patches.reshape(B, Hp, 2, Wp, 2, K)
    patches = patches.transpose(2, 4, 0, 1, 3, 5).reshape(4, B * Hp * Wp, K)
    if pad_k_to is not None and pad_k_to > K:
        patches = jnp.pad(patches, ((0, 0), (0, 0), (0, pad_k_to - K)))
    return patches, (B, Hp, Wp)


def init_params(key):
    """Deterministic synthetic parameters with nn.Conv2d / nn.Linear shapes (f32 master copy)."""
    ks = jax.random.split(key, 8)

    def u(k, shape, fan_in):
        bound = 1.0 / jnp.sqrt(jnp.float32(fan_in))
        return jax.random.uniform(k, shape, jnp.float32, -bound, bound)

    return dict(
        conv1_w=u(ks[0], (32, 3, 3, 3), 3 * 9),     # OIHW, like nn.Conv2d(3, 32, 3)
        conv1_b=u(ks[1], (32,), 3 * 9),
        conv2_w=u(ks[2], (64, 32, 3, 3), 32 * 9),   # nn.Conv2d(32, 64, 3)
        conv2_b=u(ks[3], (64,), 32 * 9),
        fc1_w=u(ks[4], (64 * 6 * 6, 128), 64 * 6 * 6),  # stored [in, out], NCHW-flatten rows
        fc1_b=u(ks[5], (128,), 64 * 6 * 6),
        fc2_w=u(ks[6], (128, 43), 128),
        fc2_b=u(ks[7], (43,), 128),
    )


def traffic_sign_net(params, x_nchw):
    """Forward pass matching TrafficSignNet.forward. x_nchw: [B, 3, 32, 32] float32."""
    B = x_nchw.shape[0]
    # NCHW -> NHWC and cast to bf16: feeds the MXU natively and halves all patch DMA bytes.
    x = jnp.transpose(x_nchw, (0, 2, 3, 1)).astype(jnp.bfloat16)

    # conv1 + relu + maxpool2   ([B,3,32,32] -> [B,32,15,15] in torch terms)
    c1 = params['conv1_w'].shape[0]
    w1 = jnp.transpose(params['conv1_w'], (2, 3, 1, 0)).reshape(3 * 3 * 3, c1)
    k1 = w1.shape[0]
    k1_pad = ((k1 + 31) // 32) * 32                                      # 27 -> 32
    w1 = jnp.pad(w1, ((0, k1_pad - k1), (0, 0))).astype(jnp.bfloat16)
    p1, (B1, Hp1, Wp1) = _im2col_pool_groups(x, pad_k_to=k1_pad)
    y1 = _conv_relu_pool(p1, w1, params['conv1_b']).reshape(B1, Hp1, Wp1, c1)

    # conv2 + relu + maxpool2   (-> [B,64,6,6])
    c2 = params['conv2_w'].shape[0]
    cin2 = params['conv2_w'].shape[1]
    w2 = (jnp.transpose(params['conv2_w'], (2, 3, 1, 0))
          .reshape(3 * 3 * cin2, c2).astype(jnp.bfloat16))
    p2, (B2, Hp2, Wp2) = _im2col_pool_groups(y1)
    y2 = _conv_relu_pool(p2, w2, params['conv2_b']).reshape(B2, Hp2, Wp2, c2)

    # torch.flatten(x, 1) is in (C,H,W) order; instead of transposing the activation we
    # permute fc1's rows (weight-side, trace-time constant) to accept NHWC-flatten order.
    feat = y2.reshape(B, Hp2 * Wp2 * c2)                                 # (h, w, c) order, bf16
    fc1_w_hwc = (params['fc1_w']
                 .reshape(c2, Hp2, Wp2, -1)                              # rows were (c, h, w)
                 .transpose(1, 2, 0, 3)
                 .reshape(c2 * Hp2 * Wp2, -1)).astype(jnp.bfloat16)

    # fc2 padded to 128 output lanes so the MLP kernel's stores are lane-dense.
    n_cls = params['fc2_w'].shape[1]
    d_pad = ((n_cls + 127) // 128) * 128
    fc2_w_pad = jnp.pad(params['fc2_w'], ((0, 0), (0, d_pad - n_cls))).astype(jnp.bfloat16)
    fc2_b_pad = jnp.pad(params['fc2_b'], (0, d_pad - n_cls))

    # Zero-pad the batch so the MLP call gets >= 2 parallel grid steps (8-row tiles) on v7x.
    b_pad = max(16, ((B + 7) // 8) * 8)
    if b_pad != B:
        feat = jnp.pad(feat, ((0, b_pad - B), (0, 0)))

    logits = _mlp(feat, fc1_w_hwc, params['fc1_b'], fc2_w_pad, fc2_b_pad)
    return logits[:B, :n_cls]


def reference_forward(params, x_nchw):
    """Plain-JAX f32 reference with identical semantics (for validation)."""
    dn = ('NCHW', 'OIHW', 'NCHW')
    y = jax.lax.conv_general_dilated(x_nchw, params['conv1_w'], (1, 1), 'VALID',
                                     dimension_numbers=dn)
    y = jnp.maximum(y + params['conv1_b'].reshape(1, -1, 1, 1), 0.0)
    y = jax.lax.reduce_window(y, -jnp.inf, jax.lax.max, (1, 1, 2, 2), (1, 1, 2, 2), 'VALID')
    y = jax.lax.conv_general_dilated(y, params['conv2_w'], (1, 1), 'VALID',
                                     dimension_numbers=dn)
    y = jnp.maximum(y + params['conv2_b'].reshape(1, -1, 1, 1), 0.0)
    y = jax.lax.reduce_window(y, -jnp.inf, jax.lax.max, (1, 1, 2, 2), (1, 1, 2, 2), 'VALID')
    y = y.reshape(y.shape[0], -1)
    y = jnp.maximum(y @ params['fc1_w'] + params['fc1_b'], 0.0)
    return y @ params['fc2_w'] + params['fc2_b']


if __name__ == "__main__":
    key = jax.random.PRNGKey(0)
    pkey, xkey = jax.random.split(key)
    params = init_params(pkey)

    # Input consistent with the module: fc1 expects 64*6*6, which implies 3x32x32 images.
    x = jax.random.normal(xkey, (2, 3, 32, 32), jnp.float32)    # NCHW, batch=2

    fwd = jax.jit(traffic_sign_net)
    out = jax.block_until_ready(fwd(params, x))
    assert out.shape == (2, 43) and out.dtype == jnp.float32

    ref = reference_forward(params, x)
    err = float(jnp.max(jnp.abs(out - ref)))
    # bf16 MXU inputs (f32 accumulation) vs. the all-f32 reference: tolerance loosened
    # accordingly (estimated worst-case logit error ~1e-2 at these magnitudes).
    if err > 5e-2:
        raise AssertionError(f"Pallas output mismatch vs reference, max abs err = {err}")

    print("KERNEL_OK")
</pallas_src>

<mosaic_0001>
module attributes {stable_mosaic.version = 11 : i64} {
  func.func @conv_relu_pool_kernel(%arg0: i32, %arg1: memref<4x232x32xbf16, #tpu.memory_space<vmem>>, %arg2: memref<32x32xbf16, #tpu.memory_space<vmem>>, %arg3: memref<1x32xf32, #tpu.memory_space<vmem>>, %arg4: memref<232x32xbf16, #tpu.memory_space<vmem>>) attributes {dimension_semantics = [#tpu.dimension_semantics<parallel>], iteration_bounds = array<i64: 2>, scalar_prefetch = 0 : i64, scratch_operands = 0 : i64, tpu.core_type = #tpu.core_type<tc>, window_params = [{transform_indices = @transform_0, window_bounds = array<i64: 4, 232, 32>}, {pipeline_mode = #tpu.pipeline_mode<synchronous>, transform_indices = @transform_1, window_bounds = array<i64: 32, 32>}, {pipeline_mode = #tpu.pipeline_mode<synchronous>, transform_indices = @transform_2, window_bounds = array<i64: 1, 32>}, {transform_indices = @transform_3, window_bounds = array<i64: 232, 32>}]} {
    %c0 = arith.constant 0 : index
    %c0_0 = arith.constant 0 : index
    %c0_1 = arith.constant 0 : index
    %0 = vector.load %arg1[%c0, %c0_0, %c0_1] : memref<4x232x32xbf16, #tpu.memory_space<vmem>>, vector<4x232x32xbf16>
    %1 = vector.shape_cast %0 : vector<4x232x32xbf16> to vector<928x32xbf16>
    %c0_2 = arith.constant 0 : index
    %c0_3 = arith.constant 0 : index
    %2 = vector.load %arg2[%c0_2, %c0_3] : memref<32x32xbf16, #tpu.memory_space<vmem>>, vector<32x32xbf16>
    %cst = arith.constant dense<0.000000e+00> : vector<928x32xf32>
    %3 = tpu.matmul %1, %2, %cst {dimension_numbers = #tpu.dot_dimension_numbers<[1], [0], [0], [1], [0, 0, 1, 1], [], []>} : vector<928x32xbf16>, vector<32x32xbf16>, vector<928x32xf32> -> vector<928x32xf32>
    %4 = vector.shape_cast %3 : vector<928x32xf32> to vector<4x232x32xf32>
    %cst_4 = arith.constant dense<0xFF800000> : vector<232x32xf32>
    %5 = vector.multi_reduction <maximumf>, %4, %cst_4 [0] : vector<4x232x32xf32> to vector<232x32xf32>
    %c0_5 = arith.constant 0 : index
    %c0_6 = arith.constant 0 : index
    %6 = vector.load %arg3[%c0_5, %c0_6] : memref<1x32xf32, #tpu.memory_space<vmem>>, vector<1x32xf32>
    %7 = vector.broadcast %6 : vector<1x32xf32> to vector<232x32xf32>
    %8 = arith.addf %5, %7 : vector<232x32xf32>
    %cst_7 = arith.constant 0.000000e+00 : f32
    %9 = vector.broadcast %cst_7 : f32 to vector<232x32xf32>
    %10 = arith.maximumf %8, %9 : vector<232x32xf32>
    %11 = arith.truncf %10 : vector<232x32xf32> to vector<232x32xbf16>
    %c0_8 = arith.constant 0 : index
    %c0_9 = arith.constant 0 : index
    %12 = vector.load %arg4[%c0_8, %c0_9] : memref<232x32xbf16, #tpu.memory_space<vmem>>, vector<232x32xbf16>
    tpu.vector_store %arg4[%c0_8, %c0_9], %11 {strides = array<i32>} : memref<232x32xbf16, #tpu.memory_space<vmem>>, vector<232x32xbf16>,
    return
  }
  func.func @transform_0(%arg0: i32) -> (i32, i32, i32) {
    %c0_i32 = arith.constant 0 : i32
    %c0_i32_0 = arith.constant 0 : i32
    %c0_i32_1 = arith.constant 0 : i32
    return %c0_i32, %arg0, %c0_i32_0 : i32, i32, i32
  }
  func.func @transform_1(%arg0: i32) -> (i32, i32) {
    %c0_i32 = arith.constant 0 : i32
    %c0_i32_0 = arith.constant 0 : i32
    %c0_i32_1 = arith.constant 0 : i32
    return %c0_i32, %c0_i32_0 : i32, i32
  }
  func.func @transform_2(%arg0: i32) -> (i32, i32) {
    %c0_i32 = arith.constant 0 : i32
    %c0_i32_0 = arith.constant 0 : i32
    %c0_i32_1 = arith.constant 0 : i32
    return %c0_i32, %c0_i32_0 : i32, i32
  }
  func.func @transform_3(%arg0: i32) -> (i32, i32) {
    %c0_i32 = arith.constant 0 : i32
    %c0_i32_0 = arith.constant 0 : i32
    return %arg0, %c0_i32 : i32, i32
  }
}

module attributes {stable_mosaic.version = 11 : i64} {
  func.func @conv_relu_pool_kernel(%arg0: i32, %arg1: memref<4x40x288xbf16, #tpu.memory_space<vmem>>, %arg2: memref<288x64xbf16, #tpu.memory_space<vmem>>, %arg3: memref<1x64xf32, #tpu.memory_space<vmem>>, %arg4: memref<40x64xbf16, #tpu.memory_space<vmem>>) attributes {dimension_semantics = [#tpu.dimension_semantics<parallel>], iteration_bounds = array<i64: 2>, scalar_prefetch = 0 : i64, scratch_operands = 0 : i64, tpu.core_type = #tpu.core_type<tc>, window_params = [{transform_indices = @transform_0, window_bounds = array<i64: 4, 40, 288>}, {pipeline_mode = #tpu.pipeline_mode<synchronous>, transform_indices = @transform_1, window_bounds = array<i64: 288, 64>}, {pipeline_mode = #tpu.pipeline_mode<synchronous>, transform_indices = @transform_2, window_bounds = array<i64: 1, 64>}, {transform_indices = @transform_3, window_bounds = array<i64: 40, 64>}]} {
    %c0 = arith.constant 0 : index
    %c0_0 = arith.constant 0 : index
    %c0_1 = arith.constant 0 : index
    %0 = vector.load %arg1[%c0, %c0_0, %c0_1] : memref<4x40x288xbf16, #tpu.memory_space<vmem>>, vector<4x40x288xbf16>
    %1 = vector.shape_cast %0 : vector<4x40x288xbf16> to vector<160x288xbf16>
    %c0_2 = arith.constant 0 : index
    %c0_3 = arith.constant 0 : index
    %2 = vector.load %arg2[%c0_2, %c0_3] : memref<288x64xbf16, #tpu.memory_space<vmem>>, vector<288x64xbf16>
    %cst = arith.constant dense<0.000000e+00> : vector<160x64xf32>
    %3 = tpu.matmul %1, %2, %cst {dimension_numbers = #tpu.dot_dimension_numbers<[1], [0], [0], [1], [0, 0, 1, 1], [], []>} : vector<160x288xbf16>, vector<288x64xbf16>, vector<160x64xf32> -> vector<160x64xf32>
    %4 = vector.shape_cast %3 : vector<160x64xf32> to vector<4x40x64xf32>
    %cst_4 = arith.constant dense<0xFF800000> : vector<40x64xf32>
    %5 = vector.multi_reduction <maximumf>, %4, %cst_4 [0] : vector<4x40x64xf32> to vector<40x64xf32>
    %c0_5 = arith.constant 0 : index
    %c0_6 = arith.constant 0 : index
    %6 = vector.load %arg3[%c0_5, %c0_6] : memref<1x64xf32, #tpu.memory_space<vmem>>, vector<1x64xf32>
    %7 = vector.broadcast %6 : vector<1x64xf32> to vector<40x64xf32>
    %8 = arith.addf %5, %7 : vector<40x64xf32>
    %cst_7 = arith.constant 0.000000e+00 : f32
    %9 = vector.broadcast %cst_7 : f32 to vector<40x64xf32>
    %10 = arith.maximumf %8, %9 : vector<40x64xf32>
    %11 = arith.truncf %10 : vector<40x64xf32> to vector<40x64xbf16>
    %c0_8 = arith.constant 0 : index
    %c0_9 = arith.constant 0 : index
    %12 = vector.load %arg4[%c0_8, %c0_9] : memref<40x64xbf16, #tpu.memory_space<vmem>>, vector<40x64xbf16>
    tpu.vector_store %arg4[%c0_8, %c0_9], %11 {strides = array<i32>} : memref<40x64xbf16, #tpu.memory_space<vmem>>, vector<40x64xbf16>,
    return
  }
  func.func @transform_0(%arg0: i32) -> (i32, i32, i32) {
    %c0_i32 = arith.constant 0 : i32
    %c0_i32_0 = arith.constant 0 : i32
    %c0_i32_1 = arith.constant 0 : i32
    return %c0_i32, %arg0, %c0_i32_0 : i32, i32, i32
  }
  func.func @transform_1(%arg0: i32) -> (i32, i32) {
    %c0_i32 = arith.constant 0 : i32
    %c0_i32_0 = arith.constant 0 : i32
    %c0_i32_1 = arith.constant 0 : i32
    return %c0_i32, %c0_i32_0 : i32, i32
  }
  func.func @transform_2(%arg0: i32) -> (i32, i32) {
    %c0_i32 = arith.constant 0 : i32
    %c0_i32_0 = arith.constant 0 : i32
    %c0_i32_1 = arith.constant 0 : i32
    return %c0_i32, %c0_i32_0 : i32, i32
  }
  func.func @transform_3(%arg0: i32) -> (i32, i32) {
    %c0_i32 = arith.constant 0 : i32
    %c0_i32_0 = arith.constant 0 : i32
    return %arg0, %c0_i32 : i32, i32
  }
}

module attributes {stable_mosaic.version = 11 : i64} {
  func.func @mlp_kernel(%arg0: i32, %arg1: memref<8x2304xbf16, #tpu.memory_space<vmem>>, %arg2: memref<2304x128xbf16, #tpu.memory_space<vmem>>, %arg3: memref<1x128xf32, #tpu.memory_space<vmem>>, %arg4: memref<128x128xbf16, #tpu.memory_space<vmem>>, %arg5: memref<1x128xf32, #tpu.memory_space<vmem>>, %arg6: memref<8x128xf32, #tpu.memory_space<vmem>>) attributes {dimension_semantics = [#tpu.dimension_semantics<parallel>], iteration_bounds = array<i64: 2>, scalar_prefetch = 0 : i64, scratch_operands = 0 : i64, tpu.core_type = #tpu.core_type<tc>, window_params = [{transform_indices = @transform_0, window_bounds = array<i64: 8, 2304>}, {pipeline_mode = #tpu.pipeline_mode<synchronous>, transform_indices = @transform_1, window_bounds = array<i64: 2304, 128>}, {pipeline_mode = #tpu.pipeline_mode<synchronous>, transform_indices = @transform_2, window_bounds = array<i64: 1, 128>}, {pipeline_mode = #tpu.pipeline_mode<synchronous>, transform_indices = @transform_3, window_bounds = array<i64: 128, 128>}, {pipeline_mode = #tpu.pipeline_mode<synchronous>, transform_indices = @transform_4, window_bounds = array<i64: 1, 128>}, {transform_indices = @transform_5, window_bounds = array<i64: 8, 128>}]} {
    %c0 = arith.constant 0 : index
    %c0_0 = arith.constant 0 : index
    %0 = vector.load %arg1[%c0, %c0_0] : memref<8x2304xbf16, #tpu.memory_space<vmem>>, vector<8x2304xbf16>
    %c0_1 = arith.constant 0 : index
    %c0_2 = arith.constant 0 : index
    %1 = vector.load %arg2[%c0_1, %c0_2] : memref<2304x128xbf16, #tpu.memory_space<vmem>>, vector<2304x128xbf16>
    %cst = arith.constant dense<0.000000e+00> : vector<8x128xf32>
    %2 = tpu.matmul %0, %1, %cst {dimension_numbers = #tpu.dot_dimension_numbers<[1], [0], [0], [1], [0, 0, 1, 1], [], []>} : vector<8x2304xbf16>, vector<2304x128xbf16>, vector<8x128xf32> -> vector<8x128xf32>
    %c0_3 = arith.constant 0 : index
    %c0_4 = arith.constant 0 : index
    %3 = vector.load %arg3[%c0_3, %c0_4] : memref<1x128xf32, #tpu.memory_space<vmem>>, vector<1x128xf32>
    %4 = vector.broadcast %3 : vector<1x128xf32> to vector<8x128xf32>
    %5 = arith.addf %2, %4 : vector<8x128xf32>
    %cst_5 = arith.constant 0.000000e+00 : f32
    %6 = vector.broadcast %cst_5 : f32 to vector<8x128xf32>
    %7 = arith.maximumf %5, %6 : vector<8x128xf32>
    %8 = arith.truncf %7 : vector<8x128xf32> to vector<8x128xbf16>
    %c0_6 = arith.constant 0 : index
    %c0_7 = arith.constant 0 : index
    %9 = vector.load %arg4[%c0_6, %c0_7] : memref<128x128xbf16, #tpu.memory_space<vmem>>, vector<128x128xbf16>
    %cst_8 = arith.constant dense<0.000000e+00> : vector<8x128xf32>
    %10 = tpu.matmul %8, %9, %cst_8 {dimension_numbers = #tpu.dot_dimension_numbers<[1], [0], [0], [1], [0, 0, 1, 1], [], []>} : vector<8x128xbf16>, vector<128x128xbf16>, vector<8x128xf32> -> vector<8x128xf32>
    %c0_9 = arith.constant 0 : index
    %c0_10 = arith.constant 0 : index
    %11 = vector.load %arg5[%c0_9, %c0_10] : memref<1x128xf32, #tpu.memory_space<vmem>>, vector<1x128xf32>
    %12 = vector.broadcast %11 : vector<1x128xf32> to vector<8x128xf32>
    %13 = arith.addf %10, %12 : vector<8x128xf32>
    %c0_11 = arith.constant 0 : index
    %c0_12 = arith.constant 0 : index
    %14 = vector.load %arg6[%c0_11, %c0_12] : memref<8x128xf32, #tpu.memory_space<vmem>>, vector<8x128xf32>
    tpu.vector_store %arg6[%c0_11, %c0_12], %13 {strides = array<i32>} : memref<8x128xf32, #tpu.memory_space<vmem>>, vector<8x128xf32>,
    return
  }
  func.func @transform_0(%arg0: i32) -> (i32, i32) {
    %c0_i32 = arith.constant 0 : i32
    %c0_i32_0 = arith.constant 0 : i32
    return %arg0, %c0_i32 : i32, i32
  }
  func.func @transform_1(%arg0: i32) -> (i32, i32) {
    %c0_i32 = arith.constant 0 : i32
    %c0_i32_0 = arith.constant 0 : i32
    %c0_i32_1 = arith.constant 0 : i32
    return %c0_i32, %c0_i32_0 : i32, i32
  }
  func.func @transform_2(%arg0: i32) -> (i32, i32) {
    %c0_i32 = arith.constant 0 : i32
    %c0_i32_0 = arith.constant 0 : i32
    %c0_i32_1 = arith.constant 0 : i32
    return %c0_i32, %c0_i32_0 : i32, i32
  }
  func.func @transform_3(%arg0: i32) -> (i32, i32) {
    %c0_i32 = arith.constant 0 : i32
    %c0_i32_0 = arith.constant 0 : i32
    %c0_i32_1 = arith.constant 0 : i32
    return %c0_i32, %c0_i32_0 : i32, i32
  }
  func.func @transform_4(%arg0: i32) -> (i32, i32) {
    %c0_i32 = arith.constant 0 : i32
    %c0_i32_0 = arith.constant 0 : i32
    %c0_i32_1 = arith.constant 0 : i32
    return %c0_i32, %c0_i32_0 : i32, i32
  }
  func.func @transform_5(%arg0: i32) -> (i32, i32) {
    %c0_i32 = arith.constant 0 : i32
    %c0_i32_0 = arith.constant 0 : i32
    return %arg0, %c0_i32 : i32, i32
  }
}

</mosaic_0001>

<llo_original>
// kernel: traffic_sign_net.3
$region0: #{traffic_sign_net.3}
  #allocation0 [shape = 'u32[]', space=smem, size = 0x4, offset = 0x4, fixed_abs, tag = 'smem constant byte address 0x4 - core index']
  #allocation1 [shape = 'u32[72,128]{1,0:T(1,128)}', space=vmem, size = 0x9000, scoped, tag = 'internal scratch']
  %s0 = inlined_call_operand.vmem [shape: bf16[4,450,32], index: 0, kind: input, shape index: {}]
  %s1 = inlined_call_operand.vmem [shape: bf16[32,32], index: 1, kind: input, shape index: {}]
  %s2 = inlined_call_operand.vmem [shape: f32[1,32], index: 2, kind: input, shape index: {}]
  %s3 = inlined_call_operand.vmem [shape: bf16[450,32], index: 3, kind: output, shape index: {}]
  %s4 = sld [smem:[#allocation0]]
  $region151: #{traffic_sign_net.3} parent=0
    _
  %s6 = ssub.s32 1, %s4
  %s7 = scalar_select 0, %s6, %s4
  $region1: #{traffic_sign_net.3} parent=0
    #allocation2 [shape = 'u8[475136]{0}', space=vmem, size = 0x74000, scoped, tag = 'input window, operand 0']
    #allocation3 [shape = 'u8[118784]{0}', space=vmem, size = 0x1d000, scoped, tag = 'output window, operand 0']
    loop: start=0, step=1, limit=4
    $region2: #{traffic_sign_net.3} parent=1 // loop_pre_header
      _
    $region3: #{traffic_sign_net.3} parent=1 // loop_header
      %s9 = sphi 0, %s13
      %p10 = scmp.ge.s32.totalorder %s9, 4
      %s19 = sphi 0, %s21
      %s22 = sphi 0, %s19
      %s23 = sphi 0, %s22
      %s39 = sphi 0, %s23
      %s43 = sphi 0, %s43
      %s45 = sphi 0, %s43
      %s46 = sphi 0, %s45
      %s60 = sphi 0, %s46
      %s64 = sphi 0, %s64
      %s66 = sphi 0, %s64
      %s67 = sphi 0, %s66
      %s81 = sphi 0, %s67
      %s87 = sphi 0, %s89
      %s90 = sphi 0, %s87
      %s91 = sphi 0, %s90
      %s107 = sphi 0, %s91
    $region4: #{traffic_sign_net.3} parent=1 // loop_header_branch
      %12 = sbr.rel (%p10) target = $region8
    $region5: #{traffic_sign_net.3} parent=1 // loop_body
      %s14 = ssub.s32 %s9, 1
      %s15 = ssub.s32 %s9, 2
      %s16 = sadd.s32 %s9, 1
      %s17 = ssub.s32 %s9, %s16
      %p18 = scmp.eq.s32.totalorder %s17, 0
      %s20 = sadd.s32 %s19, 1
      %s21 = scalar_select %p18, %s19, %s20
      %p24 = pneg %p18
      %p25 = scmp.eq.s32.totalorder %s9, 1
      %p26 = por %p24, %p25
      %p27 = scmp.ne.s32.totalorder %s19, %s22
      %p28 = scmp.eq.s32.totalorder %s9, 0
      %p29 = por %p27, %p28
      %p30 = scmp.ne.s32.totalorder %s19, %s22
      %p31 = scmp.eq.s32.totalorder %s14, 1
      %p32 = por %p30, %p31
      %p33 = scmp.ne.s32.totalorder %s22, %s23
      %p34 = scmp.eq.s32.totalorder %s14, 0
      %p35 = por %p33, %p34
      %p36 = scmp.ne.s32.totalorder %s22, %s23
      %p37 = scmp.eq.s32.totalorder %s15, 1
      %p38 = por %p36, %p37
      %p40 = scmp.ne.s32.totalorder %s23, %s39
      %p41 = scmp.eq.s32.totalorder %s15, 0
      %p42 = por %p40, %p41
      %s44 = sadd.s32 %s43, 1
      %p47 = scmp.eq.s32.totalorder %s9, 1
      %p48 = scmp.ne.s32.totalorder %s43, %s45
      %p49 = scmp.eq.s32.totalorder %s9, 0
      %p50 = por %p48, %p49
      %p51 = scmp.ne.s32.totalorder %s43, %s45
      %p52 = scmp.eq.s32.totalorder %s14, 1
      %p53 = por %p51, %p52
      %p54 = scmp.ne.s32.totalorder %s45, %s46
      %p55 = scmp.eq.s32.totalorder %s14, 0
      %p56 = por %p54, %p55
      %p57 = scmp.ne.s32.totalorder %s45, %s46
      %p58 = scmp.eq.s32.totalorder %s15, 1
      %p59 = por %p57, %p58
      %p61 = scmp.ne.s32.totalorder %s46, %s60
      %p62 = scmp.eq.s32.totalorder %s15, 0
      %p63 = por %p61, %p62
      %s65 = sadd.s32 %s64, 1
      %p68 = scmp.eq.s32.totalorder %s9, 1
      %p69 = scmp.ne.s32.totalorder %s64, %s66
      %p70 = scmp.eq.s32.totalorder %s9, 0
      %p71 = por %p69, %p70
      %p72 = scmp.ne.s32.totalorder %s64, %s66
      %p73 = scmp.eq.s32.totalorder %s14, 1
      %p74 = por %p72, %p73
      %p75 = scmp.ne.s32.totalorder %s66, %s67
      %p76 = scmp.eq.s32.totalorder %s14, 0
      %p77 = por %p75, %p76
      %p78 = scmp.ne.s32.totalorder %s66, %s67
      %p79 = scmp.eq.s32.totalorder %s15, 1
      %p80 = por %p78, %p79
      %p82 = scmp.ne.s32.totalorder %s67, %s81
      %p83 = scmp.eq.s32.totalorder %s15, 0
      %p84 = por %p82, %p83
      %s85 = ssub.s32 %s9, %s16
      %p86 = scmp.eq.s32.totalorder %s85, 0
      %s88 = sadd.s32 %s87, 1
      %s89 = scalar_select %p86, %s87, %s88
      %p92 = pneg %p86
      %p93 = scmp.eq.s32.totalorder %s9, 1
      %p94 = por %p92, %p93
      %p95 = scmp.ne.s32.totalorder %s87, %s90
      %p96 = scmp.eq.s32.totalorder %s9, 0
      %p97 = por %p95, %p96
      %p98 = scmp.ne.s32.totalorder %s87, %s90
      %p99 = scmp.eq.s32.totalorder %s14, 1
      %p100 = por %p98, %p99
      %p101 = scmp.ne.s32.totalorder %s90, %s91
      %p102 = scmp.eq.s32.totalorder %s14, 0
      %p103 = por %p101, %p102
      %p104 = scmp.ne.s32.totalorder %s90, %s91
      %p105 = scmp.eq.s32.totalorder %s15, 1
      %p106 = por %p104, %p105
      %p108 = scmp.ne.s32.totalorder %s91, %s107
      %p109 = scmp.eq.s32.totalorder %s15, 0
      %p110 = por %p108, %p109
      %p111 = scmp.le.s32.totalorder 1, %s9
      %p112 = scmp.lt.s32.totalorder %s9, 3
      %p113 = pnand %p111, %p112
      %p114 = pneg %p113
      // Predicated region
      $region9: #{traffic_sign_net.3} parent=5 // pred_check
        _
      $region10: #{traffic_sign_net.3} parent=5 // pred_check_branch
        %116 = sbr.rel (%p113) target = $region12
      $region11: #{traffic_sign_net.3} parent=5 // pred_region
        %s117 = ssub.s32 %s9, 1
        // Predicated region
        $region13: #{traffic_sign_net.3} parent=11 // pred_check
          %p118 = pneg %p56
        $region14: #{traffic_sign_net.3} parent=11 // pred_check_branch
          %120 = sbr.rel (%p118) target = $region16
        $region15: #{traffic_sign_net.3} parent=11 // pred_region
          _
        $region16: #{traffic_sign_net.3} parent=11 // pred_fallthru
          _
        // Predicated region
        $region17: #{traffic_sign_net.3} parent=11 // pred_check
          %p121 = pneg %p77
        $region18: #{traffic_sign_net.3} parent=11 // pred_check_branch
          %123 = sbr.rel (%p121) target = $region20
        $region19: #{traffic_sign_net.3} parent=11 // pred_region
          _
        $region20: #{traffic_sign_net.3} parent=11 // pred_fallthru
          _
      $region12: #{traffic_sign_net.3} parent=5 // pred_fallthru
        _
      %p124 = scmp.lt.s32.totalorder %s9, 2
      // Predicated region
      $region21: #{traffic_sign_net.3} parent=5 // pred_check
        %p125 = pneg %p124
      $region22: #{traffic_sign_net.3} parent=5 // pred_check_branch
        %127 = sbr.rel (%p125) target = $region24
      $region23: #{traffic_sign_net.3} parent=5 // pred_region
        // Predicated region
        $region25: #{traffic_sign_net.3} parent=23 // pred_check
          %p128 = pneg %p29
        $region26: #{traffic_sign_net.3} parent=23 // pred_check_branch
          %130 = sbr.rel (%p128) target = $region28
        $region27: #{traffic_sign_net.3} parent=23 // pred_region
          %s131 = sand.u32 %s19, 1
          %s132 = sand.u32 %s19, 1
          %s133 = smul.addr %s132, 464
          %s134 = scalar_lea.vmem [#allocation2], %s133
          %s135 = smul.u32 29, %s9
          %s136 = ssub.s32 57, %s135
          %p137 = scmp.lt.s32.totalorder %s136, 29
          %s138 = scalar_select %p137, %s136, 29
          %s139 = smul.u32 16, %s138
          %p140 = scmp.ne.s32.totalorder 0, %s139
          %s141 = smul.addr %s135, 4
          %s142 = scalar_lea.vmem %s0, %s141
          // Predicated region
          $region29: #{traffic_sign_net.3} parent=27 // pred_check
            %p143 = pneg %p140
          $region30: #{traffic_sign_net.3} parent=27 // pred_check_branch
            %145 = sbr.rel (%p143) target = $region32
          $region31: #{traffic_sign_net.3} parent=27 // pred_region
            // Predicated region
            $region33: #{traffic_sign_net.3} parent=31 // pred_check
              _
            $region34: #{traffic_sign_net.3} parent=31 // pred_check_branch
              %147 = sbr.rel target = $region36
            $region35: #{traffic_sign_net.3} parent=31 // pred_region
              // Predicated region
              $region55: #{traffic_sign_net.3} parent=35 // pred_check
                _
              $region56: #{traffic_sign_net.3} parent=35 // pred_check_branch
                %265 = sbr.rel (0) target = $region58
              $region57: #{traffic_sign_net.3} parent=35 // pred_region
                %s266 = sshrl.u32 %s138, 4
                // While loop
                $region59: #{traffic_sign_net.3} parent=57 // loop_pre_header
                  _
                $region60: #{traffic_sign_net.3} parent=57 // loop_header
                  %s268 = sphi 0, %s270
                  %p269 = scmp.ge.s32.totalorder %s268, %s266
                  %s273 = sphi 0, %s278
                  %s274 = sphi %s142, %s281
                  %s275 = sphi %s134, %s282
                $region61: #{traffic_sign_net.3} parent=57 // loop_header_branch
                  %272 = sbr.rel (%p269) target = $region65
                $region62: #{traffic_sign_net.3} parent=57 // loop_body
                  %s276 = sadd.s32 1, %s273
                  %p277 = scmp.ge.s32.totalorder %s276, %s266
                  %s278 = scalar_select %p277, 0, %s276
                  %s279 = smul.u32 %s278, 64
                  %s280 = smul.u32 %s278, 64
                  %s281 = scalar_lea.vmem %s142, %s279
                  %s282 = scalar_lea.vmem %s134, %s280 [#allocation2]
                $region63: #{traffic_sign_net.3} parent=57 // loop_footer
                  %s270 = sadd.s32 %s268, 1
                $region64: #{traffic_sign_net.3} parent=57 // loop_footer_branch
                  %267 = sbr.rel target = $region60
                $region65: #{traffic_sign_net.3} parent=57 // loop_exit
                  _
                %s283 = sshrl.u32 %s138, 4
                %s284 = sand.u32 %s138, 15
                %s285 = smul.u32 %s283, 16
                %s286 = smul.u32 4, %s285
                %s287 = scalar_lea.vmem %s142, %s286
                %s288 = smul.u32 4, %s285
                %s289 = scalar_lea.vmem %s134, %s288 [#allocation2]
                // While loop
                $region66: #{traffic_sign_net.3} parent=57 // loop_pre_header
                  _
                $region67: #{traffic_sign_net.3} parent=57 // loop_header
                  %s291 = sphi 0, %s293
                  %p292 = scmp.ge.s32.totalorder %s291, %s284
                  %s296 = sphi 0, %s301
                  %s297 = sphi %s287, %s304
                  %s298 = sphi %s289, %s305
                $region68: #{traffic_sign_net.3} parent=57 // loop_header_branch
                  %295 = sbr.rel (%p292) target = $region72
                $region69: #{traffic_sign_net.3} parent=57 // loop_body
                  %s299 = sadd.s32 1, %s296
                  %p300 = scmp.ge.s32.totalorder %s299, %s284
                  %s301 = scalar_select %p300, 0, %s299
                  %s302 = smul.u32 %s301, 4
                  %s303 = smul.u32 %s301, 4
                  %s304 = scalar_lea.vmem %s287, %s302
                  %s305 = scalar_lea.vmem %s289, %s303 [#allocation2]
                $region70: #{traffic_sign_net.3} parent=57 // loop_footer
                  %s293 = sadd.s32 %s291, 1
                $region71: #{traffic_sign_net.3} parent=57 // loop_footer_branch
                  %290 = sbr.rel target = $region67
                $region72: #{traffic_sign_net.3} parent=57 // loop_exit
                  _
                %s307 = ssub.s32 16, 1
                %s308 = sshrl.u32 %s138, 3
                // While loop
                $region73: #{traffic_sign_net.3} parent=57 // loop_pre_header
                  _
                $region74: #{traffic_sign_net.3} parent=57 // loop_header
                  %s310 = sphi 0, %s312
                  %p311 = scmp.ge.s32.totalorder %s310, %s308
                  %s315 = sphi 0, %s384
                  %s316 = sphi %s142, %s387
                  %s317 = sphi %s134, %s388
                $region75: #{traffic_sign_net.3} parent=57 // loop_header_branch
                  %314 = sbr.rel (%p311) target = $region79
                $region76: #{traffic_sign_net.3} parent=57 // loop_body
                  %v318 = vld [vmem:[%s316] sm:%s307]
                  %319 = vst [vmem:[%s317] sm:%s307] %v318
                  %v320 = vld [vmem:[%s316 + $0x4] sm:%s307]
                  %321 = vst [vmem:[%s317 + $0x4] sm:%s307] %v320
                  %v322 = vld [vmem:[%s316 + $0x8] sm:%s307]
                  %323 = vst [vmem:[%s317 + $0x8] sm:%s307] %v322
                  %v324 = vld [vmem:[%s316 + $0xc] sm:%s307]
                  %325 = vst [vmem:[%s317 + $0xc] sm:%s307] %v324
                  %v326 = vld [vmem:[%s316 + $0x10] sm:%s307]
                  %327 = vst [vmem:[%s317 + $0x10] sm:%s307] %v326
                  %v328 = vld [vmem:[%s316 + $0x14] sm:%s307]
                  %329 = vst [vmem:[%s317 + $0x14] sm:%s307] %v328
                  %v330 = vld [vmem:[%s316 + $0x18] sm:%s307]
                  %331 = vst [vmem:[%s317 + $0x18] sm:%s307] %v330
                  %v332 = vld [vmem:[%s316 + $0x1c] sm:%s307]
                  %333 = vst [vmem:[%s317 + $0x1c] sm:%s307] %v332
                  %v334 = vld [vmem:[%s316 + $0xe4] sm:%s307]
                  %335 = vst [vmem:[%s317 + $0x74] sm:%s307] %v334
                  %v336 = vld [vmem:[%s316 + $0xe8] sm:%s307]
                  %337 = vst [vmem:[%s317 + $0x78] sm:%s307] %v336
                  %v338 = vld [vmem:[%s316 + $0xec] sm:%s307]
                  %339 = vst [vmem:[%s317 + $0x7c] sm:%s307] %v338
                  %v340 = vld [vmem:[%s316 + $0xf0] sm:%s307]
                  %341 = vst [vmem:[%s317 + $0x80] sm:%s307] %v340
                  %v342 = vld [vmem:[%s316 + $0xf4] sm:%s307]
                  %343 = vst [vmem:[%s317 + $0x84] sm:%s307] %v342
                  %v344 = vld [vmem:[%s316 + $0xf8] sm:%s307]
                  %345 = vst [vmem:[%s317 + $0x88] sm:%s307] %v344
                  %v346 = vld [vmem:[%s316 + $0xfc] sm:%s307]
                  %347 = vst [vmem:[%s317 + $0x8c] sm:%s307] %v346
                  %v348 = vld [vmem:[%s316 + $0x100] sm:%s307]
                  %349 = vst [vmem:[%s317 + $0x90] sm:%s307] %v348
                  %v350 = vld [vmem:[%s316 + $0x1c8] sm:%s307]
                  %351 = vst [vmem:[%s317 + $0xe8] sm:%s307] %v350
                  %v352 = vld [vmem:[%s316 + $0x1cc] sm:%s307]
                  %353 = vst [vmem:[%s317 + $0xec] sm:%s307] %v352
                  %v354 = vld [vmem:[%s316 + $0x1d0] sm:%s307]
                  %355 = vst [vmem:[%s317 + $0xf0] sm:%s307] %v354
                  %v356 = vld [vmem:[%s316 + $0x1d4] sm:%s307]
                  %357 = vst [vmem:[%s317 + $0xf4] sm:%s307] %v356
                  %v358 = vld [vmem:[%s316 + $0x1d8] sm:%s307]
                  %359 = vst [vmem:[%s317 + $0xf8] sm:%s307] %v358
                  %v360 = vld [vmem:[%s316 + $0x1dc] sm:%s307]
                  %361 = vst [vmem:[%s317 + $0xfc] sm:%s307] %v360
                  %v362 = vld [vmem:[%s316 + $0x1e0] sm:%s307]
                  %363 = vst [vmem:[%s317 + $0x100] sm:%s307] %v362
                  %v364 = vld [vmem:[%s316 + $0x1e4] sm:%s307]
                  %365 = vst [vmem:[%s317 + $0x104] sm:%s307] %v364
                  %v366 = vld [vmem:[%s316 + $0x2ac] sm:%s307]
                  %367 = vst [vmem:[%s317 + $0x15c] sm:%s307] %v366
                  %v368 = vld [vmem:[%s316 + $0x2b0] sm:%s307]
                  %369 = vst [vmem:[%s317 + $0x160] sm:%s307] %v368
                  %v370 = vld [vmem:[%s316 + $0x2b4] sm:%s307]
                  %371 = vst [vmem:[%s317 + $0x164] sm:%s307] %v370
                  %v372 = vld [vmem:[%s316 + $0x2b8] sm:%s307]
                  %373 = vst [vmem:[%s317 + $0x168] sm:%s307] %v372
                  %v374 = vld [vmem:[%s316 + $0x2bc] sm:%s307]
                  %375 = vst [vmem:[%s317 + $0x16c] sm:%s307] %v374
                  %v376 = vld [vmem:[%s316 + $0x2c0] sm:%s307]
                  %377 = vst [vmem:[%s317 + $0x170] sm:%s307] %v376
                  %v378 = vld [vmem:[%s316 + $0x2c4] sm:%s307]
                  %379 = vst [vmem:[%s317 + $0x174] sm:%s307] %v378
                  %v380 = vld [vmem:[%s316 + $0x2c8] sm:%s307]
                  %381 = vst [vmem:[%s317 + $0x178] sm:%s307] %v380
                  %s382 = sadd.s32 1, %s315
                  %p383 = scmp.ge.s32.totalorder %s382, %s308
                  %s384 = scalar_select %p383, 0, %s382
                  %s385 = smul.u32 %s384, 32
                  %s386 = smul.u32 %s384, 32
                  %s387 = scalar_lea.vmem %s142, %s385
                  %s388 = scalar_lea.vmem %s134, %s386 [#allocation2]
                $region77: #{traffic_sign_net.3} parent=57 // loop_footer
                  %s312 = sadd.s32 %s310, 1
                $region78: #{traffic_sign_net.3} parent=57 // loop_footer_branch
                  %309 = sbr.rel target = $region74
                $region79: #{traffic_sign_net.3} parent=57 // loop_exit
                  _
                %s389 = sshrl.u32 %s138, 3
                %s390 = sand.u32 %s138, 7
                %s391 = smul.u32 %s389, 8
                %s392 = smul.u32 4, %s391
                %s393 = scalar_lea.vmem %s142, %s392
                %s394 = smul.u32 4, %s391
                %s395 = scalar_lea.vmem %s134, %s394 [#allocation2]
                // While loop
                $region80: #{traffic_sign_net.3} parent=57 // loop_pre_header
                  _
                $region81: #{traffic_sign_net.3} parent=57 // loop_header
                  %s397 = sphi 0, %s399
                  %p398 = scmp.ge.s32.totalorder %s397, %s390
                  %s402 = sphi 0, %s415
                  %s403 = sphi %s393, %s418
                  %s404 = sphi %s395, %s419
                $region82: #{traffic_sign_net.3} parent=57 // loop_header_branch
                  %401 = sbr.rel (%p398) target = $region86
                $region83: #{traffic_sign_net.3} parent=57 // loop_body
                  %v405 = vld [vmem:[%s403] sm:%s307]
                  %406 = vst [vmem:[%s404] sm:%s307] %v405
                  %v407 = vld [vmem:[%s403 + $0xe4] sm:%s307]
                  %408 = vst [vmem:[%s404 + $0x74] sm:%s307] %v407
                  %v409 = vld [vmem:[%s403 + $0x1c8] sm:%s307]
                  %410 = vst [vmem:[%s404 + $0xe8] sm:%s307] %v409
                  %v411 = vld [vmem:[%s403 + $0x2ac] sm:%s307]
                  %412 = vst [vmem:[%s404 + $0x15c] sm:%s307] %v411
                  %s413 = sadd.s32 1, %s402
                  %p414 = scmp.ge.s32.totalorder %s413, %s390
                  %s415 = scalar_select %p414, 0, %s413
                  %s416 = smul.u32 %s415, 4
                  %s417 = smul.u32 %s415, 4
                  %s418 = scalar_lea.vmem %s393, %s416
                  %s419 = scalar_lea.vmem %s395, %s417 [#allocation2]
                $region84: #{traffic_sign_net.3} parent=57 // loop_footer
                  %s399 = sadd.s32 %s397, 1
                $region85: #{traffic_sign_net.3} parent=57 // loop_footer_branch
                  %396 = sbr.rel target = $region81
                $region86: #{traffic_sign_net.3} parent=57 // loop_exit
                  _
              $region58: #{traffic_sign_net.3} parent=35 // pred_fallthru
                _
            $region36: #{traffic_sign_net.3} parent=31 // pred_fallthru
              _
            // Predicated region
            $region37: #{traffic_sign_net.3} parent=31 // pred_check
              _
            $region38: #{traffic_sign_net.3} parent=31 // pred_check_branch
              %149 = sbr.rel (0) target = $region40
            $region39: #{traffic_sign_net.3} parent=31 // pred_region
              %s151 = ssub.s32 16, 1
              %s152 = sshrl.u32 %s138, 3
              // While loop
              $region41: #{traffic_sign_net.3} parent=39 // loop_pre_header
                _
              $region42: #{traffic_sign_net.3} parent=39 // loop_header
                %s154 = sphi 0, %s156
                %p155 = scmp.ge.s32.totalorder %s154, %s152
                %s159 = sphi 0, %s228
                %s160 = sphi %s142, %s231
                %s161 = sphi %s134, %s232
              $region43: #{traffic_sign_net.3} parent=39 // loop_header_branch
                %158 = sbr.rel (%p155) target = $region47
              $region44: #{traffic_sign_net.3} parent=39 // loop_body
                %v162 = vld [vmem:[%s160] sm:%s151]
                %163 = vst [vmem:[%s161] sm:%s151] %v162
                %v164 = vld [vmem:[%s160 + $0x4] sm:%s151]
                %165 = vst [vmem:[%s161 + $0x4] sm:%s151] %v164
                %v166 = vld [vmem:[%s160 + $0x8] sm:%s151]
                %167 = vst [vmem:[%s161 + $0x8] sm:%s151] %v166
                %v168 = vld [vmem:[%s160 + $0xc] sm:%s151]
                %169 = vst [vmem:[%s161 + $0xc] sm:%s151] %v168
                %v170 = vld [vmem:[%s160 + $0x10] sm:%s151]
                %171 = vst [vmem:[%s161 + $0x10] sm:%s151] %v170
                %v172 = vld [vmem:[%s160 + $0x14] sm:%s151]
                %173 = vst [vmem:[%s161 + $0x14] sm:%s151] %v172
                %v174 = vld [vmem:[%s160 + $0x18] sm:%s151]
                %175 = vst [vmem:[%s161 + $0x18] sm:%s151] %v174
                %v176 = vld [vmem:[%s160 + $0x1c] sm:%s151]
                %177 = vst [vmem:[%s161 + $0x1c] sm:%s151] %v176
                %v178 = vld [vmem:[%s160 + $0xe4] sm:%s151]
                %179 = vst [vmem:[%s161 + $0x74] sm:%s151] %v178
                %v180 = vld [vmem:[%s160 + $0xe8] sm:%s151]
                %181 = vst [vmem:[%s161 + $0x78] sm:%s151] %v180
                %v182 = vld [vmem:[%s160 + $0xec] sm:%s151]
                %183 = vst [vmem:[%s161 + $0x7c] sm:%s151] %v182
                %v184 = vld [vmem:[%s160 + $0xf0] sm:%s151]
                %185 = vst [vmem:[%s161 + $0x80] sm:%s151] %v184
                %v186 = vld [vmem:[%s160 + $0xf4] sm:%s151]
                %187 = vst [vmem:[%s161 + $0x84] sm:%s151] %v186
                %v188 = vld [vmem:[%s160 + $0xf8] sm:%s151]
                %189 = vst [vmem:[%s161 + $0x88] sm:%s151] %v188
                %v190 = vld [vmem:[%s160 + $0xfc] sm:%s151]
                %191 = vst [vmem:[%s161 + $0x8c] sm:%s151] %v190
                %v192 = vld [vmem:[%s160 + $0x100] sm:%s151]
                %193 = vst [vmem:[%s161 + $0x90] sm:%s151] %v192
                %v194 = vld [vmem:[%s160 + $0x1c8] sm:%s151]
                %195 = vst [vmem:[%s161 + $0xe8] sm:%s151] %v194
                %v196 = vld [vmem:[%s160 + $0x1cc] sm:%s151]
                %197 = vst [vmem:[%s161 + $0xec] sm:%s151] %v196
                %v198 = vld [vmem:[%s160 + $0x1d0] sm:%s151]
                %199 = vst [vmem:[%s161 + $0xf0] sm:%s151] %v198
                %v200 = vld [vmem:[%s160 + $0x1d4] sm:%s151]
                %201 = vst [vmem:[%s161 + $0xf4] sm:%s151] %v200
                %v202 = vld [vmem:[%s160 + $0x1d8] sm:%s151]
                %203 = vst [vmem:[%s161 + $0xf8] sm:%s151] %v202
                %v204 = vld [vmem:[%s160 + $0x1dc] sm:%s151]
                %205 = vst [vmem:[%s161 + $0xfc] sm:%s151] %v204
                %v206 = vld [vmem:[%s160 + $0x1e0] sm:%s151]
                %207 = vst [vmem:[%s161 + $0x100] sm:%s151] %v206
                %v208 = vld [vmem:[%s160 + $0x1e4] sm:%s151]
                %209 = vst [vmem:[%s161 + $0x104] sm:%s151] %v208
                %v210 = vld [vmem:[%s160 + $0x2ac] sm:%s151]
                %211 = vst [vmem:[%s161 + $0x15c] sm:%s151] %v210
                %v212 = vld [vmem:[%s160 + $0x2b0] sm:%s151]
                %213 = vst [vmem:[%s161 + $0x160] sm:%s151] %v212
                %v214 = vld [vmem:[%s160 + $0x2b4] sm:%s151]
                %215 = vst [vmem:[%s161 + $0x164] sm:%s151] %v214
                %v216 = vld [vmem:[%s160 + $0x2b8] sm:%s151]
                %217 = vst [vmem:[%s161 + $0x168] sm:%s151] %v216
                %v218 = vld [vmem:[%s160 + $0x2bc] sm:%s151]
                %219 = vst [vmem:[%s161 + $0x16c] sm:%s151] %v218
                %v220 = vld [vmem:[%s160 + $0x2c0] sm:%s151]
                %221 = vst [vmem:[%s161 + $0x170] sm:%s151] %v220
                %v222 = vld [vmem:[%s160 + $0x2c4] sm:%s151]
                %223 = vst [vmem:[%s161 + $0x174] sm:%s151] %v222
                %v224 = vld [vmem:[%s160 + $0x2c8] sm:%s151]
                %225 = vst [vmem:[%s161 + $0x178] sm:%s151] %v224
                %s226 = sadd.s32 1, %s159
                %p227 = scmp.ge.s32.totalorder %s226, %s152
                %s228 = scalar_select %p227, 0, %s226
                %s229 = smul.u32 %s228, 32
                %s230 = smul.u32 %s228, 32
                %s231 = scalar_lea.vmem %s142, %s229
                %s232 = scalar_lea.vmem %s134, %s230 [#allocation2]
              $region45: #{traffic_sign_net.3} parent=39 // loop_footer
                %s156 = sadd.s32 %s154, 1
              $region46: #{traffic_sign_net.3} parent=39 // loop_footer_branch
                %153 = sbr.rel target = $region42
              $region47: #{traffic_sign_net.3} parent=39 // loop_exit
                _
              %s233 = sshrl.u32 %s138, 3
              %s234 = sand.u32 %s138, 7
              %s235 = smul.u32 %s233, 8
              %s236 = smul.u32 4, %s235
              %s237 = scalar_lea.vmem %s142, %s236
              %s238 = smul.u32 4, %s235
              %s239 = scalar_lea.vmem %s134, %s238 [#allocation2]
              // While loop
              $region48: #{traffic_sign_net.3} parent=39 // loop_pre_header
                _
              $region49: #{traffic_sign_net.3} parent=39 // loop_header
                %s241 = sphi 0, %s243
                %p242 = scmp.ge.s32.totalorder %s241, %s234
                %s246 = sphi 0, %s259
                %s247 = sphi %s237, %s262
                %s248 = sphi %s239, %s263
              $region50: #{traffic_sign_net.3} parent=39 // loop_header_branch
                %245 = sbr.rel (%p242) target = $region54
              $region51: #{traffic_sign_net.3} parent=39 // loop_body
                %v249 = vld [vmem:[%s247] sm:%s151]
                %250 = vst [vmem:[%s248] sm:%s151] %v249
                %v251 = vld [vmem:[%s247 + $0xe4] sm:%s151]
                %252 = vst [vmem:[%s248 + $0x74] sm:%s151] %v251
                %v253 = vld [vmem:[%s247 + $0x1c8] sm:%s151]
                %254 = vst [vmem:[%s248 + $0xe8] sm:%s151] %v253
                %v255 = vld [vmem:[%s247 + $0x2ac] sm:%s151]
                %256 = vst [vmem:[%s248 + $0x15c] sm:%s151] %v255
                %s257 = sadd.s32 1, %s246
                %p258 = scmp.ge.s32.totalorder %s257, %s234
                %s259 = scalar_select %p258, 0, %s257
                %s260 = smul.u32 %s259, 4
                %s261 = smul.u32 %s259, 4
                %s262 = scalar_lea.vmem %s237, %s260
                %s263 = scalar_lea.vmem %s239, %s261 [#allocation2]
              $region52: #{traffic_sign_net.3} parent=39 // loop_footer
                %s243 = sadd.s32 %s241, 1
              $region53: #{traffic_sign_net.3} parent=39 // loop_footer_branch
                %240 = sbr.rel target = $region49
              $region54: #{traffic_sign_net.3} parent=39 // loop_exit
                _
            $region40: #{traffic_sign_net.3} parent=31 // pred_fallthru
              _
          $region32: #{traffic_sign_net.3} parent=27 // pred_fallthru
            _
          %420 = vnop
        $region28: #{traffic_sign_net.3} parent=23 // pred_fallthru
          _
      $region24: #{traffic_sign_net.3} parent=5 // pred_fallthru
        _
      %p421 = scmp.le.s32.totalorder 1, %s9
      %p422 = scmp.lt.s32.totalorder %s9, 3
      %p423 = pnand %p421, %p422
      %p424 = pneg %p423
      // Predicated region
      $region87: #{traffic_sign_net.3} parent=5 // pred_check
        _
      $region88: #{traffic_sign_net.3} parent=5 // pred_check_branch
        %426 = sbr.rel (%p423) target = $region90
      $region89: #{traffic_sign_net.3} parent=5 // pred_region
        %s427 = ssub.s32 %s9, 1
        %s428 = sand.u32 %s22, 1
        %s429 = sand.u32 %s22, 1
        %s430 = smul.addr %s429, 464
        %s431 = scalar_lea.vmem [#allocation2], %s430
        // Predicated region
        $region91: #{traffic_sign_net.3} parent=89 // pred_check
          %p432 = pneg %p35
        $region92: #{traffic_sign_net.3} parent=89 // pred_check_branch
          %434 = sbr.rel (%p432) target = $region94
        $region93: #{traffic_sign_net.3} parent=89 // pred_region
          _
        $region94: #{traffic_sign_net.3} parent=89 // pred_fallthru
          _
        %s435 = sand.u32 %s22, 1
        %s436 = sand.u32 %s22, 1
        %s437 = smul.addr %s436, 464
        %s438 = scalar_lea.vmem [#allocation2], %s437
        %p439 = pneg %p35
        %p440 = pneg %p32
        %p441 = pneg %p56
        %p442 = pneg %p53
        %p443 = pneg %p77
        %p444 = pneg %p74
        %p445 = pneg %p103
        %p446 = pneg %p100
        %s447 = sand.u32 %s90, 1
        %s448 = sand.u32 %s90, 1
        %s449 = smul.addr %s448, 116
        %s450 = scalar_lea.vmem [#allocation3], %s449
        %s451 = smul.u32 29, %s14
        %s452 = ssub.s32 57, %s451
        %p453 = scmp.lt.s32.totalorder %s452, 29
        %s454 = scalar_select %p453, %s452, 29
        %s455 = smul.u32 16, %s454
        %s456 = smul.u32 29, %s14
        %s457 = ssub.s32 57, %s456
        %p458 = scmp.lt.s32.totalorder %s457, 29
        %s459 = scalar_select %p458, %s457, 29
        %s460 = smul.u32 4, %s459
        %v462 = vld [vmem:[%s431] sm:$0xf]
        %v463 = vld [vmem:[%s431 + $0x4] sm:$0xf]
        %v464 = vld [vmem:[%s431 + $0x8] sm:$0xf]
        %v465 = vld [vmem:[%s431 + $0xc] sm:$0xf]
        %v466 = vld [vmem:[%s431 + $0x10] sm:$0xf]
        %v467 = vld [vmem:[%s431 + $0x14] sm:$0xf]
        %v468 = vld [vmem:[%s431 + $0x18] sm:$0xf]
        %v469 = vld [vmem:[%s431 + $0x1c] sm:$0xf]
        %v470 = vld [vmem:[%s431 + $0x20] sm:$0xf]
        %v471 = vld [vmem:[%s431 + $0x24] sm:$0xf]
        %v472 = vld [vmem:[%s431 + $0x28] sm:$0xf]
        %v473 = vld [vmem:[%s431 + $0x2c] sm:$0xf]
        %v474 = vld [vmem:[%s431 + $0x30] sm:$0xf]
        %v475 = vld [vmem:[%s431 + $0x34] sm:$0xf]
        %v476 = vld [vmem:[%s431 + $0x38] sm:$0xf]
        %v477 = vld [vmem:[%s431 + $0x3c] sm:$0xf]
        %v478 = vld [vmem:[%s431 + $0x40] sm:$0xf]
        %v479 = vld [vmem:[%s431 + $0x44] sm:$0xf]
        %v480 = vld [vmem:[%s431 + $0x48] sm:$0xf]
        %v481 = vld [vmem:[%s431 + $0x4c] sm:$0xf]
        %v482 = vld [vmem:[%s431 + $0x50] sm:$0xf]
        %v483 = vld [vmem:[%s431 + $0x54] sm:$0xf]
        %v484 = vld [vmem:[%s431 + $0x58] sm:$0xf]
        %v485 = vld [vmem:[%s431 + $0x5c] sm:$0xf]
        %v486 = vld [vmem:[%s431 + $0x60] sm:$0xf]
        %v487 = vld [vmem:[%s431 + $0x64] sm:$0xf]
        %v488 = vld [vmem:[%s431 + $0x68] sm:$0xf]
        %v489 = vld [vmem:[%s431 + $0x6c] sm:$0xf]
        %v490 = vld [vmem:[%s431 + $0x70] sm:$0xf]
        %v491 = vld [vmem:[%s431 + $0x74] sm:$0xf]
        %v492 = vld [vmem:[%s431 + $0x78] sm:$0xf]
        %v493 = vld [vmem:[%s431 + $0x7c] sm:$0xf]
        %v494 = vld [vmem:[%s431 + $0x80] sm:$0xf]
        %v495 = vld [vmem:[%s431 + $0x84] sm:$0xf]
        %v496 = vld [vmem:[%s431 + $0x88] sm:$0xf]
        %v497 = vld [vmem:[%s431 + $0x8c] sm:$0xf]
        %v498 = vld [vmem:[%s431 + $0x90] sm:$0xf]
        %v499 = vld [vmem:[%s431 + $0x94] sm:$0xf]
        %v500 = vld [vmem:[%s431 + $0x98] sm:$0xf]
        %v501 = vld [vmem:[%s431 + $0x9c] sm:$0xf]
        %v502 = vld [vmem:[%s431 + $0xa0] sm:$0xf]
        %v503 = vld [vmem:[%s431 + $0xa4] sm:$0xf]
        %v504 = vld [vmem:[%s431 + $0xa8] sm:$0xf]
        %v505 = vld [vmem:[%s431 + $0xac] sm:$0xf]
        %v506 = vld [vmem:[%s431 + $0xb0] sm:$0xf]
        %v507 = vld [vmem:[%s431 + $0xb4] sm:$0xf]
        %v508 = vld [vmem:[%s431 + $0xb8] sm:$0xf]
        %v509 = vld [vmem:[%s431 + $0xbc] sm:$0xf]
        %v510 = vld [vmem:[%s431 + $0xc0] sm:$0xf]
        %v511 = vld [vmem:[%s431 + $0xc4] sm:$0xf]
        %v512 = vld [vmem:[%s431 + $0xc8] sm:$0xf]
        %v513 = vld [vmem:[%s431 + $0xcc] sm:$0xf]
        %v514 = vld [vmem:[%s431 + $0xd0] sm:$0xf]
        %v515 = vld [vmem:[%s431 + $0xd4] sm:$0xf]
        %v516 = vld [vmem:[%s431 + $0xd8] sm:$0xf]
        %v517 = vld [vmem:[%s431 + $0xdc] sm:$0xf]
        %v518 = vld [vmem:[%s431 + $0xe0] sm:$0xf]
        %v519 = vld [vmem:[%s431 + $0xe4] sm:$0xf]
        %v520 = vld [vmem:[%s431 + $0xe8] sm:$0xf]
        %v521 = vld [vmem:[%s431 + $0xec] sm:$0xf]
        %v522 = vld [vmem:[%s431 + $0xf0] sm:$0xf]
        %v523 = vld [vmem:[%s431 + $0xf4] sm:$0xf]
        %v524 = vld [vmem:[%s431 + $0xf8] sm:$0xf]
        %v525 = vld [vmem:[%s431 + $0xfc] sm:$0xf]
        %v526 = vld [vmem:[%s431 + $0x100] sm:$0xf]
        %v527 = vld [vmem:[%s431 + $0x104] sm:$0xf]
        %v528 = vld [vmem:[%s431 + $0x108] sm:$0xf]
        %v529 = vld [vmem:[%s431 + $0x10c] sm:$0xf]
        %v530 = vld [vmem:[%s431 + $0x110] sm:$0xf]
        %v531 = vld [vmem:[%s431 + $0x114] sm:$0xf]
        %v532 = vld [vmem:[%s431 + $0x118] sm:$0xf]
        %v533 = vld [vmem:[%s431 + $0x11c] sm:$0xf]
        %v534 = vld [vmem:[%s431 + $0x120] sm:$0xf]
        %v535 = vld [vmem:[%s431 + $0x124] sm:$0xf]
        %v536 = vld [vmem:[%s431 + $0x128] sm:$0xf]
        %v537 = vld [vmem:[%s431 + $0x12c] sm:$0xf]
        %v538 = vld [vmem:[%s431 + $0x130] sm:$0xf]
        %v539 = vld [vmem:[%s431 + $0x134] sm:$0xf]
        %v540 = vld [vmem:[%s431 + $0x138] sm:$0xf]
        %v541 = vld [vmem:[%s431 + $0x13c] sm:$0xf]
        %v542 = vld [vmem:[%s431 + $0x140] sm:$0xf]
        %v543 = vld [vmem:[%s431 + $0x144] sm:$0xf]
        %v544 = vld [vmem:[%s431 + $0x148] sm:$0xf]
        %v545 = vld [vmem:[%s431 + $0x14c] sm:$0xf]
        %v546 = vld [vmem:[%s431 + $0x150] sm:$0xf]
        %v547 = vld [vmem:[%s431 + $0x154] sm:$0xf]
        %v548 = vld [vmem:[%s431 + $0x158] sm:$0xf]
        %v549 = vld [vmem:[%s431 + $0x15c] sm:$0xf]
        %v550 = vld [vmem:[%s431 + $0x160] sm:$0xf]
        %v551 = vld [vmem:[%s431 + $0x164] sm:$0xf]
        %v552 = vld [vmem:[%s431 + $0x168] sm:$0xf]
        %v553 = vld [vmem:[%s431 + $0x16c] sm:$0xf]
        %v554 = vld [vmem:[%s431 + $0x170] sm:$0xf]
        %v555 = vld [vmem:[%s431 + $0x174] sm:$0xf]
        %v556 = vld [vmem:[%s431 + $0x178] sm:$0xf]
        %v557 = vld [vmem:[%s431 + $0x17c] sm:$0xf]
        %v558 = vld [vmem:[%s431 + $0x180] sm:$0xf]
        %v559 = vld [vmem:[%s431 + $0x184] sm:$0xf]
        %v560 = vld [vmem:[%s431 + $0x188] sm:$0xf]
        %v561 = vld [vmem:[%s431 + $0x18c] sm:$0xf]
        %v562 = vld [vmem:[%s431 + $0x190] sm:$0xf]
        %v563 = vld [vmem:[%s431 + $0x194] sm:$0xf]
        %v564 = vld [vmem:[%s431 + $0x198] sm:$0xf]
        %v565 = vld [vmem:[%s431 + $0x19c] sm:$0xf]
        %v566 = vld [vmem:[%s431 + $0x1a0] sm:$0xf]
        %v567 = vld [vmem:[%s431 + $0x1a4] sm:$0xf]
        %v568 = vld [vmem:[%s431 + $0x1a8] sm:$0xf]
        %v569 = vld [vmem:[%s431 + $0x1ac] sm:$0xf]
        %v570 = vld [vmem:[%s431 + $0x1b0] sm:$0xf]
        %v571 = vld [vmem:[%s431 + $0x1b4] sm:$0xf]
        %v572 = vld [vmem:[%s431 + $0x1b8] sm:$0xf]
        %v573 = vld [vmem:[%s431 + $0x1bc] sm:$0xf]
        %v574 = vld [vmem:[%s431 + $0x1c0] sm:$0xf]
        %v575 = vld [vmem:[%s431 + $0x1c4] sm:$0xf]
        %v576 = vld [vmem:[%s431 + $0x1c8] sm:$0xf]
        %v577 = vld [vmem:[%s431 + $0x1cc] sm:$0xf]
        %v578 = vld [vmem:[%s1] sm:$0xf]
        %v579 = vld [vmem:[%s1 + $0x4] sm:$0xf]
        %v580 = vld [vmem:[%s1 + $0x8] sm:$0xf]
        %v581 = vld [vmem:[%s1 + $0xc] sm:$0xf]
        %v698 = vunpack.c.l.b16 %v462
        %v699 = vunpack.c.l.b16 %v463
        %v700 = vunpack.c.l.b16 %v464
        %v701 = vunpack.c.l.b16 %v465
        %v702 = vunpack.c.l.b16 %v466
        %v703 = vunpack.c.l.b16 %v467
        %v704 = vunpack.c.l.b16 %v468
        %v705 = vunpack.c.l.b16 %v469
        %v706 = vunpack.c.l.b16 %v470
        %v707 = vunpack.c.l.b16 %v471
        %v708 = vunpack.c.l.b16 %v472
        %v709 = vunpack.c.l.b16 %v473
        %v710 = vunpack.c.l.b16 %v474
        %v711 = vunpack.c.l.b16 %v475
        %v712 = vunpack.c.l.b16 %v476
        %v713 = vunpack.c.l.b16 %v477
        %v714 = vunpack.c.l.b16 %v478
        %v715 = vunpack.c.l.b16 %v479
        %v716 = vunpack.c.l.b16 %v480
        %v717 = vunpack.c.l.b16 %v481
        %v718 = vunpack.c.l.b16 %v482
        %v719 = vunpack.c.l.b16 %v483
        %v720 = vunpack.c.l.b16 %v484
        %v721 = vunpack.c.l.b16 %v485
        %v722 = vunpack.c.l.b16 %v486
        %v723 = vunpack.c.l.b16 %v487
        %v724 = vunpack.c.l.b16 %v488
        %v725 = vunpack.c.l.b16 %v489
        %v726 = vunpack.c.l.b16 %v490
        %v727 = vunpack.c.l.b16 %v491
        %v728 = vunpack.c.l.b16 %v492
        %v729 = vunpack.c.l.b16 %v493
        %v730 = vunpack.c.l.b16 %v494
        %v731 = vunpack.c.l.b16 %v495
        %v732 = vunpack.c.l.b16 %v496
        %v733 = vunpack.c.l.b16 %v497
        %v734 = vunpack.c.l.b16 %v498
        %v735 = vunpack.c.l.b16 %v499
        %v736 = vunpack.c.l.b16 %v500
        %v737 = vunpack.c.l.b16 %v501
        %v738 = vunpack.c.l.b16 %v502
        %v739 = vunpack.c.l.b16 %v503
        %v740 = vunpack.c.l.b16 %v504
        %v741 = vunpack.c.l.b16 %v505
        %v742 = vunpack.c.l.b16 %v506
        %v743 = vunpack.c.l.b16 %v507
        %v744 = vunpack.c.l.b16 %v508
        %v745 = vunpack.c.l.b16 %v509
        %v746 = vunpack.c.l.b16 %v510
        %v747 = vunpack.c.l.b16 %v511
        %v748 = vunpack.c.l.b16 %v512
        %v749 = vunpack.c.l.b16 %v513
        %v750 = vunpack.c.l.b16 %v514
        %v751 = vunpack.c.l.b16 %v515
        %v752 = vunpack.c.l.b16 %v516
        %v753 = vunpack.c.l.b16 %v517
        %v754 = vunpack.c.l.b16 %v518
        %v755 = vunpack.c.l.b16 %v519
        %v756 = vunpack.c.l.b16 %v520
        %v757 = vunpack.c.l.b16 %v521
        %v758 = vunpack.c.l.b16 %v522
        %v759 = vunpack.c.l.b16 %v523
        %v760 = vunpack.c.l.b16 %v524
        %v761 = vunpack.c.l.b16 %v525
        %v762 = vunpack.c.l.b16 %v526
        %v763 = vunpack.c.l.b16 %v527
        %v764 = vunpack.c.l.b16 %v528
        %v765 = vunpack.c.l.b16 %v529
        %v766 = vunpack.c.l.b16 %v530
        %v767 = vunpack.c.l.b16 %v531
        %v768 = vunpack.c.l.b16 %v532
        %v769 = vunpack.c.l.b16 %v533
        %v770 = vunpack.c.l.b16 %v534
        %v771 = vunpack.c.l.b16 %v535
        %v772 = vunpack.c.l.b16 %v536
        %v773 = vunpack.c.l.b16 %v537
        %v774 = vunpack.c.l.b16 %v538
        %v775 = vunpack.c.l.b16 %v539
        %v776 = vunpack.c.l.b16 %v540
        %v777 = vunpack.c.l.b16 %v541
        %v778 = vunpack.c.l.b16 %v542
        %v779 = vunpack.c.l.b16 %v543
        %v780 = vunpack.c.l.b16 %v544
        %v781 = vunpack.c.l.b16 %v545
        %v782 = vunpack.c.l.b16 %v546
        %v783 = vunpack.c.l.b16 %v547
        %v784 = vunpack.c.l.b16 %v548
        %v785 = vunpack.c.l.b16 %v549
        %v786 = vunpack.c.l.b16 %v550
        %v787 = vunpack.c.l.b16 %v551
        %v788 = vunpack.c.l.b16 %v552
        %v789 = vunpack.c.l.b16 %v553
        %v790 = vunpack.c.l.b16 %v554
        %v791 = vunpack.c.l.b16 %v555
        %v792 = vunpack.c.l.b16 %v556
        %v793 = vunpack.c.l.b16 %v557
        %v794 = vunpack.c.l.b16 %v558
        %v795 = vunpack.c.l.b16 %v559
        %v796 = vunpack.c.l.b16 %v560
        %v797 = vunpack.c.l.b16 %v561
        %v798 = vunpack.c.l.b16 %v562
        %v799 = vunpack.c.l.b16 %v563
        %v800 = vunpack.c.l.b16 %v564
        %v801 = vunpack.c.l.b16 %v565
        %v802 = vunpack.c.l.b16 %v566
        %v803 = vunpack.c.l.b16 %v567
        %v804 = vunpack.c.l.b16 %v568
        %v805 = vunpack.c.l.b16 %v569
        %v806 = vunpack.c.l.b16 %v570
        %v807 = vunpack.c.l.b16 %v571
        %v808 = vunpack.c.l.b16 %v572
        %v809 = vunpack.c.l.b16 %v573
        %v810 = vunpack.c.l.b16 %v574
        %v811 = vunpack.c.l.b16 %v575
        %v812 = vunpack.c.l.b16 %v576
        %v813 = vunpack.c.l.b16 %v577
        %v814 = vpack.c.b16 %v699, %v698
        %v815 = vpack.c.b16 %v701, %v700
        %v816 = vpack.c.b16 %v703, %v702
        %v817 = vpack.c.b16 %v705, %v704
        %v818 = vpack.c.b16 %v707, %v706
        %v819 = vpack.c.b16 %v709, %v708
        %v820 = vpack.c.b16 %v711, %v710
        %v821 = vpack.c.b16 %v713, %v712
        %v822 = vpack.c.b16 %v715, %v714
        %v823 = vpack.c.b16 %v717, %v716
        %v824 = vpack.c.b16 %v719, %v718
        %v825 = vpack.c.b16 %v721, %v720
        %v826 = vpack.c.b16 %v723, %v722
        %v827 = vpack.c.b16 %v725, %v724
        %v828 = vpack.c.b16 %v727, %v726
        %v829 = vpack.c.b16 %v729, %v728
        %v830 = vpack.c.b16 %v731, %v730
        %v831 = vpack.c.b16 %v733, %v732
        %v832 = vpack.c.b16 %v735, %v734
        %v833 = vpack.c.b16 %v737, %v736
        %v834 = vpack.c.b16 %v739, %v738
        %v835 = vpack.c.b16 %v741, %v740
        %v836 = vpack.c.b16 %v743, %v742
        %v837 = vpack.c.b16 %v745, %v744
        %v838 = vpack.c.b16 %v747, %v746
        %v839 = vpack.c.b16 %v749, %v748
        %v840 = vpack.c.b16 %v751, %v750
        %v841 = vpack.c.b16 %v753, %v752
        %v842 = vpack.c.b16 %v755, %v754
        %v843 = vpack.c.b16 %v757, %v756
        %v844 = vpack.c.b16 %v759, %v758
        %v845 = vpack.c.b16 %v761, %v760
        %v846 = vpack.c.b16 %v763, %v762
        %v847 = vpack.c.b16 %v765, %v764
        %v848 = vpack.c.b16 %v767, %v766
        %v849 = vpack.c.b16 %v769, %v768
        %v850 = vpack.c.b16 %v771, %v770
        %v851 = vpack.c.b16 %v773, %v772
        %v852 = vpack.c.b16 %v775, %v774
        %v853 = vpack.c.b16 %v777, %v776
        %v854 = vpack.c.b16 %v779, %v778
        %v855 = vpack.c.b16 %v781, %v780
        %v856 = vpack.c.b16 %v783, %v782
        %v857 = vpack.c.b16 %v785, %v784
        %v858 = vpack.c.b16 %v787, %v786
        %v859 = vpack.c.b16 %v789, %v788
        %v860 = vpack.c.b16 %v791, %v790
        %v861 = vpack.c.b16 %v793, %v792
        %v862 = vpack.c.b16 %v795, %v794
        %v863 = vpack.c.b16 %v797, %v796
        %v864 = vpack.c.b16 %v799, %v798
        %v865 = vpack.c.b16 %v801, %v800
        %v866 = vpack.c.b16 %v803, %v802
        %v867 = vpack.c.b16 %v805, %v804
        %v868 = vpack.c.b16 %v807, %v806
        %v869 = vpack.c.b16 %v809, %v808
        %v870 = vpack.c.b16 %v811, %v810
        %v871 = vpack.c.b16 %v813, %v812
        %v876 = vunpack.c.l.b16 %v578
        %v877 = vunpack.c.l.b16 %v579
        %v878 = vunpack.c.l.b16 %v580
        %v879 = vunpack.c.l.b16 %v581
        %v880 = vpack.c.b16 %v877, %v876
        %v881 = vpack.c.b16 %v879, %v878
        %vm884 = vcmask 261120
        %v886 = vsel %vm884, %v814, 0
        %v889 = vsel %vm884, %v815, 0
        %v892 = vsel %vm884, %v816, 0
        %v895 = vsel %vm884, %v817, 0
        %v898 = vsel %vm884, %v818, 0
        %v901 = vsel %vm884, %v819, 0
        %v904 = vsel %vm884, %v820, 0
        %v907 = vsel %vm884, %v821, 0
        %v910 = vsel %vm884, %v822, 0
        %v913 = vsel %vm884, %v823, 0
        %v916 = vsel %vm884, %v824, 0
        %v919 = vsel %vm884, %v825, 0
        %v922 = vsel %vm884, %v826, 0
        %v925 = vsel %vm884, %v827, 0
        %v928 = vsel %vm884, %v828, 0
        %v931 = vsel %vm884, %v829, 0
        %v934 = vsel %vm884, %v830, 0
        %v937 = vsel %vm884, %v831, 0
        %v940 = vsel %vm884, %v832, 0
        %v943 = vsel %vm884, %v833, 0
        %v946 = vsel %vm884, %v834, 0
        %v949 = vsel %vm884, %v835, 0
        %v952 = vsel %vm884, %v836, 0
        %v955 = vsel %vm884, %v837, 0
        %v958 = vsel %vm884, %v838, 0
        %v961 = vsel %vm884, %v839, 0
        %v964 = vsel %vm884, %v840, 0
        %v967 = vsel %vm884, %v841, 0
        %v970 = vsel %vm884, %v842, 0
        %v973 = vsel %vm884, %v843, 0
        %v976 = vsel %vm884, %v844, 0
        %v979 = vsel %vm884, %v845, 0
        %v982 = vsel %vm884, %v846, 0
        %v985 = vsel %vm884, %v847, 0
        %v988 = vsel %vm884, %v848, 0
        %v991 = vsel %vm884, %v849, 0
        %v994 = vsel %vm884, %v850, 0
        %v997 = vsel %vm884, %v851, 0
        %v1000 = vsel %vm884, %v852, 0
        %v1003 = vsel %vm884, %v853, 0
        %v1006 = vsel %vm884, %v854, 0
        %v1009 = vsel %vm884, %v855, 0
        %v1012 = vsel %vm884, %v856, 0
        %v1015 = vsel %vm884, %v857, 0
        %v1018 = vsel %vm884, %v858, 0
        %v1021 = vsel %vm884, %v859, 0
        %v1024 = vsel %vm884, %v860, 0
        %v1027 = vsel %vm884, %v861, 0
        %v1030 = vsel %vm884, %v862, 0
        %v1033 = vsel %vm884, %v863, 0
        %v1036 = vsel %vm884, %v864, 0
        %v1039 = vsel %vm884, %v865, 0
        %v1042 = vsel %vm884, %v866, 0
        %v1045 = vsel %vm884, %v867, 0
        %v1048 = vsel %vm884, %v868, 0
        %v1051 = vsel %vm884, %v869, 0
        %v1054 = vsel %vm884, %v870, 0
        %v1057 = vsel %vm884, %v871, 0
        %1059 = vmatpush.bf16.msra.mxu0 0
        %1060 = vmatpush.bf16.msra.mxu0 0
        %1061 = vmatpush.bf16.msra.mxu0 0
        %1062 = vmatpush.bf16.msra.mxu0 0
        %1063 = vmatpush.bf16.msra.mxu0 0
        %1064 = vmatpush.bf16.msra.mxu0 0
        %1065 = vmatpush.bf16.msra.mxu0 %v881
        %1066 = vmatpush.bf16.msra.mxu0 %v880
        %1067 = vmatmul.bf16.gmra.mxu0 %v886
        %v1068 = vpop.f32.mrf.mxu0
        %v1069 = vadd.f32 0.0, %v1068
        %v1070 = vpop.f32.mrf.mxu0
        %v1071 = vadd.f32 0.0, %v1070
        %1072 = vmatmul.bf16.gmra.mxu0 %v889
        %v1073 = vpop.f32.mrf.mxu0
        %v1074 = vadd.f32 0.0, %v1073
        %v1075 = vpop.f32.mrf.mxu0
        %v1076 = vadd.f32 0.0, %v1075
        %1077 = vmatmul.bf16.gmra.mxu0 %v892
        %v1078 = vpop.f32.mrf.mxu0
        %v1079 = vadd.f32 0.0, %v1078
        %v1080 = vpop.f32.mrf.mxu0
        %v1081 = vadd.f32 0.0, %v1080
        %1082 = vmatmul.bf16.gmra.mxu0 %v895
        %v1083 = vpop.f32.mrf.mxu0
        %v1084 = vadd.f32 0.0, %v1083
        %v1085 = vpop.f32.mrf.mxu0
        %v1086 = vadd.f32 0.0, %v1085
        %1087 = vmatmul.bf16.gmra.mxu0 %v898
        %v1088 = vpop.f32.mrf.mxu0
        %v1089 = vadd.f32 0.0, %v1088
        %v1090 = vpop.f32.mrf.mxu0
        %v1091 = vadd.f32 0.0, %v1090
        %1092 = vmatmul.bf16.gmra.mxu0 %v901
        %v1093 = vpop.f32.mrf.mxu0
        %v1094 = vadd.f32 0.0, %v1093
        %v1095 = vpop.f32.mrf.mxu0
        %v1096 = vadd.f32 0.0, %v1095
        %1097 = vmatmul.bf16.gmra.mxu0 %v904
        %v1098 = vpop.f32.mrf.mxu0
        %v1099 = vadd.f32 0.0, %v1098
        %v1100 = vpop.f32.mrf.mxu0
        %v1101 = vadd.f32 0.0, %v1100
        %1102 = vmatmul.bf16.gmra.mxu0 %v907
        %v1103 = vpop.f32.mrf.mxu0
        %v1104 = vadd.f32 0.0, %v1103
        %v1105 = vpop.f32.mrf.mxu0
        %v1106 = vadd.f32 0.0, %v1105
        %1107 = vmatmul.bf16.gmra.mxu0 %v910
        %v1108 = vpop.f32.mrf.mxu0
        %v1109 = vadd.f32 0.0, %v1108
        %v1110 = vpop.f32.mrf.mxu0
        %v1111 = vadd.f32 0.0, %v1110
        %1112 = vmatmul.bf16.gmra.mxu0 %v913
        %v1113 = vpop.f32.mrf.mxu0
        %v1114 = vadd.f32 0.0, %v1113
        %v1115 = vpop.f32.mrf.mxu0
        %v1116 = vadd.f32 0.0, %v1115
        %1117 = vmatmul.bf16.gmra.mxu0 %v916
        %v1118 = vpop.f32.mrf.mxu0
        %v1119 = vadd.f32 0.0, %v1118
        %v1120 = vpop.f32.mrf.mxu0
        %v1121 = vadd.f32 0.0, %v1120
        %1122 = vmatmul.bf16.gmra.mxu0 %v919
        %v1123 = vpop.f32.mrf.mxu0
        %v1124 = vadd.f32 0.0, %v1123
        %v1125 = vpop.f32.mrf.mxu0
        %v1126 = vadd.f32 0.0, %v1125
        %1127 = vmatmul.bf16.gmra.mxu0 %v922
        %v1128 = vpop.f32.mrf.mxu0
        %v1129 = vadd.f32 0.0, %v1128
        %v1130 = vpop.f32.mrf.mxu0
        %v1131 = vadd.f32 0.0, %v1130
        %1132 = vmatmul.bf16.gmra.mxu0 %v925
        %v1133 = vpop.f32.mrf.mxu0
        %v1134 = vadd.f32 0.0, %v1133
        %v1135 = vpop.f32.mrf.mxu0
        %v1136 = vadd.f32 0.0, %v1135
        %1137 = vmatmul.bf16.gmra.mxu0 %v928
        %v1138 = vpop.f32.mrf.mxu0
        %v1139 = vadd.f32 0.0, %v1138
        %v1140 = vpop.f32.mrf.mxu0
        %v1141 = vadd.f32 0.0, %v1140
        %1142 = vmatmul.bf16.gmra.mxu0 %v931
        %v1143 = vpop.f32.mrf.mxu0
        %v1144 = vadd.f32 0.0, %v1143
        %v1145 = vpop.f32.mrf.mxu0
        %v1146 = vadd.f32 0.0, %v1145
        %1147 = vmatmul.bf16.gmra.mxu0 %v934
        %v1148 = vpop.f32.mrf.mxu0
        %v1149 = vadd.f32 0.0, %v1148
        %v1150 = vpop.f32.mrf.mxu0
        %v1151 = vadd.f32 0.0, %v1150
        %1152 = vmatmul.bf16.gmra.mxu0 %v937
        %v1153 = vpop.f32.mrf.mxu0
        %v1154 = vadd.f32 0.0, %v1153
        %v1155 = vpop.f32.mrf.mxu0
        %v1156 = vadd.f32 0.0, %v1155
        %1157 = vmatmul.bf16.gmra.mxu0 %v940
        %v1158 = vpop.f32.mrf.mxu0
        %v1159 = vadd.f32 0.0, %v1158
        %v1160 = vpop.f32.mrf.mxu0
        %v1161 = vadd.f32 0.0, %v1160
        %1162 = vmatmul.bf16.gmra.mxu0 %v943
        %v1163 = vpop.f32.mrf.mxu0
        %v1164 = vadd.f32 0.0, %v1163
        %v1165 = vpop.f32.mrf.mxu0
        %v1166 = vadd.f32 0.0, %v1165
        %1167 = vmatmul.bf16.gmra.mxu0 %v946
        %v1168 = vpop.f32.mrf.mxu0
        %v1169 = vadd.f32 0.0, %v1168
        %v1170 = vpop.f32.mrf.mxu0
        %v1171 = vadd.f32 0.0, %v1170
        %1172 = vmatmul.bf16.gmra.mxu0 %v949
        %v1173 = vpop.f32.mrf.mxu0
        %v1174 = vadd.f32 0.0, %v1173
        %v1175 = vpop.f32.mrf.mxu0
        %v1176 = vadd.f32 0.0, %v1175
        %1177 = vmatmul.bf16.gmra.mxu0 %v952
        %v1178 = vpop.f32.mrf.mxu0
        %v1179 = vadd.f32 0.0, %v1178
        %v1180 = vpop.f32.mrf.mxu0
        %v1181 = vadd.f32 0.0, %v1180
        %1182 = vmatmul.bf16.gmra.mxu0 %v955
        %v1183 = vpop.f32.mrf.mxu0
        %v1184 = vadd.f32 0.0, %v1183
        %v1185 = vpop.f32.mrf.mxu0
        %v1186 = vadd.f32 0.0, %v1185
        %1187 = vmatmul.bf16.gmra.mxu0 %v958
        %v1188 = vpop.f32.mrf.mxu0
        %v1189 = vadd.f32 0.0, %v1188
        %v1190 = vpop.f32.mrf.mxu0
        %v1191 = vadd.f32 0.0, %v1190
        %1192 = vmatmul.bf16.gmra.mxu0 %v961
        %v1193 = vpop.f32.mrf.mxu0
        %v1194 = vadd.f32 0.0, %v1193
        %v1195 = vpop.f32.mrf.mxu0
        %v1196 = vadd.f32 0.0, %v1195
        %1197 = vmatmul.bf16.gmra.mxu0 %v964
        %v1198 = vpop.f32.mrf.mxu0
        %v1199 = vadd.f32 0.0, %v1198
        %v1200 = vpop.f32.mrf.mxu0
        %v1201 = vadd.f32 0.0, %v1200
        %1202 = vmatmul.bf16.gmra.mxu0 %v967
        %v1203 = vpop.f32.mrf.mxu0
        %v1204 = vadd.f32 0.0, %v1203
        %v1205 = vpop.f32.mrf.mxu0
        %v1206 = vadd.f32 0.0, %v1205
        %1207 = vmatmul.bf16.gmra.mxu0 %v970
        %v1208 = vpop.f32.mrf.mxu0
        %v1209 = vadd.f32 0.0, %v1208
        %v1210 = vpop.f32.mrf.mxu0
        %v1211 = vadd.f32 0.0, %v1210
        %1212 = vmatmul.bf16.gmra.mxu0 %v973
        %v1213 = vpop.f32.mrf.mxu0
        %v1214 = vadd.f32 0.0, %v1213
        %v1215 = vpop.f32.mrf.mxu0
        %v1216 = vadd.f32 0.0, %v1215
        %1217 = vmatmul.bf16.gmra.mxu0 %v976
        %v1218 = vpop.f32.mrf.mxu0
        %v1219 = vadd.f32 0.0, %v1218
        %v1220 = vpop.f32.mrf.mxu0
        %v1221 = vadd.f32 0.0, %v1220
        %1222 = vmatmul.bf16.gmra.mxu0 %v979
        %v1223 = vpop.f32.mrf.mxu0
        %v1224 = vadd.f32 0.0, %v1223
        %v1225 = vpop.f32.mrf.mxu0
        %v1226 = vadd.f32 0.0, %v1225
        %1227 = vmatmul.bf16.gmra.mxu0 %v982
        %v1228 = vpop.f32.mrf.mxu0
        %v1229 = vadd.f32 0.0, %v1228
        %v1230 = vpop.f32.mrf.mxu0
        %v1231 = vadd.f32 0.0, %v1230
        %1232 = vmatmul.bf16.gmra.mxu0 %v985
        %v1233 = vpop.f32.mrf.mxu0
        %v1234 = vadd.f32 0.0, %v1233
        %v1235 = vpop.f32.mrf.mxu0
        %v1236 = vadd.f32 0.0, %v1235
        %1237 = vmatmul.bf16.gmra.mxu0 %v988
        %v1238 = vpop.f32.mrf.mxu0
        %v1239 = vadd.f32 0.0, %v1238
        %v1240 = vpop.f32.mrf.mxu0
        %v1241 = vadd.f32 0.0, %v1240
        %1242 = vmatmul.bf16.gmra.mxu0 %v991
        %v1243 = vpop.f32.mrf.mxu0
        %v1244 = vadd.f32 0.0, %v1243
        %v1245 = vpop.f32.mrf.mxu0
        %v1246 = vadd.f32 0.0, %v1245
        %1247 = vmatmul.bf16.gmra.mxu0 %v994
        %v1248 = vpop.f32.mrf.mxu0
        %v1249 = vadd.f32 0.0, %v1248
        %v1250 = vpop.f32.mrf.mxu0
        %v1251 = vadd.f32 0.0, %v1250
        %1252 = vmatmul.bf16.gmra.mxu0 %v997
        %v1253 = vpop.f32.mrf.mxu0
        %v1254 = vadd.f32 0.0, %v1253
        %v1255 = vpop.f32.mrf.mxu0
        %v1256 = vadd.f32 0.0, %v1255
        %1257 = vmatmul.bf16.gmra.mxu0 %v1000
        %v1258 = vpop.f32.mrf.mxu0
        %v1259 = vadd.f32 0.0, %v1258
        %v1260 = vpop.f32.mrf.mxu0
        %v1261 = vadd.f32 0.0, %v1260
        %1262 = vmatmul.bf16.gmra.mxu0 %v1003
        %v1263 = vpop.f32.mrf.mxu0
        %v1264 = vadd.f32 0.0, %v1263
        %v1265 = vpop.f32.mrf.mxu0
        %v1266 = vadd.f32 0.0, %v1265
        %1267 = vmatmul.bf16.gmra.mxu0 %v1006
        %v1268 = vpop.f32.mrf.mxu0
        %v1269 = vadd.f32 0.0, %v1268
        %v1270 = vpop.f32.mrf.mxu0
        %v1271 = vadd.f32 0.0, %v1270
        %1272 = vmatmul.bf16.gmra.mxu0 %v1009
        %v1273 = vpop.f32.mrf.mxu0
        %v1274 = vadd.f32 0.0, %v1273
        %v1275 = vpop.f32.mrf.mxu0
        %v1276 = vadd.f32 0.0, %v1275
        %1277 = vmatmul.bf16.gmra.mxu0 %v1012
        %v1278 = vpop.f32.mrf.mxu0
        %v1279 = vadd.f32 0.0, %v1278
        %v1280 = vpop.f32.mrf.mxu0
        %v1281 = vadd.f32 0.0, %v1280
        %1282 = vmatmul.bf16.gmra.mxu0 %v1015
        %v1283 = vpop.f32.mrf.mxu0
        %v1284 = vadd.f32 0.0, %v1283
        %v1285 = vpop.f32.mrf.mxu0
        %v1286 = vadd.f32 0.0, %v1285
        %1287 = vmatmul.bf16.gmra.mxu0 %v1018
        %v1288 = vpop.f32.mrf.mxu0
        %v1289 = vadd.f32 0.0, %v1288
        %v1290 = vpop.f32.mrf.mxu0
        %v1291 = vadd.f32 0.0, %v1290
        %1292 = vmatmul.bf16.gmra.mxu0 %v1021
        %v1293 = vpop.f32.mrf.mxu0
        %v1294 = vadd.f32 0.0, %v1293
        %v1295 = vpop.f32.mrf.mxu0
        %v1296 = vadd.f32 0.0, %v1295
        %1297 = vmatmul.bf16.gmra.mxu0 %v1024
        %v1298 = vpop.f32.mrf.mxu0
        %v1299 = vadd.f32 0.0, %v1298
        %v1300 = vpop.f32.mrf.mxu0
        %v1301 = vadd.f32 0.0, %v1300
        %1302 = vmatmul.bf16.gmra.mxu0 %v1027
        %v1303 = vpop.f32.mrf.mxu0
        %v1304 = vadd.f32 0.0, %v1303
        %v1305 = vpop.f32.mrf.mxu0
        %v1306 = vadd.f32 0.0, %v1305
        %1307 = vmatmul.bf16.gmra.mxu0 %v1030
        %v1308 = vpop.f32.mrf.mxu0
        %v1309 = vadd.f32 0.0, %v1308
        %v1310 = vpop.f32.mrf.mxu0
        %v1311 = vadd.f32 0.0, %v1310
        %1312 = vmatmul.bf16.gmra.mxu0 %v1033
        %v1313 = vpop.f32.mrf.mxu0
        %v1314 = vadd.f32 0.0, %v1313
        %v1315 = vpop.f32.mrf.mxu0
        %v1316 = vadd.f32 0.0, %v1315
        %1317 = vmatmul.bf16.gmra.mxu0 %v1036
        %v1318 = vpop.f32.mrf.mxu0
        %v1319 = vadd.f32 0.0, %v1318
        %v1320 = vpop.f32.mrf.mxu0
        %v1321 = vadd.f32 0.0, %v1320
        %1322 = vmatmul.bf16.gmra.mxu0 %v1039
        %v1323 = vpop.f32.mrf.mxu0
        %v1324 = vadd.f32 0.0, %v1323
        %v1325 = vpop.f32.mrf.mxu0
        %v1326 = vadd.f32 0.0, %v1325
        %1327 = vmatmul.bf16.gmra.mxu0 %v1042
        %v1328 = vpop.f32.mrf.mxu0
        %v1329 = vadd.f32 0.0, %v1328
        %v1330 = vpop.f32.mrf.mxu0
        %v1331 = vadd.f32 0.0, %v1330
        %1332 = vmatmul.bf16.gmra.mxu0 %v1045
        %v1333 = vpop.f32.mrf.mxu0
        %v1334 = vadd.f32 0.0, %v1333
        %v1335 = vpop.f32.mrf.mxu0
        %v1336 = vadd.f32 0.0, %v1335
        %1337 = vmatmul.bf16.gmra.mxu0 %v1048
        %v1338 = vpop.f32.mrf.mxu0
        %v1339 = vadd.f32 0.0, %v1338
        %v1340 = vpop.f32.mrf.mxu0
        %v1341 = vadd.f32 0.0, %v1340
        %1342 = vmatmul.bf16.gmra.mxu0 %v1051
        %v1343 = vpop.f32.mrf.mxu0
        %v1344 = vadd.f32 0.0, %v1343
        %v1345 = vpop.f32.mrf.mxu0
        %v1346 = vadd.f32 0.0, %v1345
        %1347 = vmatmul.bf16.gmra.mxu0 %v1054
        %v1348 = vpop.f32.mrf.mxu0
        %v1349 = vadd.f32 0.0, %v1348
        %v1350 = vpop.f32.mrf.mxu0
        %v1351 = vadd.f32 0.0, %v1350
        %1352 = vmatmul.bf16.gmra.mxu0 %v1057
        %v1353 = vpop.f32.mrf.mxu0
        %v1354 = vadd.f32 0.0, %v1353
        %v1355 = vpop.f32.mrf.mxu0
        %v1356 = vadd.f32 0.0, %v1355
        %1357 = vdwg.mxu0
        %v1358 = vsel %vm884, %v1069, -inf
        %v1359 = vsel %vm884, %v1141, -inf
        %v1360 = vmax.f32 %v1358, %v1359
        %v1361 = vsel %vm884, %v1214, -inf
        %v1362 = vmax.f32 %v1360, %v1361
        %v1363 = vsel %vm884, %v1286, -inf
        %v1364 = vmax.f32 %v1362, %v1363
        %v1365 = vsel %vm884, %v1071, -inf
        %v1366 = vsel %vm884, %v1144, -inf
        %v1367 = vmax.f32 %v1365, %v1366
        %v1368 = vsel %vm884, %v1216, -inf
        %v1369 = vmax.f32 %v1367, %v1368
        %v1370 = vsel %vm884, %v1289, -inf
        %v1371 = vmax.f32 %v1369, %v1370
        %v1372 = vsel %vm884, %v1074, -inf
        %v1373 = vsel %vm884, %v1146, -inf
        %v1374 = vmax.f32 %v1372, %v1373
        %v1375 = vsel %vm884, %v1219, -inf
        %v1376 = vmax.f32 %v1374, %v1375
        %v1377 = vsel %vm884, %v1291, -inf
        %v1378 = vmax.f32 %v1376, %v1377
        %v1379 = vsel %vm884, %v1076, -inf
        %v1380 = vsel %vm884, %v1149, -inf
        %v1381 = vmax.f32 %v1379, %v1380
        %v1382 = vsel %vm884, %v1221, -inf
        %v1383 = vmax.f32 %v1381, %v1382
        %v1384 = vsel %vm884, %v1294, -inf
        %v1385 = vmax.f32 %v1383, %v1384
        %v1386 = vsel %vm884, %v1079, -inf
        %v1387 = vsel %vm884, %v1151, -inf
        %v1388 = vmax.f32 %v1386, %v1387
        %v1389 = vsel %vm884, %v1224, -inf
        %v1390 = vmax.f32 %v1388, %v1389
        %v1391 = vsel %vm884, %v1296, -inf
        %v1392 = vmax.f32 %v1390, %v1391
        %v1393 = vsel %vm884, %v1081, -inf
        %v1394 = vsel %vm884, %v1154, -inf
        %v1395 = vmax.f32 %v1393, %v1394
        %v1396 = vsel %vm884, %v1226, -inf
        %v1397 = vmax.f32 %v1395, %v1396
        %v1398 = vsel %vm884, %v1299, -inf
        %v1399 = vmax.f32 %v1397, %v1398
        %v1400 = vsel %vm884, %v1084, -inf
        %v1401 = vsel %vm884, %v1156, -inf
        %v1402 = vmax.f32 %v1400, %v1401
        %v1403 = vsel %vm884, %v1229, -inf
        %v1404 = vmax.f32 %v1402, %v1403
        %v1405 = vsel %vm884, %v1301, -inf
        %v1406 = vmax.f32 %v1404, %v1405
        %v1407 = vsel %vm884, %v1086, -inf
        %v1408 = vsel %vm884, %v1159, -inf
        %v1409 = vmax.f32 %v1407, %v1408
        %v1410 = vsel %vm884, %v1231, -inf
        %v1411 = vmax.f32 %v1409, %v1410
        %v1412 = vsel %vm884, %v1304, -inf
        %v1413 = vmax.f32 %v1411, %v1412
        %v1414 = vsel %vm884, %v1089, -inf
        %v1415 = vsel %vm884, %v1161, -inf
        %v1416 = vmax.f32 %v1414, %v1415
        %v1417 = vsel %vm884, %v1234, -inf
        %v1418 = vmax.f32 %v1416, %v1417
        %v1419 = vsel %vm884, %v1306, -inf
        %v1420 = vmax.f32 %v1418, %v1419
        %v1421 = vsel %vm884, %v1091, -inf
        %v1422 = vsel %vm884, %v1164, -inf
        %v1423 = vmax.f32 %v1421, %v1422
        %v1424 = vsel %vm884, %v1236, -inf
        %v1425 = vmax.f32 %v1423, %v1424
        %v1426 = vsel %vm884, %v1309, -inf
        %v1427 = vmax.f32 %v1425, %v1426
        %v1428 = vsel %vm884, %v1094, -inf
        %v1429 = vsel %vm884, %v1166, -inf
        %v1430 = vmax.f32 %v1428, %v1429
        %v1431 = vsel %vm884, %v1239, -inf
        %v1432 = vmax.f32 %v1430, %v1431
        %v1433 = vsel %vm884, %v1311, -inf
        %v1434 = vmax.f32 %v1432, %v1433
        %v1435 = vsel %vm884, %v1096, -inf
        %v1436 = vsel %vm884, %v1169, -inf
        %v1437 = vmax.f32 %v1435, %v1436
        %v1438 = vsel %vm884, %v1241, -inf
        %v1439 = vmax.f32 %v1437, %v1438
        %v1440 = vsel %vm884, %v1314, -inf
        %v1441 = vmax.f32 %v1439, %v1440
        %v1442 = vsel %vm884, %v1099, -inf
        %v1443 = vsel %vm884, %v1171, -inf
        %v1444 = vmax.f32 %v1442, %v1443
        %v1445 = vsel %vm884, %v1244, -inf
        %v1446 = vmax.f32 %v1444, %v1445
        %v1447 = vsel %vm884, %v1316, -inf
        %v1448 = vmax.f32 %v1446, %v1447
        %v1449 = vsel %vm884, %v1101, -inf
        %v1450 = vsel %vm884, %v1174, -inf
        %v1451 = vmax.f32 %v1449, %v1450
        %v1452 = vsel %vm884, %v1246, -inf
        %v1453 = vmax.f32 %v1451, %v1452
        %v1454 = vsel %vm884, %v1319, -inf
        %v1455 = vmax.f32 %v1453, %v1454
        %v1456 = vsel %vm884, %v1104, -inf
        %v1457 = vsel %vm884, %v1176, -inf
        %v1458 = vmax.f32 %v1456, %v1457
        %v1459 = vsel %vm884, %v1249, -inf
        %v1460 = vmax.f32 %v1458, %v1459
        %v1461 = vsel %vm884, %v1321, -inf
        %v1462 = vmax.f32 %v1460, %v1461
        %v1463 = vsel %vm884, %v1106, -inf
        %v1464 = vsel %vm884, %v1179, -inf
        %v1465 = vmax.f32 %v1463, %v1464
        %v1466 = vsel %vm884, %v1251, -inf
        %v1467 = vmax.f32 %v1465, %v1466
        %v1468 = vsel %vm884, %v1324, -inf
        %v1469 = vmax.f32 %v1467, %v1468
        %v1470 = vsel %vm884, %v1109, -inf
        %v1471 = vsel %vm884, %v1181, -inf
        %v1472 = vmax.f32 %v1470, %v1471
        %v1473 = vsel %vm884, %v1254, -inf
        %v1474 = vmax.f32 %v1472, %v1473
        %v1475 = vsel %vm884, %v1326, -inf
        %v1476 = vmax.f32 %v1474, %v1475
        %v1477 = vsel %vm884, %v1111, -inf
        %v1478 = vsel %vm884, %v1184, -inf
        %v1479 = vmax.f32 %v1477, %v1478
        %v1480 = vsel %vm884, %v1256, -inf
        %v1481 = vmax.f32 %v1479, %v1480
        %v1482 = vsel %vm884, %v1329, -inf
        %v1483 = vmax.f32 %v1481, %v1482
        %v1484 = vsel %vm884, %v1114, -inf
        %v1485 = vsel %vm884, %v1186, -inf
        %v1486 = vmax.f32 %v1484, %v1485
        %v1487 = vsel %vm884, %v1259, -inf
        %v1488 = vmax.f32 %v1486, %v1487
        %v1489 = vsel %vm884, %v1331, -inf
        %v1490 = vmax.f32 %v1488, %v1489
        %v1491 = vsel %vm884, %v1116, -inf
        %v1492 = vsel %vm884, %v1189, -inf
        %v1493 = vmax.f32 %v1491, %v1492
        %v1494 = vsel %vm884, %v1261, -inf
        %v1495 = vmax.f32 %v1493, %v1494
        %v1496 = vsel %vm884, %v1334, -inf
        %v1497 = vmax.f32 %v1495, %v1496
        %v1498 = vsel %vm884, %v1119, -inf
        %v1499 = vsel %vm884, %v1191, -inf
        %v1500 = vmax.f32 %v1498, %v1499
        %v1501 = vsel %vm884, %v1264, -inf
        %v1502 = vmax.f32 %v1500, %v1501
        %v1503 = vsel %vm884, %v1336, -inf
        %v1504 = vmax.f32 %v1502, %v1503
        %v1505 = vsel %vm884, %v1121, -inf
        %v1506 = vsel %vm884, %v1194, -inf
        %v1507 = vmax.f32 %v1505, %v1506
        %v1508 = vsel %vm884, %v1266, -inf
        %v1509 = vmax.f32 %v1507, %v1508
        %v1510 = vsel %vm884, %v1339, -inf
        %v1511 = vmax.f32 %v1509, %v1510
        %v1512 = vsel %vm884, %v1124, -inf
        %v1513 = vsel %vm884, %v1196, -inf
        %v1514 = vmax.f32 %v1512, %v1513
        %v1515 = vsel %vm884, %v1269, -inf
        %v1516 = vmax.f32 %v1514, %v1515
        %v1517 = vsel %vm884, %v1341, -inf
        %v1518 = vmax.f32 %v1516, %v1517
        %v1519 = vsel %vm884, %v1126, -inf
        %v1520 = vsel %vm884, %v1199, -inf
        %v1521 = vmax.f32 %v1519, %v1520
        %v1522 = vsel %vm884, %v1271, -inf
        %v1523 = vmax.f32 %v1521, %v1522
        %v1524 = vsel %vm884, %v1344, -inf
        %v1525 = vmax.f32 %v1523, %v1524
        %v1526 = vsel %vm884, %v1129, -inf
        %v1527 = vsel %vm884, %v1201, -inf
        %v1528 = vmax.f32 %v1526, %v1527
        %v1529 = vsel %vm884, %v1274, -inf
        %v1530 = vmax.f32 %v1528, %v1529
        %v1531 = vsel %vm884, %v1346, -inf
        %v1532 = vmax.f32 %v1530, %v1531
        %v1533 = vsel %vm884, %v1131, -inf
        %v1534 = vsel %vm884, %v1204, -inf
        %v1535 = vmax.f32 %v1533, %v1534
        %v1536 = vsel %vm884, %v1276, -inf
        %v1537 = vmax.f32 %v1535, %v1536
        %v1538 = vsel %vm884, %v1349, -inf
        %v1539 = vmax.f32 %v1537, %v1538
        %v1540 = vsel %vm884, %v1134, -inf
        %v1541 = vsel %vm884, %v1206, -inf
        %v1542 = vmax.f32 %v1540, %v1541
        %v1543 = vsel %vm884, %v1279, -inf
        %v1544 = vmax.f32 %v1542, %v1543
        %v1545 = vsel %vm884, %v1351, -inf
        %v1546 = vmax.f32 %v1544, %v1545
        %v1547 = vsel %vm884, %v1136, -inf
        %v1548 = vsel %vm884, %v1209, -inf
        %v1549 = vmax.f32 %v1547, %v1548
        %v1550 = vsel %vm884, %v1281, -inf
        %v1551 = vmax.f32 %v1549, %v1550
        %v1552 = vsel %vm884, %v1354, -inf
        %v1553 = vmax.f32 %v1551, %v1552
        %v1554 = vsel %vm884, %v1139, -inf
        %v1555 = vsel %vm884, %v1211, -inf
        %v1556 = vmax.f32 %v1554, %v1555
        %v1557 = vsel %vm884, %v1284, -inf
        %v1558 = vmax.f32 %v1556, %v1557
        %v1559 = vsel %vm884, %v1356, -inf
        %v1560 = vmax.f32 %v1558, %v1559
        %v1561 = vld [vmem:[%s2] sm:$0x1]
        %v1563 = vperm.slane %v1561, 0
        %v1565 = vadd.f32 %v1364, %v1563
        %v1566 = vadd.f32 %v1371, %v1563
        %v1567 = vadd.f32 %v1378, %v1563
        %v1568 = vadd.f32 %v1385, %v1563
        %v1569 = vadd.f32 %v1392, %v1563
        %v1570 = vadd.f32 %v1399, %v1563
        %v1571 = vadd.f32 %v1406, %v1563
        %v1572 = vadd.f32 %v1413, %v1563
        %v1573 = vadd.f32 %v1420, %v1563
        %v1574 = vadd.f32 %v1427, %v1563
        %v1575 = vadd.f32 %v1434, %v1563
        %v1576 = vadd.f32 %v1441, %v1563
        %v1577 = vadd.f32 %v1448, %v1563
        %v1578 = vadd.f32 %v1455, %v1563
        %v1579 = vadd.f32 %v1462, %v1563
        %v1580 = vadd.f32 %v1469, %v1563
        %v1581 = vadd.f32 %v1476, %v1563
        %v1582 = vadd.f32 %v1483, %v1563
        %v1583 = vadd.f32 %v1490, %v1563
        %v1584 = vadd.f32 %v1497, %v1563
        %v1585 = vadd.f32 %v1504, %v1563
        %v1586 = vadd.f32 %v1511, %v1563
        %v1587 = vadd.f32 %v1518, %v1563
        %v1588 = vadd.f32 %v1525, %v1563
        %v1589 = vadd.f32 %v1532, %v1563
        %v1590 = vadd.f32 %v1539, %v1563
        %v1591 = vadd.f32 %v1546, %v1563
        %v1592 = vadd.f32 %v1553, %v1563
        %v1593 = vadd.f32 %v1560, %v1563
        %v1594 = vmax.f32 %v1565, 0.0
        %v1595 = vmax.f32 %v1566, 0.0
        %v1596 = vmax.f32 %v1567, 0.0
        %v1597 = vmax.f32 %v1568, 0.0
        %v1598 = vmax.f32 %v1569, 0.0
        %v1599 = vmax.f32 %v1570, 0.0
        %v1600 = vmax.f32 %v1571, 0.0
        %v1601 = vmax.f32 %v1572, 0.0
        %v1602 = vmax.f32 %v1573, 0.0
        %v1603 = vmax.f32 %v1574, 0.0
        %v1604 = vmax.f32 %v1575, 0.0
        %v1605 = vmax.f32 %v1576, 0.0
        %v1606 = vmax.f32 %v1577, 0.0
        %v1607 = vmax.f32 %v1578, 0.0
        %v1608 = vmax.f32 %v1579, 0.0
        %v1609 = vmax.f32 %v1580, 0.0
        %v1610 = vmax.f32 %v1581, 0.0
        %v1611 = vmax.f32 %v1582, 0.0
        %v1612 = vmax.f32 %v1583, 0.0
        %v1613 = vmax.f32 %v1584, 0.0
        %v1614 = vmax.f32 %v1585, 0.0
        %v1615 = vmax.f32 %v1586, 0.0
        %v1616 = vmax.f32 %v1587, 0.0
        %v1617 = vmax.f32 %v1588, 0.0
        %v1618 = vmax.f32 %v1589, 0.0
        %v1619 = vmax.f32 %v1590, 0.0
        %v1620 = vmax.f32 %v1591, 0.0
        %v1621 = vmax.f32 %v1592, 0.0
        %v1622 = vmax.f32 %v1593, 0.0
        %v1623 = vpack.c.bf16 %v1594, %v1594
        %v1624 = vpack.c.bf16 %v1595, %v1595
        %v1625 = vpack.c.bf16 %v1596, %v1596
        %v1626 = vpack.c.bf16 %v1597, %v1597
        %v1627 = vpack.c.bf16 %v1598, %v1598
        %v1628 = vpack.c.bf16 %v1599, %v1599
        %v1629 = vpack.c.bf16 %v1600, %v1600
        %v1630 = vpack.c.bf16 %v1601, %v1601
        %v1631 = vpack.c.bf16 %v1602, %v1602
        %v1632 = vpack.c.bf16 %v1603, %v1603
        %v1633 = vpack.c.bf16 %v1604, %v1604
        %v1634 = vpack.c.bf16 %v1605, %v1605
        %v1635 = vpack.c.bf16 %v1606, %v1606
        %v1636 = vpack.c.bf16 %v1607, %v1607
        %v1637 = vpack.c.bf16 %v1608, %v1608
        %v1638 = vpack.c.bf16 %v1609, %v1609
        %v1639 = vpack.c.bf16 %v1610, %v1610
        %v1640 = vpack.c.bf16 %v1611, %v1611
        %v1641 = vpack.c.bf16 %v1612, %v1612
        %v1642 = vpack.c.bf16 %v1613, %v1613
        %v1643 = vpack.c.bf16 %v1614, %v1614
        %v1644 = vpack.c.bf16 %v1615, %v1615
        %v1645 = vpack.c.bf16 %v1616, %v1616
        %v1646 = vpack.c.bf16 %v1617, %v1617
        %v1647 = vpack.c.bf16 %v1618, %v1618
        %v1648 = vpack.c.bf16 %v1619, %v1619
        %v1649 = vpack.c.bf16 %v1620, %v1620
        %v1650 = vpack.c.bf16 %v1621, %v1621
        %v1651 = vpack.c.bf16 %v1622, %v1622
        %vm1652 = vcmask 257024
        %1653 = vst.msk [vmem:[%s450] sm:$0xf] %vm1652, %v1623
        %1654 = vst.msk [vmem:[%s450 + $0x4] sm:$0xf] %vm1652, %v1624
        %1655 = vst.msk [vmem:[%s450 + $0x8] sm:$0xf] %vm1652, %v1625
        %1656 = vst.msk [vmem:[%s450 + $0xc] sm:$0xf] %vm1652, %v1626
        %1657 = vst.msk [vmem:[%s450 + $0x10] sm:$0xf] %vm1652, %v1627
        %1658 = vst.msk [vmem:[%s450 + $0x14] sm:$0xf] %vm1652, %v1628
        %1659 = vst.msk [vmem:[%s450 + $0x18] sm:$0xf] %vm1652, %v1629
        %1660 = vst.msk [vmem:[%s450 + $0x1c] sm:$0xf] %vm1652, %v1630
        %1661 = vst.msk [vmem:[%s450 + $0x20] sm:$0xf] %vm1652, %v1631
        %1662 = vst.msk [vmem:[%s450 + $0x24] sm:$0xf] %vm1652, %v1632
        %1663 = vst.msk [vmem:[%s450 + $0x28] sm:$0xf] %vm1652, %v1633
        %1664 = vst.msk [vmem:[%s450 + $0x2c] sm:$0xf] %vm1652, %v1634
        %1665 = vst.msk [vmem:[%s450 + $0x30] sm:$0xf] %vm1652, %v1635
        %1666 = vst.msk [vmem:[%s450 + $0x34] sm:$0xf] %vm1652, %v1636
        %1667 = vst.msk [vmem:[%s450 + $0x38] sm:$0xf] %vm1652, %v1637
        %1668 = vst.msk [vmem:[%s450 + $0x3c] sm:$0xf] %vm1652, %v1638
        %1669 = vst.msk [vmem:[%s450 + $0x40] sm:$0xf] %vm1652, %v1639
        %1670 = vst.msk [vmem:[%s450 + $0x44] sm:$0xf] %vm1652, %v1640
        %1671 = vst.msk [vmem:[%s450 + $0x48] sm:$0xf] %vm1652, %v1641
        %1672 = vst.msk [vmem:[%s450 + $0x4c] sm:$0xf] %vm1652, %v1642
        %1673 = vst.msk [vmem:[%s450 + $0x50] sm:$0xf] %vm1652, %v1643
        %1674 = vst.msk [vmem:[%s450 + $0x54] sm:$0xf] %vm1652, %v1644
        %1675 = vst.msk [vmem:[%s450 + $0x58] sm:$0xf] %vm1652, %v1645
        %1676 = vst.msk [vmem:[%s450 + $0x5c] sm:$0xf] %vm1652, %v1646
        %1677 = vst.msk [vmem:[%s450 + $0x60] sm:$0xf] %vm1652, %v1647
        %1678 = vst.msk [vmem:[%s450 + $0x64] sm:$0xf] %vm1652, %v1648
        %1679 = vst.msk [vmem:[%s450 + $0x68] sm:$0xf] %vm1652, %v1649
        %1680 = vst.msk [vmem:[%s450 + $0x6c] sm:$0xf] %vm1652, %v1650
        %1681 = vst.msk [vmem:[%s450 + $0x70] sm:$0xf] %vm1652, %v1651
        %s1682 = sand.u32 %s90, 1
        %s1683 = sand.u32 %s90, 1
        %s1684 = smul.addr %s1683, 116
        %s1685 = scalar_lea.vmem [#allocation3], %s1684
        // Predicated region
        $region95: #{traffic_sign_net.3} parent=89 // pred_check
          %p1686 = pneg %p100
        $region96: #{traffic_sign_net.3} parent=89 // pred_check_branch
          %1688 = sbr.rel (%p1686) target = $region98
        $region97: #{traffic_sign_net.3} parent=89 // pred_region
          %s1689 = smul.u32 29, %s14
          %s1690 = ssub.s32 57, %s1689
          %p1691 = scmp.lt.s32.totalorder %s1690, 29
          %s1692 = scalar_select %p1691, %s1690, 29
          %s1693 = smul.u32 4, %s1692
          %p1694 = scmp.ne.s32.totalorder 0, %s1693
          %s1695 = smul.addr %s1689, 4
          %s1696 = scalar_lea.vmem %s3, %s1695
          // Predicated region
          $region99: #{traffic_sign_net.3} parent=97 // pred_check
            %p1697 = pneg %p1694
          $region100: #{traffic_sign_net.3} parent=97 // pred_check_branch
            %1699 = sbr.rel (%p1697) target = $region102
          $region101: #{traffic_sign_net.3} parent=97 // pred_region
            // Predicated region
            $region103: #{traffic_sign_net.3} parent=101 // pred_check
              _
            $region104: #{traffic_sign_net.3} parent=101 // pred_check_branch
              %1701 = sbr.rel target = $region106
            $region105: #{traffic_sign_net.3} parent=101 // pred_region
              // Predicated region
              $region125: #{traffic_sign_net.3} parent=105 // pred_check
                _
              $region126: #{traffic_sign_net.3} parent=105 // pred_check_branch
                %1808 = sbr.rel (0) target = $region128
              $region127: #{traffic_sign_net.3} parent=105 // pred_region
                %s1810 = ssub.s32 16, 1
                %s1811 = sdiv.u32.pop %s1692, 29
                %s1812 = srem.u32.pop %s1692, 29
                // While loop
                $region129: #{traffic_sign_net.3} parent=127 // loop_pre_header
                  _
                $region130: #{traffic_sign_net.3} parent=127 // loop_header
                  %s1814 = sphi 0, %s1816
                  %p1815 = scmp.ge.s32.totalorder %s1814, %s1811
                  %s1819 = sphi 0, %s1882
                  %s1820 = sphi %s1685, %s1885
                  %s1821 = sphi %s1696, %s1886
                $region131: #{traffic_sign_net.3} parent=127 // loop_header_branch
                  %1818 = sbr.rel (%p1815) target = $region135
                $region132: #{traffic_sign_net.3} parent=127 // loop_body
                  %v1822 = vld [vmem:[%s1820] sm:%s1810]
                  %1823 = vst [vmem:[%s1821] sm:%s1810] %v1822
                  %v1824 = vld [vmem:[%s1820 + $0x4] sm:%s1810]
                  %1825 = vst [vmem:[%s1821 + $0x4] sm:%s1810] %v1824
                  %v1826 = vld [vmem:[%s1820 + $0x8] sm:%s1810]
                  %1827 = vst [vmem:[%s1821 + $0x8] sm:%s1810] %v1826
                  %v1828 = vld [vmem:[%s1820 + $0xc] sm:%s1810]
                  %1829 = vst [vmem:[%s1821 + $0xc] sm:%s1810] %v1828
                  %v1830 = vld [vmem:[%s1820 + $0x10] sm:%s1810]
                  %1831 = vst [vmem:[%s1821 + $0x10] sm:%s1810] %v1830
                  %v1832 = vld [vmem:[%s1820 + $0x14] sm:%s1810]
                  %1833 = vst [vmem:[%s1821 + $0x14] sm:%s1810] %v1832
                  %v1834 = vld [vmem:[%s1820 + $0x18] sm:%s1810]
                  %1835 = vst [vmem:[%s1821 + $0x18] sm:%s1810] %v1834
                  %v1836 = vld [vmem:[%s1820 + $0x1c] sm:%s1810]
                  %1837 = vst [vmem:[%s1821 + $0x1c] sm:%s1810] %v1836
                  %v1838 = vld [vmem:[%s1820 + $0x20] sm:%s1810]
                  %1839 = vst [vmem:[%s1821 + $0x20] sm:%s1810] %v1838
                  %v1840 = vld [vmem:[%s1820 + $0x24] sm:%s1810]
                  %1841 = vst [vmem:[%s1821 + $0x24] sm:%s1810] %v1840
                  %v1842 = vld [vmem:[%s1820 + $0x28] sm:%s1810]
                  %1843 = vst [vmem:[%s1821 + $0x28] sm:%s1810] %v1842
                  %v1844 = vld [vmem:[%s1820 + $0x2c] sm:%s1810]
                  %1845 = vst [vmem:[%s1821 + $0x2c] sm:%s1810] %v1844
                  %v1846 = vld [vmem:[%s1820 + $0x30] sm:%s1810]
                  %1847 = vst [vmem:[%s1821 + $0x30] sm:%s1810] %v1846
                  %v1848 = vld [vmem:[%s1820 + $0x34] sm:%s1810]
                  %1849 = vst [vmem:[%s1821 + $0x34] sm:%s1810] %v1848
                  %v1850 = vld [vmem:[%s1820 + $0x38] sm:%s1810]
                  %1851 = vst [vmem:[%s1821 + $0x38] sm:%s1810] %v1850
                  %v1852 = vld [vmem:[%s1820 + $0x3c] sm:%s1810]
                  %1853 = vst [vmem:[%s1821 + $0x3c] sm:%s1810] %v1852
                  %v1854 = vld [vmem:[%s1820 + $0x40] sm:%s1810]
                  %1855 = vst [vmem:[%s1821 + $0x40] sm:%s1810] %v1854
                  %v1856 = vld [vmem:[%s1820 + $0x44] sm:%s1810]
                  %1857 = vst [vmem:[%s1821 + $0x44] sm:%s1810] %v1856
                  %v1858 = vld [vmem:[%s1820 + $0x48] sm:%s1810]
                  %1859 = vst [vmem:[%s1821 + $0x48] sm:%s1810] %v1858
                  %v1860 = vld [vmem:[%s1820 + $0x4c] sm:%s1810]
                  %1861 = vst [vmem:[%s1821 + $0x4c] sm:%s1810] %v1860
                  %v1862 = vld [vmem:[%s1820 + $0x50] sm:%s1810]
                  %1863 = vst [vmem:[%s1821 + $0x50] sm:%s1810] %v1862
                  %v1864 = vld [vmem:[%s1820 + $0x54] sm:%s1810]
                  %1865 = vst [vmem:[%s1821 + $0x54] sm:%s1810] %v1864
                  %v1866 = vld [vmem:[%s1820 + $0x58] sm:%s1810]
                  %1867 = vst [vmem:[%s1821 + $0x58] sm:%s1810] %v1866
                  %v1868 = vld [vmem:[%s1820 + $0x5c] sm:%s1810]
                  %1869 = vst [vmem:[%s1821 + $0x5c] sm:%s1810] %v1868
                  %v1870 = vld [vmem:[%s1820 + $0x60] sm:%s1810]
                  %1871 = vst [vmem:[%s1821 + $0x60] sm:%s1810] %v1870
                  %v1872 = vld [vmem:[%s1820 + $0x64] sm:%s1810]
                  %1873 = vst [vmem:[%s1821 + $0x64] sm:%s1810] %v1872
                  %v1874 = vld [vmem:[%s1820 + $0x68] sm:%s1810]
                  %1875 = vst [vmem:[%s1821 + $0x68] sm:%s1810] %v1874
                  %v1876 = vld [vmem:[%s1820 + $0x6c] sm:%s1810]
                  %1877 = vst [vmem:[%s1821 + $0x6c] sm:%s1810] %v1876
                  %v1878 = vld [vmem:[%s1820 + $0x70] sm:%s1810]
                  %1879 = vst [vmem:[%s1821 + $0x70] sm:%s1810] %v1878
                  %s1880 = sadd.s32 1, %s1819
                  %p1881 = scmp.ge.s32.totalorder %s1880, %s1811
                  %s1882 = scalar_select %p1881, 0, %s1880
                  %s1883 = smul.u32 %s1882, 116
                  %s1884 = smul.u32 %s1882, 116
                  %s1885 = scalar_lea.vmem %s1685, %s1883 [#allocation3]
                  %s1886 = scalar_lea.vmem %s1696, %s1884
                $region133: #{traffic_sign_net.3} parent=127 // loop_footer
                  %s1816 = sadd.s32 %s1814, 1
                $region134: #{traffic_sign_net.3} parent=127 // loop_footer_branch
                  %1813 = sbr.rel target = $region130
                $region135: #{traffic_sign_net.3} parent=127 // loop_exit
                  _
                %s1887 = sdiv.u32.pop %s1692, 29
                %s1888 = srem.u32.pop %s1692, 29
                %s1889 = smul.u32 %s1887, 29
                %s1890 = smul.u32 4, %s1889
                %s1891 = scalar_lea.vmem %s1685, %s1890 [#allocation3]
                %s1892 = smul.u32 4, %s1889
                %s1893 = scalar_lea.vmem %s1696, %s1892
                // While loop
                $region136: #{traffic_sign_net.3} parent=127 // loop_pre_header
                  _
                $region137: #{traffic_sign_net.3} parent=127 // loop_header
                  %s1895 = sphi 0, %s1897
                  %p1896 = scmp.ge.s32.totalorder %s1895, %s1888
                  %s1900 = sphi 0, %s1907
                  %s1901 = sphi %s1891, %s1910
                  %s1902 = sphi %s1893, %s1911
                $region138: #{traffic_sign_net.3} parent=127 // loop_header_branch
                  %1899 = sbr.rel (%p1896) target = $region142
                $region139: #{traffic_sign_net.3} parent=127 // loop_body
                  %v1903 = vld [vmem:[%s1901] sm:%s1810]
                  %1904 = vst [vmem:[%s1902] sm:%s1810] %v1903
                  %s1905 = sadd.s32 1, %s1900
                  %p1906 = scmp.ge.s32.totalorder %s1905, %s1888
                  %s1907 = scalar_select %p1906, 0, %s1905
                  %s1908 = smul.u32 %s1907, 4
                  %s1909 = smul.u32 %s1907, 4
                  %s1910 = scalar_lea.vmem %s1891, %s1908 [#allocation3]
                  %s1911 = scalar_lea.vmem %s1893, %s1909
                $region140: #{traffic_sign_net.3} parent=127 // loop_footer
                  %s1897 = sadd.s32 %s1895, 1
                $region141: #{traffic_sign_net.3} parent=127 // loop_footer_branch
                  %1894 = sbr.rel target = $region137
                $region142: #{traffic_sign_net.3} parent=127 // loop_exit
                  _
              $region128: #{traffic_sign_net.3} parent=105 // pred_fallthru
                _
            $region106: #{traffic_sign_net.3} parent=101 // pred_fallthru
              _
            // Predicated region
            $region107: #{traffic_sign_net.3} parent=101 // pred_check
              _
            $region108: #{traffic_sign_net.3} parent=101 // pred_check_branch
              %1703 = sbr.rel (0) target = $region110
            $region109: #{traffic_sign_net.3} parent=101 // pred_region
              %s1705 = ssub.s32 16, 1
              %s1706 = sdiv.u32.pop %s1692, 29
              %s1707 = srem.u32.pop %s1692, 29
              // While loop
              $region111: #{traffic_sign_net.3} parent=109 // loop_pre_header
                _
              $region112: #{traffic_sign_net.3} parent=109 // loop_header
                %s1709 = sphi 0, %s1711
                %p1710 = scmp.ge.s32.totalorder %s1709, %s1706
                %s1714 = sphi 0, %s1777
                %s1715 = sphi %s1685, %s1780
                %s1716 = sphi %s1696, %s1781
              $region113: #{traffic_sign_net.3} parent=109 // loop_header_branch
                %1713 = sbr.rel (%p1710) target = $region117
              $region114: #{traffic_sign_net.3} parent=109 // loop_body
                %v1717 = vld [vmem:[%s1715] sm:%s1705]
                %1718 = vst [vmem:[%s1716] sm:%s1705] %v1717
                %v1719 = vld [vmem:[%s1715 + $0x4] sm:%s1705]
                %1720 = vst [vmem:[%s1716 + $0x4] sm:%s1705] %v1719
                %v1721 = vld [vmem:[%s1715 + $0x8] sm:%s1705]
                %1722 = vst [vmem:[%s1716 + $0x8] sm:%s1705] %v1721
                %v1723 = vld [vmem:[%s1715 + $0xc] sm:%s1705]
                %1724 = vst [vmem:[%s1716 + $0xc] sm:%s1705] %v1723
                %v1725 = vld [vmem:[%s1715 + $0x10] sm:%s1705]
                %1726 = vst [vmem:[%s1716 + $0x10] sm:%s1705] %v1725
                %v1727 = vld [vmem:[%s1715 + $0x14] sm:%s1705]
                %1728 = vst [vmem:[%s1716 + $0x14] sm:%s1705] %v1727
                %v1729 = vld [vmem:[%s1715 + $0x18] sm:%s1705]
                %1730 = vst [vmem:[%s1716 + $0x18] sm:%s1705] %v1729
                %v1731 = vld [vmem:[%s1715 + $0x1c] sm:%s1705]
                %1732 = vst [vmem:[%s1716 + $0x1c] sm:%s1705] %v1731
                %v1733 = vld [vmem:[%s1715 + $0x20] sm:%s1705]
                %1734 = vst [vmem:[%s1716 + $0x20] sm:%s1705] %v1733
                %v1735 = vld [vmem:[%s1715 + $0x24] sm:%s1705]
                %1736 = vst [vmem:[%s1716 + $0x24] sm:%s1705] %v1735
                %v1737 = vld [vmem:[%s1715 + $0x28] sm:%s1705]
                %1738 = vst [vmem:[%s1716 + $0x28] sm:%s1705] %v1737
                %v1739 = vld [vmem:[%s1715 + $0x2c] sm:%s1705]
                %1740 = vst [vmem:[%s1716 + $0x2c] sm:%s1705] %v1739
                %v1741 = vld [vmem:[%s1715 + $0x30] sm:%s1705]
                %1742 = vst [vmem:[%s1716 + $0x30] sm:%s1705] %v1741
                %v1743 = vld [vmem:[%s1715 + $0x34] sm:%s1705]
                %1744 = vst [vmem:[%s1716 + $0x34] sm:%s1705] %v1743
                %v1745 = vld [vmem:[%s1715 + $0x38] sm:%s1705]
                %1746 = vst [vmem:[%s1716 + $0x38] sm:%s1705] %v1745
                %v1747 = vld [vmem:[%s1715 + $0x3c] sm:%s1705]
                %1748 = vst [vmem:[%s1716 + $0x3c] sm:%s1705] %v1747
                %v1749 = vld [vmem:[%s1715 + $0x40] sm:%s1705]
                %1750 = vst [vmem:[%s1716 + $0x40] sm:%s1705] %v1749
                %v1751 = vld [vmem:[%s1715 + $0x44] sm:%s1705]
                %1752 = vst [vmem:[%s1716 + $0x44] sm:%s1705] %v1751
                %v1753 = vld [vmem:[%s1715 + $0x48] sm:%s1705]
                %1754 = vst [vmem:[%s1716 + $0x48] sm:%s1705] %v1753
                %v1755 = vld [vmem:[%s1715 + $0x4c] sm:%s1705]
                %1756 = vst [vmem:[%s1716 + $0x4c] sm:%s1705] %v1755
                %v1757 = vld [vmem:[%s1715 + $0x50] sm:%s1705]
                %1758 = vst [vmem:[%s1716 + $0x50] sm:%s1705] %v1757
                %v1759 = vld [vmem:[%s1715 + $0x54] sm:%s1705]
                %1760 = vst [vmem:[%s1716 + $0x54] sm:%s1705] %v1759
                %v1761 = vld [vmem:[%s1715 + $0x58] sm:%s1705]
                %1762 = vst [vmem:[%s1716 + $0x58] sm:%s1705] %v1761
                %v1763 = vld [vmem:[%s1715 + $0x5c] sm:%s1705]
                %1764 = vst [vmem:[%s1716 + $0x5c] sm:%s1705] %v1763
                %v1765 = vld [vmem:[%s1715 + $0x60] sm:%s1705]
                %1766 = vst [vmem:[%s1716 + $0x60] sm:%s1705] %v1765
                %v1767 = vld [vmem:[%s1715 + $0x64] sm:%s1705]
                %1768 = vst [vmem:[%s1716 + $0x64] sm:%s1705] %v1767
                %v1769 = vld [vmem:[%s1715 + $0x68] sm:%s1705]
                %1770 = vst [vmem:[%s1716 + $0x68] sm:%s1705] %v1769
                %v1771 = vld [vmem:[%s1715 + $0x6c] sm:%s1705]
                %1772 = vst [vmem:[%s1716 + $0x6c] sm:%s1705] %v1771
                %v1773 = vld [vmem:[%s1715 + $0x70] sm:%s1705]
                %1774 = vst [vmem:[%s1716 + $0x70] sm:%s1705] %v1773
                %s1775 = sadd.s32 1, %s1714
                %p1776 = scmp.ge.s32.totalorder %s1775, %s1706
                %s1777 = scalar_select %p1776, 0, %s1775
                %s1778 = smul.u32 %s1777, 116
                %s1779 = smul.u32 %s1777, 116
                %s1780 = scalar_lea.vmem %s1685, %s1778 [#allocation3]
                %s1781 = scalar_lea.vmem %s1696, %s1779
              $region115: #{traffic_sign_net.3} parent=109 // loop_footer
                %s1711 = sadd.s32 %s1709, 1
              $region116: #{traffic_sign_net.3} parent=109 // loop_footer_branch
                %1708 = sbr.rel target = $region112
              $region117: #{traffic_sign_net.3} parent=109 // loop_exit
                _
              %s1782 = sdiv.u32.pop %s1692, 29
              %s1783 = srem.u32.pop %s1692, 29
              %s1784 = smul.u32 %s1782, 29
              %s1785 = smul.u32 4, %s1784
              %s1786 = scalar_lea.vmem %s1685, %s1785 [#allocation3]
              %s1787 = smul.u32 4, %s1784
              %s1788 = scalar_lea.vmem %s1696, %s1787
              // While loop
              $region118: #{traffic_sign_net.3} parent=109 // loop_pre_header
                _
              $region119: #{traffic_sign_net.3} parent=109 // loop_header
                %s1790 = sphi 0, %s1792
                %p1791 = scmp.ge.s32.totalorder %s1790, %s1783
                %s1795 = sphi 0, %s1802
                %s1796 = sphi %s1786, %s1805
                %s1797 = sphi %s1788, %s1806
              $region120: #{traffic_sign_net.3} parent=109 // loop_header_branch
                %1794 = sbr.rel (%p1791) target = $region124
              $region121: #{traffic_sign_net.3} parent=109 // loop_body
                %v1798 = vld [vmem:[%s1796] sm:%s1705]
                %1799 = vst [vmem:[%s1797] sm:%s1705] %v1798
                %s1800 = sadd.s32 1, %s1795
                %p1801 = scmp.ge.s32.totalorder %s1800, %s1783
                %s1802 = scalar_select %p1801, 0, %s1800
                %s1803 = smul.u32 %s1802, 4
                %s1804 = smul.u32 %s1802, 4
                %s1805 = scalar_lea.vmem %s1786, %s1803 [#allocation3]
                %s1806 = scalar_lea.vmem %s1788, %s1804
              $region122: #{traffic_sign_net.3} parent=109 // loop_footer
                %s1792 = sadd.s32 %s1790, 1
              $region123: #{traffic_sign_net.3} parent=109 // loop_footer_branch
                %1789 = sbr.rel target = $region119
              $region124: #{traffic_sign_net.3} parent=109 // loop_exit
                _
            $region110: #{traffic_sign_net.3} parent=101 // pred_fallthru
              _
          $region102: #{traffic_sign_net.3} parent=97 // pred_fallthru
            _
          %1912 = vnop
        $region98: #{traffic_sign_net.3} parent=89 // pred_fallthru
          _
      $region90: #{traffic_sign_net.3} parent=5 // pred_fallthru
        _
      %p1913 = scmp.le.s32.totalorder 2, %s9
      // Predicated region
      $region143: #{traffic_sign_net.3} parent=5 // pred_check
        %p1914 = pneg %p1913
      $region144: #{traffic_sign_net.3} parent=5 // pred_check_branch
        %1916 = sbr.rel (%p1914) target = $region146
      $region145: #{traffic_sign_net.3} parent=5 // pred_region
        %s1917 = ssub.s32 %s9, 2
        // Predicated region
        $region147: #{traffic_sign_net.3} parent=145 // pred_check
          %p1918 = pneg %p106
        $region148: #{traffic_sign_net.3} parent=145 // pred_check_branch
          %1920 = sbr.rel (%p1918) target = $region150
        $region149: #{traffic_sign_net.3} parent=145 // pred_region
          %s1921 = sand.u32 %s91, 1
          %s1922 = sand.u32 %s91, 1
          %s1923 = smul.addr %s1922, 116
          %s1924 = scalar_lea.vmem [#allocation3], %s1923
        $region150: #{traffic_sign_net.3} parent=145 // pred_fallthru
          _
      $region146: #{traffic_sign_net.3} parent=5 // pred_fallthru
        _
    $region6: #{traffic_sign_net.3} parent=1 // loop_footer
      %s13 = sadd.s32 1, %s9
    $region7: #{traffic_sign_net.3} parent=1 // loop_footer_branch
      %8 = sbr.rel target = $region3
    $region8: #{traffic_sign_net.3} parent=1 // loop_exit
      _

// kernel: traffic_sign_net.4
$region0: #{traffic_sign_net.4}
  #allocation0 [shape = 'u32[]', space=smem, size = 0x4, offset = 0x4, fixed_abs, tag = 'smem constant byte address 0x4 - core index']
  #allocation1 [shape = 'u32[72,128]{1,0:T(1,128)}', space=vmem, size = 0x9000, scoped, tag = 'internal scratch']
  %s0 = inlined_call_operand.vmem [shape: bf16[4,72,288], index: 0, kind: input, shape index: {}]
  %s1 = inlined_call_operand.vmem [shape: bf16[288,64], index: 1, kind: input, shape index: {}]
  %s2 = inlined_call_operand.vmem [shape: f32[1,64], index: 2, kind: input, shape index: {}]
  %s3 = inlined_call_operand.vmem [shape: bf16[72,64], index: 3, kind: output, shape index: {}]
  %s4 = sld [smem:[#allocation0]]
  $region129: #{traffic_sign_net.4} parent=0
    _
  %s6 = ssub.s32 1, %s4
  %s7 = scalar_select 0, %s6, %s4
  $region1: #{traffic_sign_net.4} parent=0
    #allocation2 [shape = 'u8[245760]{0}', space=vmem, size = 0x3c000, scoped, tag = 'input window, operand 0']
    #allocation3 [shape = 'u8[20480]{0}', space=vmem, size = 0x5000, scoped, tag = 'output window, operand 0']
    loop: start=0, step=1, limit=4
    $region2: #{traffic_sign_net.4} parent=1 // loop_pre_header
      _
    $region3: #{traffic_sign_net.4} parent=1 // loop_header
      %s9 = sphi 0, %s13
      %p10 = scmp.ge.s32.totalorder %s9, 4
      %s19 = sphi 0, %s21
      %s22 = sphi 0, %s19
      %s23 = sphi 0, %s22
      %s39 = sphi 0, %s23
      %s43 = sphi 0, %s43
      %s45 = sphi 0, %s43
      %s46 = sphi 0, %s45
      %s60 = sphi 0, %s46
      %s64 = sphi 0, %s64
      %s66 = sphi 0, %s64
      %s67 = sphi 0, %s66
      %s81 = sphi 0, %s67
      %s87 = sphi 0, %s89
      %s90 = sphi 0, %s87
      %s91 = sphi 0, %s90
      %s107 = sphi 0, %s91
    $region4: #{traffic_sign_net.4} parent=1 // loop_header_branch
      %12 = sbr.rel (%p10) target = $region8
    $region5: #{traffic_sign_net.4} parent=1 // loop_body
      %s14 = ssub.s32 %s9, 1
      %s15 = ssub.s32 %s9, 2
      %s16 = sadd.s32 %s9, 1
      %s17 = ssub.s32 %s9, %s16
      %p18 = scmp.eq.s32.totalorder %s17, 0
      %s20 = sadd.s32 %s19, 1
      %s21 = scalar_select %p18, %s19, %s20
      %p24 = pneg %p18
      %p25 = scmp.eq.s32.totalorder %s9, 1
      %p26 = por %p24, %p25
      %p27 = scmp.ne.s32.totalorder %s19, %s22
      %p28 = scmp.eq.s32.totalorder %s9, 0
      %p29 = por %p27, %p28
      %p30 = scmp.ne.s32.totalorder %s19, %s22
      %p31 = scmp.eq.s32.totalorder %s14, 1
      %p32 = por %p30, %p31
      %p33 = scmp.ne.s32.totalorder %s22, %s23
      %p34 = scmp.eq.s32.totalorder %s14, 0
      %p35 = por %p33, %p34
      %p36 = scmp.ne.s32.totalorder %s22, %s23
      %p37 = scmp.eq.s32.totalorder %s15, 1
      %p38 = por %p36, %p37
      %p40 = scmp.ne.s32.totalorder %s23, %s39
      %p41 = scmp.eq.s32.totalorder %s15, 0
      %p42 = por %p40, %p41
      %s44 = sadd.s32 %s43, 1
      %p47 = scmp.eq.s32.totalorder %s9, 1
      %p48 = scmp.ne.s32.totalorder %s43, %s45
      %p49 = scmp.eq.s32.totalorder %s9, 0
      %p50 = por %p48, %p49
      %p51 = scmp.ne.s32.totalorder %s43, %s45
      %p52 = scmp.eq.s32.totalorder %s14, 1
      %p53 = por %p51, %p52
      %p54 = scmp.ne.s32.totalorder %s45, %s46
      %p55 = scmp.eq.s32.totalorder %s14, 0
      %p56 = por %p54, %p55
      %p57 = scmp.ne.s32.totalorder %s45, %s46
      %p58 = scmp.eq.s32.totalorder %s15, 1
      %p59 = por %p57, %p58
      %p61 = scmp.ne.s32.totalorder %s46, %s60
      %p62 = scmp.eq.s32.totalorder %s15, 0
      %p63 = por %p61, %p62
      %s65 = sadd.s32 %s64, 1
      %p68 = scmp.eq.s32.totalorder %s9, 1
      %p69 = scmp.ne.s32.totalorder %s64, %s66
      %p70 = scmp.eq.s32.totalorder %s9, 0
      %p71 = por %p69, %p70
      %p72 = scmp.ne.s32.totalorder %s64, %s66
      %p73 = scmp.eq.s32.totalorder %s14, 1
      %p74 = por %p72, %p73
      %p75 = scmp.ne.s32.totalorder %s66, %s67
      %p76 = scmp.eq.s32.totalorder %s14, 0
      %p77 = por %p75, %p76
      %p78 = scmp.ne.s32.totalorder %s66, %s67
      %p79 = scmp.eq.s32.totalorder %s15, 1
      %p80 = por %p78, %p79
      %p82 = scmp.ne.s32.totalorder %s67, %s81
      %p83 = scmp.eq.s32.totalorder %s15, 0
      %p84 = por %p82, %p83
      %s85 = ssub.s32 %s9, %s16
      %p86 = scmp.eq.s32.totalorder %s85, 0
      %s88 = sadd.s32 %s87, 1
      %s89 = scalar_select %p86, %s87, %s88
      %p92 = pneg %p86
      %p93 = scmp.eq.s32.totalorder %s9, 1
      %p94 = por %p92, %p93
      %p95 = scmp.ne.s32.totalorder %s87, %s90
      %p96 = scmp.eq.s32.totalorder %s9, 0
      %p97 = por %p95, %p96
      %p98 = scmp.ne.s32.totalorder %s87, %s90
      %p99 = scmp.eq.s32.totalorder %s14, 1
      %p100 = por %p98, %p99
      %p101 = scmp.ne.s32.totalorder %s90, %s91
      %p102 = scmp.eq.s32.totalorder %s14, 0
      %p103 = por %p101, %p102
      %p104 = scmp.ne.s32.totalorder %s90, %s91
      %p105 = scmp.eq.s32.totalorder %s15, 1
      %p106 = por %p104, %p105
      %p108 = scmp.ne.s32.totalorder %s91, %s107
      %p109 = scmp.eq.s32.totalorder %s15, 0
      %p110 = por %p108, %p109
      %p111 = scmp.le.s32.totalorder 1, %s9
      %p112 = scmp.lt.s32.totalorder %s9, 3
      %p113 = pnand %p111, %p112
      %p114 = pneg %p113
      // Predicated region
      $region9: #{traffic_sign_net.4} parent=5 // pred_check
        _
      $region10: #{traffic_sign_net.4} parent=5 // pred_check_branch
        %116 = sbr.rel (%p113) target = $region12
      $region11: #{traffic_sign_net.4} parent=5 // pred_region
        %s117 = ssub.s32 %s9, 1
        // Predicated region
        $region13: #{traffic_sign_net.4} parent=11 // pred_check
          %p118 = pneg %p56
        $region14: #{traffic_sign_net.4} parent=11 // pred_check_branch
          %120 = sbr.rel (%p118) target = $region16
        $region15: #{traffic_sign_net.4} parent=11 // pred_region
          _
        $region16: #{traffic_sign_net.4} parent=11 // pred_fallthru
          _
        // Predicated region
        $region17: #{traffic_sign_net.4} parent=11 // pred_check
          %p121 = pneg %p77
        $region18: #{traffic_sign_net.4} parent=11 // pred_check_branch
          %123 = sbr.rel (%p121) target = $region20
        $region19: #{traffic_sign_net.4} parent=11 // pred_region
          _
        $region20: #{traffic_sign_net.4} parent=11 // pred_fallthru
          _
      $region12: #{traffic_sign_net.4} parent=5 // pred_fallthru
        _
      %p124 = scmp.lt.s32.totalorder %s9, 2
      // Predicated region
      $region21: #{traffic_sign_net.4} parent=5 // pred_check
        %p125 = pneg %p124
      $region22: #{traffic_sign_net.4} parent=5 // pred_check_branch
        %127 = sbr.rel (%p125) target = $region24
      $region23: #{traffic_sign_net.4} parent=5 // pred_region
        // Predicated region
        $region25: #{traffic_sign_net.4} parent=23 // pred_check
          %p128 = pneg %p29
        $region26: #{traffic_sign_net.4} parent=23 // pred_check_branch
          %130 = sbr.rel (%p128) target = $region28
        $region27: #{traffic_sign_net.4} parent=23 // pred_region
          %s131 = sand.u32 %s19, 1
          %s132 = sand.u32 %s19, 1
          %s133 = smul.addr %s132, 240
          %s134 = scalar_lea.vmem [#allocation2], %s133
          %s135 = smul.u32 5, %s9
          %s136 = ssub.s32 9, %s135
          %p137 = scmp.lt.s32.totalorder %s136, 5
          %s138 = scalar_select %p137, %s136, 5
          %s139 = smul.u32 16, %s138
          %s140 = smul.u32 %s139, 3
          %p141 = scmp.ne.s32.totalorder 0, %s140
          %s142 = smul.addr %s135, 3
          %s143 = smul.addr %s142, 4
          %s144 = scalar_lea.vmem %s0, %s143
          // Predicated region
          $region29: #{traffic_sign_net.4} parent=27 // pred_check
            %p145 = pneg %p141
          $region30: #{traffic_sign_net.4} parent=27 // pred_check_branch
            %147 = sbr.rel (%p145) target = $region32
          $region31: #{traffic_sign_net.4} parent=27 // pred_region
            // Predicated region
            $region33: #{traffic_sign_net.4} parent=31 // pred_check
              _
            $region34: #{traffic_sign_net.4} parent=31 // pred_check_branch
              %149 = sbr.rel (0) target = $region36
            $region35: #{traffic_sign_net.4} parent=31 // pred_region
              %s150 = scalar_lea.vmem %s144, 8
              %s151 = scalar_lea.vmem %s134, 8 [#allocation2]
              %s152 = sdiv.u32.pop %s138, 5
              %s153 = srem.u32.pop %s138, 5
              // While loop
              $region37: #{traffic_sign_net.4} parent=35 // loop_pre_header
                _
              $region38: #{traffic_sign_net.4} parent=35 // loop_header
                %s155 = sphi 0, %s157
                %p156 = scmp.ge.s32.totalorder %s155, %s152
                %s160 = sphi 0, %s205
                %s161 = sphi %s144, %s208
                %s162 = sphi %s134, %s209
              $region39: #{traffic_sign_net.4} parent=35 // loop_header_branch
                %159 = sbr.rel (%p156) target = $region43
              $region40: #{traffic_sign_net.4} parent=35 // loop_body
                %v163 = vld [vmem:[%s161] sm:$0xff]
                %164 = vst [vmem:[%s162] sm:$0xff] %v163
                %v165 = vld [vmem:[%s161 + $0xc] sm:$0xff]
                %166 = vst [vmem:[%s162 + $0xc] sm:$0xff] %v165
                %v167 = vld [vmem:[%s161 + $0x18] sm:$0xff]
                %168 = vst [vmem:[%s162 + $0x18] sm:$0xff] %v167
                %v169 = vld [vmem:[%s161 + $0x24] sm:$0xff]
                %170 = vst [vmem:[%s162 + $0x24] sm:$0xff] %v169
                %v171 = vld [vmem:[%s161 + $0x30] sm:$0xff]
                %172 = vst [vmem:[%s162 + $0x30] sm:$0xff] %v171
                %v173 = vld [vmem:[%s161 + $0x6c] sm:$0xff]
                %174 = vst [vmem:[%s162 + $0x3c] sm:$0xff] %v173
                %v175 = vld [vmem:[%s161 + $0x78] sm:$0xff]
                %176 = vst [vmem:[%s162 + $0x48] sm:$0xff] %v175
                %v177 = vld [vmem:[%s161 + $0x84] sm:$0xff]
                %178 = vst [vmem:[%s162 + $0x54] sm:$0xff] %v177
                %v179 = vld [vmem:[%s161 + $0x90] sm:$0xff]
                %180 = vst [vmem:[%s162 + $0x60] sm:$0xff] %v179
                %v181 = vld [vmem:[%s161 + $0x9c] sm:$0xff]
                %182 = vst [vmem:[%s162 + $0x6c] sm:$0xff] %v181
                %v183 = vld [vmem:[%s161 + $0xd8] sm:$0xff]
                %184 = vst [vmem:[%s162 + $0x78] sm:$0xff] %v183
                %v185 = vld [vmem:[%s161 + $0xe4] sm:$0xff]
                %186 = vst [vmem:[%s162 + $0x84] sm:$0xff] %v185
                %v187 = vld [vmem:[%s161 + $0xf0] sm:$0xff]
                %188 = vst [vmem:[%s162 + $0x90] sm:$0xff] %v187
                %v189 = vld [vmem:[%s161 + $0xfc] sm:$0xff]
                %190 = vst [vmem:[%s162 + $0x9c] sm:$0xff] %v189
                %v191 = vld [vmem:[%s161 + $0x108] sm:$0xff]
                %192 = vst [vmem:[%s162 + $0xa8] sm:$0xff] %v191
                %v193 = vld [vmem:[%s161 + $0x144] sm:$0xff]
                %194 = vst [vmem:[%s162 + $0xb4] sm:$0xff] %v193
                %v195 = vld [vmem:[%s161 + $0x150] sm:$0xff]
                %196 = vst [vmem:[%s162 + $0xc0] sm:$0xff] %v195
                %v197 = vld [vmem:[%s161 + $0x15c] sm:$0xff]
                %198 = vst [vmem:[%s162 + $0xcc] sm:$0xff] %v197
                %v199 = vld [vmem:[%s161 + $0x168] sm:$0xff]
                %200 = vst [vmem:[%s162 + $0xd8] sm:$0xff] %v199
                %v201 = vld [vmem:[%s161 + $0x174] sm:$0xff]
                %202 = vst [vmem:[%s162 + $0xe4] sm:$0xff] %v201
                %s203 = sadd.s32 1, %s160
                %p204 = scmp.ge.s32.totalorder %s203, %s152
                %s205 = scalar_select %p204, 0, %s203
                %s206 = smul.u32 %s205, 60
                %s207 = smul.u32 %s205, 60
                %s208 = scalar_lea.vmem %s144, %s206
                %s209 = scalar_lea.vmem %s134, %s207 [#allocation2]
              $region41: #{traffic_sign_net.4} parent=35 // loop_footer
                %s157 = sadd.s32 %s155, 1
              $region42: #{traffic_sign_net.4} parent=35 // loop_footer_branch
                %154 = sbr.rel target = $region38
              $region43: #{traffic_sign_net.4} parent=35 // loop_exit
                _
              %s210 = sdiv.u32.pop %s138, 5
              %s211 = srem.u32.pop %s138, 5
              %s212 = smul.u32 %s210, 5
              %s213 = smul.u32 12, %s212
              %s214 = scalar_lea.vmem %s144, %s213
              %s215 = smul.u32 12, %s212
              %s216 = scalar_lea.vmem %s134, %s215 [#allocation2]
              // While loop
              $region44: #{traffic_sign_net.4} parent=35 // loop_pre_header
                _
              $region45: #{traffic_sign_net.4} parent=35 // loop_header
                %s218 = sphi 0, %s220
                %p219 = scmp.ge.s32.totalorder %s218, %s211
                %s223 = sphi 0, %s236
                %s224 = sphi %s214, %s239
                %s225 = sphi %s216, %s240
              $region46: #{traffic_sign_net.4} parent=35 // loop_header_branch
                %222 = sbr.rel (%p219) target = $region50
              $region47: #{traffic_sign_net.4} parent=35 // loop_body
                %v226 = vld [vmem:[%s224] sm:$0xff]
                %227 = vst [vmem:[%s225] sm:$0xff] %v226
                %v228 = vld [vmem:[%s224 + $0x6c] sm:$0xff]
                %229 = vst [vmem:[%s225 + $0x3c] sm:$0xff] %v228
                %v230 = vld [vmem:[%s224 + $0xd8] sm:$0xff]
                %231 = vst [vmem:[%s225 + $0x78] sm:$0xff] %v230
                %v232 = vld [vmem:[%s224 + $0x144] sm:$0xff]
                %233 = vst [vmem:[%s225 + $0xb4] sm:$0xff] %v232
                %s234 = sadd.s32 1, %s223
                %p235 = scmp.ge.s32.totalorder %s234, %s211
                %s236 = scalar_select %p235, 0, %s234
                %s237 = smul.u32 %s236, 12
                %s238 = smul.u32 %s236, 12
                %s239 = scalar_lea.vmem %s214, %s237
                %s240 = scalar_lea.vmem %s216, %s238 [#allocation2]
              $region48: #{traffic_sign_net.4} parent=35 // loop_footer
                %s220 = sadd.s32 %s218, 1
              $region49: #{traffic_sign_net.4} parent=35 // loop_footer_branch
                %217 = sbr.rel target = $region45
              $region50: #{traffic_sign_net.4} parent=35 // loop_exit
                _
              %s242 = ssub.s32 16, 1
              %s243 = sdiv.u32.pop %s138, 5
              %s244 = srem.u32.pop %s138, 5
              // While loop
              $region51: #{traffic_sign_net.4} parent=35 // loop_pre_header
                _
              $region52: #{traffic_sign_net.4} parent=35 // loop_header
                %s246 = sphi 0, %s248
                %p247 = scmp.ge.s32.totalorder %s246, %s243
                %s251 = sphi 0, %s296
                %s252 = sphi %s150, %s299
                %s253 = sphi %s151, %s300
              $region53: #{traffic_sign_net.4} parent=35 // loop_header_branch
                %250 = sbr.rel (%p247) target = $region57
              $region54: #{traffic_sign_net.4} parent=35 // loop_body
                %v254 = vld [vmem:[%s252] sm:%s242]
                %255 = vst [vmem:[%s253] sm:%s242] %v254
                %v256 = vld [vmem:[%s252 + $0xc] sm:%s242]
                %257 = vst [vmem:[%s253 + $0xc] sm:%s242] %v256
                %v258 = vld [vmem:[%s252 + $0x18] sm:%s242]
                %259 = vst [vmem:[%s253 + $0x18] sm:%s242] %v258
                %v260 = vld [vmem:[%s252 + $0x24] sm:%s242]
                %261 = vst [vmem:[%s253 + $0x24] sm:%s242] %v260
                %v262 = vld [vmem:[%s252 + $0x30] sm:%s242]
                %263 = vst [vmem:[%s253 + $0x30] sm:%s242] %v262
                %v264 = vld [vmem:[%s252 + $0x6c] sm:%s242]
                %265 = vst [vmem:[%s253 + $0x3c] sm:%s242] %v264
                %v266 = vld [vmem:[%s252 + $0x78] sm:%s242]
                %267 = vst [vmem:[%s253 + $0x48] sm:%s242] %v266
                %v268 = vld [vmem:[%s252 + $0x84] sm:%s242]
                %269 = vst [vmem:[%s253 + $0x54] sm:%s242] %v268
                %v270 = vld [vmem:[%s252 + $0x90] sm:%s242]
                %271 = vst [vmem:[%s253 + $0x60] sm:%s242] %v270
                %v272 = vld [vmem:[%s252 + $0x9c] sm:%s242]
                %273 = vst [vmem:[%s253 + $0x6c] sm:%s242] %v272
                %v274 = vld [vmem:[%s252 + $0xd8] sm:%s242]
                %275 = vst [vmem:[%s253 + $0x78] sm:%s242] %v274
                %v276 = vld [vmem:[%s252 + $0xe4] sm:%s242]
                %277 = vst [vmem:[%s253 + $0x84] sm:%s242] %v276
                %v278 = vld [vmem:[%s252 + $0xf0] sm:%s242]
                %279 = vst [vmem:[%s253 + $0x90] sm:%s242] %v278
                %v280 = vld [vmem:[%s252 + $0xfc] sm:%s242]
                %281 = vst [vmem:[%s253 + $0x9c] sm:%s242] %v280
                %v282 = vld [vmem:[%s252 + $0x108] sm:%s242]
                %283 = vst [vmem:[%s253 + $0xa8] sm:%s242] %v282
                %v284 = vld [vmem:[%s252 + $0x144] sm:%s242]
                %285 = vst [vmem:[%s253 + $0xb4] sm:%s242] %v284
                %v286 = vld [vmem:[%s252 + $0x150] sm:%s242]
                %287 = vst [vmem:[%s253 + $0xc0] sm:%s242] %v286
                %v288 = vld [vmem:[%s252 + $0x15c] sm:%s242]
                %289 = vst [vmem:[%s253 + $0xcc] sm:%s242] %v288
                %v290 = vld [vmem:[%s252 + $0x168] sm:%s242]
                %291 = vst [vmem:[%s253 + $0xd8] sm:%s242] %v290
                %v292 = vld [vmem:[%s252 + $0x174] sm:%s242]
                %293 = vst [vmem:[%s253 + $0xe4] sm:%s242] %v292
                %s294 = sadd.s32 1, %s251
                %p295 = scmp.ge.s32.totalorder %s294, %s243
                %s296 = scalar_select %p295, 0, %s294
                %s297 = smul.u32 %s296, 60
                %s298 = smul.u32 %s296, 60
                %s299 = scalar_lea.vmem %s150, %s297
                %s300 = scalar_lea.vmem %s151, %s298 [#allocation2]
              $region55: #{traffic_sign_net.4} parent=35 // loop_footer
                %s248 = sadd.s32 %s246, 1
              $region56: #{traffic_sign_net.4} parent=35 // loop_footer_branch
                %245 = sbr.rel target = $region52
              $region57: #{traffic_sign_net.4} parent=35 // loop_exit
                _
              %s301 = sdiv.u32.pop %s138, 5
              %s302 = srem.u32.pop %s138, 5
              %s303 = smul.u32 %s301, 5
              %s304 = smul.u32 12, %s303
              %s305 = scalar_lea.vmem %s150, %s304
              %s306 = smul.u32 12, %s303
              %s307 = scalar_lea.vmem %s151, %s306 [#allocation2]
              // While loop
              $region58: #{traffic_sign_net.4} parent=35 // loop_pre_header
                _
              $region59: #{traffic_sign_net.4} parent=35 // loop_header
                %s309 = sphi 0, %s311
                %p310 = scmp.ge.s32.totalorder %s309, %s302
                %s314 = sphi 0, %s327
                %s315 = sphi %s305, %s330
                %s316 = sphi %s307, %s331
              $region60: #{traffic_sign_net.4} parent=35 // loop_header_branch
                %313 = sbr.rel (%p310) target = $region64
              $region61: #{traffic_sign_net.4} parent=35 // loop_body
                %v317 = vld [vmem:[%s315] sm:%s242]
                %318 = vst [vmem:[%s316] sm:%s242] %v317
                %v319 = vld [vmem:[%s315 + $0x6c] sm:%s242]
                %320 = vst [vmem:[%s316 + $0x3c] sm:%s242] %v319
                %v321 = vld [vmem:[%s315 + $0xd8] sm:%s242]
                %322 = vst [vmem:[%s316 + $0x78] sm:%s242] %v321
                %v323 = vld [vmem:[%s315 + $0x144] sm:%s242]
                %324 = vst [vmem:[%s316 + $0xb4] sm:%s242] %v323
                %s325 = sadd.s32 1, %s314
                %p326 = scmp.ge.s32.totalorder %s325, %s302
                %s327 = scalar_select %p326, 0, %s325
                %s328 = smul.u32 %s327, 12
                %s329 = smul.u32 %s327, 12
                %s330 = scalar_lea.vmem %s305, %s328
                %s331 = scalar_lea.vmem %s307, %s329 [#allocation2]
              $region62: #{traffic_sign_net.4} parent=35 // loop_footer
                %s311 = sadd.s32 %s309, 1
              $region63: #{traffic_sign_net.4} parent=35 // loop_footer_branch
                %308 = sbr.rel target = $region59
              $region64: #{traffic_sign_net.4} parent=35 // loop_exit
                _
            $region36: #{traffic_sign_net.4} parent=31 // pred_fallthru
              _
          $region32: #{traffic_sign_net.4} parent=27 // pred_fallthru
            _
          %332 = vnop
        $region28: #{traffic_sign_net.4} parent=23 // pred_fallthru
          _
      $region24: #{traffic_sign_net.4} parent=5 // pred_fallthru
        _
      %p333 = scmp.le.s32.totalorder 1, %s9
      %p334 = scmp.lt.s32.totalorder %s9, 3
      %p335 = pnand %p333, %p334
      %p336 = pneg %p335
      // Predicated region
      $region65: #{traffic_sign_net.4} parent=5 // pred_check
        _
      $region66: #{traffic_sign_net.4} parent=5 // pred_check_branch
        %338 = sbr.rel (%p335) target = $region68
      $region67: #{traffic_sign_net.4} parent=5 // pred_region
        %s339 = ssub.s32 %s9, 1
        %s340 = sand.u32 %s22, 1
        %s341 = sand.u32 %s22, 1
        %s342 = smul.addr %s341, 240
        %s343 = scalar_lea.vmem [#allocation2], %s342
        // Predicated region
        $region69: #{traffic_sign_net.4} parent=67 // pred_check
          %p344 = pneg %p35
        $region70: #{traffic_sign_net.4} parent=67 // pred_check_branch
          %346 = sbr.rel (%p344) target = $region72
        $region71: #{traffic_sign_net.4} parent=67 // pred_region
          _
        $region72: #{traffic_sign_net.4} parent=67 // pred_fallthru
          _
        %s347 = sand.u32 %s22, 1
        %s348 = sand.u32 %s22, 1
        %s349 = smul.addr %s348, 240
        %s350 = scalar_lea.vmem [#allocation2], %s349
        %p351 = pneg %p35
        %p352 = pneg %p32
        %p353 = pneg %p56
        %p354 = pneg %p53
        %p355 = pneg %p77
        %p356 = pneg %p74
        %p357 = pneg %p103
        %p358 = pneg %p100
        %s359 = sand.u32 %s90, 1
        %s360 = sand.u32 %s90, 1
        %s361 = smul.addr %s360, 20
        %s362 = scalar_lea.vmem [#allocation3], %s361
        %s363 = smul.u32 5, %s14
        %s364 = ssub.s32 9, %s363
        %p365 = scmp.lt.s32.totalorder %s364, 5
        %s366 = scalar_select %p365, %s364, 5
        %s367 = smul.u32 16, %s366
        %s368 = smul.u32 %s367, 3
        %s369 = smul.u32 5, %s14
        %s370 = ssub.s32 9, %s369
        %p371 = scmp.lt.s32.totalorder %s370, 5
        %s372 = scalar_select %p371, %s370, 5
        %s373 = smul.u32 4, %s372
        %v375 = vld [vmem:[%s343] sm:$0xff]
        %v376 = vld [vmem:[%s343 + $0x8] sm:$0xf]
        %v377 = vld [vmem:[%s343 + $0xc] sm:$0xff]
        %v378 = vld [vmem:[%s343 + $0x14] sm:$0xf]
        %v379 = vld [vmem:[%s343 + $0x18] sm:$0xff]
        %v380 = vld [vmem:[%s343 + $0x20] sm:$0xf]
        %v381 = vld [vmem:[%s343 + $0x24] sm:$0xff]
        %v382 = vld [vmem:[%s343 + $0x2c] sm:$0xf]
        %v383 = vld [vmem:[%s343 + $0x30] sm:$0xff]
        %v384 = vld [vmem:[%s343 + $0x38] sm:$0xf]
        %v385 = vld [vmem:[%s343 + $0x3c] sm:$0xff]
        %v386 = vld [vmem:[%s343 + $0x44] sm:$0xf]
        %v387 = vld [vmem:[%s343 + $0x48] sm:$0xff]
        %v388 = vld [vmem:[%s343 + $0x50] sm:$0xf]
        %v389 = vld [vmem:[%s343 + $0x54] sm:$0xff]
        %v390 = vld [vmem:[%s343 + $0x5c] sm:$0xf]
        %v391 = vld [vmem:[%s343 + $0x60] sm:$0xff]
        %v392 = vld [vmem:[%s343 + $0x68] sm:$0xf]
        %v393 = vld [vmem:[%s343 + $0x6c] sm:$0xff]
        %v394 = vld [vmem:[%s343 + $0x74] sm:$0xf]
        %v395 = vld [vmem:[%s343 + $0x78] sm:$0xff]
        %v396 = vld [vmem:[%s343 + $0x80] sm:$0xf]
        %v397 = vld [vmem:[%s343 + $0x84] sm:$0xff]
        %v398 = vld [vmem:[%s343 + $0x8c] sm:$0xf]
        %v399 = vld [vmem:[%s343 + $0x90] sm:$0xff]
        %v400 = vld [vmem:[%s343 + $0x98] sm:$0xf]
        %v401 = vld [vmem:[%s343 + $0x9c] sm:$0xff]
        %v402 = vld [vmem:[%s343 + $0xa4] sm:$0xf]
        %v403 = vld [vmem:[%s343 + $0xa8] sm:$0xff]
        %v404 = vld [vmem:[%s343 + $0xb0] sm:$0xf]
        %v405 = vld [vmem:[%s343 + $0xb4] sm:$0xff]
        %v406 = vld [vmem:[%s343 + $0xbc] sm:$0xf]
        %v407 = vld [vmem:[%s343 + $0xc0] sm:$0xff]
        %v408 = vld [vmem:[%s343 + $0xc8] sm:$0xf]
        %v409 = vld [vmem:[%s343 + $0xcc] sm:$0xff]
        %v410 = vld [vmem:[%s343 + $0xd4] sm:$0xf]
        %v411 = vld [vmem:[%s343 + $0xd8] sm:$0xff]
        %v412 = vld [vmem:[%s343 + $0xe0] sm:$0xf]
        %v413 = vld [vmem:[%s343 + $0xe4] sm:$0xff]
        %v414 = vld [vmem:[%s343 + $0xec] sm:$0xf]
        %v415 = vld [vmem:[%s1] sm:$0xf]
        %v416 = vld [vmem:[%s1 + $0x4] sm:$0xf]
        %v417 = vld [vmem:[%s1 + $0x8] sm:$0xf]
        %v418 = vld [vmem:[%s1 + $0xc] sm:$0xf]
        %v419 = vld [vmem:[%s1 + $0x10] sm:$0xf]
        %v420 = vld [vmem:[%s1 + $0x14] sm:$0xf]
        %v421 = vld [vmem:[%s1 + $0x18] sm:$0xf]
        %v422 = vld [vmem:[%s1 + $0x1c] sm:$0xf]
        %v423 = vld [vmem:[%s1 + $0x20] sm:$0xf]
        %v424 = vld [vmem:[%s1 + $0x24] sm:$0xf]
        %v425 = vld [vmem:[%s1 + $0x28] sm:$0xf]
        %v426 = vld [vmem:[%s1 + $0x2c] sm:$0xf]
        %v427 = vld [vmem:[%s1 + $0x30] sm:$0xf]
        %v428 = vld [vmem:[%s1 + $0x34] sm:$0xf]
        %v429 = vld [vmem:[%s1 + $0x38] sm:$0xf]
        %v430 = vld [vmem:[%s1 + $0x3c] sm:$0xf]
        %v431 = vld [vmem:[%s1 + $0x40] sm:$0xf]
        %v432 = vld [vmem:[%s1 + $0x44] sm:$0xf]
        %v433 = vld [vmem:[%s1 + $0x48] sm:$0xf]
        %v434 = vld [vmem:[%s1 + $0x4c] sm:$0xf]
        %v435 = vld [vmem:[%s1 + $0x50] sm:$0xf]
        %v436 = vld [vmem:[%s1 + $0x54] sm:$0xf]
        %v437 = vld [vmem:[%s1 + $0x58] sm:$0xf]
        %v438 = vld [vmem:[%s1 + $0x5c] sm:$0xf]
        %v439 = vld [vmem:[%s1 + $0x60] sm:$0xf]
        %v440 = vld [vmem:[%s1 + $0x64] sm:$0xf]
        %v441 = vld [vmem:[%s1 + $0x68] sm:$0xf]
        %v442 = vld [vmem:[%s1 + $0x6c] sm:$0xf]
        %v443 = vld [vmem:[%s1 + $0x70] sm:$0xf]
        %v444 = vld [vmem:[%s1 + $0x74] sm:$0xf]
        %v445 = vld [vmem:[%s1 + $0x78] sm:$0xf]
        %v446 = vld [vmem:[%s1 + $0x7c] sm:$0xf]
        %v447 = vld [vmem:[%s1 + $0x80] sm:$0xf]
        %v448 = vld [vmem:[%s1 + $0x84] sm:$0xf]
        %v449 = vld [vmem:[%s1 + $0x88] sm:$0xf]
        %v450 = vld [vmem:[%s1 + $0x8c] sm:$0xf]
        %v491 = vunpack.c.l.b16 %v375
        %v492 = vunpack.c.h.b16 %v375
        %v493 = vunpack.c.l.b16 %v376
        %v494 = vunpack.c.l.b16 %v377
        %v495 = vunpack.c.h.b16 %v377
        %v496 = vunpack.c.l.b16 %v378
        %v497 = vunpack.c.l.b16 %v379
        %v498 = vunpack.c.h.b16 %v379
        %v499 = vunpack.c.l.b16 %v380
        %v500 = vunpack.c.l.b16 %v381
        %v501 = vunpack.c.h.b16 %v381
        %v502 = vunpack.c.l.b16 %v382
        %v503 = vunpack.c.l.b16 %v383
        %v504 = vunpack.c.h.b16 %v383
        %v505 = vunpack.c.l.b16 %v384
        %v506 = vunpack.c.l.b16 %v385
        %v507 = vunpack.c.h.b16 %v385
        %v508 = vunpack.c.l.b16 %v386
        %v509 = vunpack.c.l.b16 %v387
        %v510 = vunpack.c.h.b16 %v387
        %v511 = vunpack.c.l.b16 %v388
        %v512 = vunpack.c.l.b16 %v389
        %v513 = vunpack.c.h.b16 %v389
        %v514 = vunpack.c.l.b16 %v390
        %v515 = vunpack.c.l.b16 %v391
        %v516 = vunpack.c.h.b16 %v391
        %v517 = vunpack.c.l.b16 %v392
        %v518 = vunpack.c.l.b16 %v393
        %v519 = vunpack.c.h.b16 %v393
        %v520 = vunpack.c.l.b16 %v394
        %v521 = vunpack.c.l.b16 %v395
        %v522 = vunpack.c.h.b16 %v395
        %v523 = vunpack.c.l.b16 %v396
        %v524 = vunpack.c.l.b16 %v397
        %v525 = vunpack.c.h.b16 %v397
        %v526 = vunpack.c.l.b16 %v398
        %v527 = vunpack.c.l.b16 %v399
        %v528 = vunpack.c.h.b16 %v399
        %v529 = vunpack.c.l.b16 %v400
        %v530 = vunpack.c.l.b16 %v401
        %v531 = vunpack.c.h.b16 %v401
        %v532 = vunpack.c.l.b16 %v402
        %v533 = vunpack.c.l.b16 %v403
        %v534 = vunpack.c.h.b16 %v403
        %v535 = vunpack.c.l.b16 %v404
        %v536 = vunpack.c.l.b16 %v405
        %v537 = vunpack.c.h.b16 %v405
        %v538 = vunpack.c.l.b16 %v406
        %v539 = vunpack.c.l.b16 %v407
        %v540 = vunpack.c.h.b16 %v407
        %v541 = vunpack.c.l.b16 %v408
        %v542 = vunpack.c.l.b16 %v409
        %v543 = vunpack.c.h.b16 %v409
        %v544 = vunpack.c.l.b16 %v410
        %v545 = vunpack.c.l.b16 %v411
        %v546 = vunpack.c.h.b16 %v411
        %v547 = vunpack.c.l.b16 %v412
        %v548 = vunpack.c.l.b16 %v413
        %v549 = vunpack.c.h.b16 %v413
        %v550 = vunpack.c.l.b16 %v414
        %v551 = vpack.c.b16 %v494, %v491
        %v552 = vpack.c.b16 %v495, %v492
        %v553 = vpack.c.b16 %v496, %v493
        %v554 = vpack.c.b16 %v500, %v497
        %v555 = vpack.c.b16 %v501, %v498
        %v556 = vpack.c.b16 %v502, %v499
        %v557 = vpack.c.b16 %v506, %v503
        %v558 = vpack.c.b16 %v507, %v504
        %v559 = vpack.c.b16 %v508, %v505
        %v560 = vpack.c.b16 %v512, %v509
        %v561 = vpack.c.b16 %v513, %v510
        %v562 = vpack.c.b16 %v514, %v511
        %v563 = vpack.c.b16 %v518, %v515
        %v564 = vpack.c.b16 %v519, %v516
        %v565 = vpack.c.b16 %v520, %v517
        %v566 = vpack.c.b16 %v524, %v521
        %v567 = vpack.c.b16 %v525, %v522
        %v568 = vpack.c.b16 %v526, %v523
        %v569 = vpack.c.b16 %v530, %v527
        %v570 = vpack.c.b16 %v531, %v528
        %v571 = vpack.c.b16 %v532, %v529
        %v572 = vpack.c.b16 %v536, %v533
        %v573 = vpack.c.b16 %v537, %v534
        %v574 = vpack.c.b16 %v538, %v535
        %v575 = vpack.c.b16 %v542, %v539
        %v576 = vpack.c.b16 %v543, %v540
        %v577 = vpack.c.b16 %v544, %v541
        %v578 = vpack.c.b16 %v548, %v545
        %v579 = vpack.c.b16 %v549, %v546
        %v580 = vpack.c.b16 %v550, %v547
        %v637 = vunpack.c.l.b16 %v415
        %v638 = vunpack.c.l.b16 %v416
        %v639 = vunpack.c.l.b16 %v417
        %v640 = vunpack.c.l.b16 %v418
        %v641 = vunpack.c.l.b16 %v419
        %v642 = vunpack.c.l.b16 %v420
        %v643 = vunpack.c.l.b16 %v421
        %v644 = vunpack.c.l.b16 %v422
        %v645 = vunpack.c.l.b16 %v423
        %v646 = vunpack.c.l.b16 %v424
        %v647 = vunpack.c.l.b16 %v425
        %v648 = vunpack.c.l.b16 %v426
        %v649 = vunpack.c.l.b16 %v427
        %v650 = vunpack.c.l.b16 %v428
        %v651 = vunpack.c.l.b16 %v429
        %v652 = vunpack.c.l.b16 %v430
        %v653 = vunpack.c.l.b16 %v431
        %v654 = vunpack.c.l.b16 %v432
        %v655 = vunpack.c.l.b16 %v433
        %v656 = vunpack.c.l.b16 %v434
        %v657 = vunpack.c.l.b16 %v435
        %v658 = vunpack.c.l.b16 %v436
        %v659 = vunpack.c.l.b16 %v437
        %v660 = vunpack.c.l.b16 %v438
        %v661 = vunpack.c.l.b16 %v439
        %v662 = vunpack.c.l.b16 %v440
        %v663 = vunpack.c.l.b16 %v441
        %v664 = vunpack.c.l.b16 %v442
        %v665 = vunpack.c.l.b16 %v443
        %v666 = vunpack.c.l.b16 %v444
        %v667 = vunpack.c.l.b16 %v445
        %v668 = vunpack.c.l.b16 %v446
        %v669 = vunpack.c.l.b16 %v447
        %v670 = vunpack.c.l.b16 %v448
        %v671 = vunpack.c.l.b16 %v449
        %v672 = vunpack.c.l.b16 %v450
        %v673 = vpack.c.b16 %v638, %v637
        %v674 = vpack.c.b16 %v640, %v639
        %v675 = vpack.c.b16 %v642, %v641
        %v676 = vpack.c.b16 %v644, %v643
        %v677 = vpack.c.b16 %v646, %v645
        %v678 = vpack.c.b16 %v648, %v647
        %v679 = vpack.c.b16 %v650, %v649
        %v680 = vpack.c.b16 %v652, %v651
        %v681 = vpack.c.b16 %v654, %v653
        %v682 = vpack.c.b16 %v656, %v655
        %v683 = vpack.c.b16 %v658, %v657
        %v684 = vpack.c.b16 %v660, %v659
        %v685 = vpack.c.b16 %v662, %v661
        %v686 = vpack.c.b16 %v664, %v663
        %v687 = vpack.c.b16 %v666, %v665
        %v688 = vpack.c.b16 %v668, %v667
        %v689 = vpack.c.b16 %v670, %v669
        %v690 = vpack.c.b16 %v672, %v671
        %vm709 = vcmask 261120
        %v711 = vsel %vm709, %v553, 0
        %v714 = vsel %vm709, %v556, 0
        %v717 = vsel %vm709, %v559, 0
        %v720 = vsel %vm709, %v562, 0
        %v723 = vsel %vm709, %v565, 0
        %v726 = vsel %vm709, %v568, 0
        %v729 = vsel %vm709, %v571, 0
        %v732 = vsel %vm709, %v574, 0
        %v735 = vsel %vm709, %v577, 0
        %v738 = vsel %vm709, %v580, 0
        %740 = vmatpush.bf16.msra.mxu0 %v680
        %741 = vmatpush.bf16.msra.mxu0 %v679
        %742 = vmatpush.bf16.msra.mxu0 %v678
        %743 = vmatpush.bf16.msra.mxu0 %v677
        %744 = vmatpush.bf16.msra.mxu0 %v676
        %745 = vmatpush.bf16.msra.mxu0 %v675
        %746 = vmatpush.bf16.msra.mxu0 %v674
        %747 = vmatpush.bf16.msra.mxu0 %v673
        %748 = vmatmul.bf16.gmra.mxu0 %v551
        %v749 = vpop.f32.mrf.mxu0
        %v750 = vadd.f32 0.0, %v749
        %v751 = vpop.f32.mrf.mxu0
        %v752 = vadd.f32 0.0, %v751
        %753 = vmatmul.bf16.gmra.mxu0 %v554
        %v754 = vpop.f32.mrf.mxu0
        %v755 = vadd.f32 0.0, %v754
        %v756 = vpop.f32.mrf.mxu0
        %v757 = vadd.f32 0.0, %v756
        %758 = vmatmul.bf16.gmra.mxu0 %v557
        %v759 = vpop.f32.mrf.mxu0
        %v760 = vadd.f32 0.0, %v759
        %v761 = vpop.f32.mrf.mxu0
        %v762 = vadd.f32 0.0, %v761
        %763 = vmatmul.bf16.gmra.mxu0 %v560
        %v764 = vpop.f32.mrf.mxu0
        %v765 = vadd.f32 0.0, %v764
        %v766 = vpop.f32.mrf.mxu0
        %v767 = vadd.f32 0.0, %v766
        %768 = vmatmul.bf16.gmra.mxu0 %v563
        %v769 = vpop.f32.mrf.mxu0
        %v770 = vadd.f32 0.0, %v769
        %v771 = vpop.f32.mrf.mxu0
        %v772 = vadd.f32 0.0, %v771
        %773 = vmatmul.bf16.gmra.mxu0 %v566
        %v774 = vpop.f32.mrf.mxu0
        %v775 = vadd.f32 0.0, %v774
        %v776 = vpop.f32.mrf.mxu0
        %v777 = vadd.f32 0.0, %v776
        %778 = vmatmul.bf16.gmra.mxu0 %v569
        %v779 = vpop.f32.mrf.mxu0
        %v780 = vadd.f32 0.0, %v779
        %v781 = vpop.f32.mrf.mxu0
        %v782 = vadd.f32 0.0, %v781
        %783 = vmatmul.bf16.gmra.mxu0 %v572
        %v784 = vpop.f32.mrf.mxu0
        %v785 = vadd.f32 0.0, %v784
        %v786 = vpop.f32.mrf.mxu0
        %v787 = vadd.f32 0.0, %v786
        %788 = vmatmul.bf16.gmra.mxu0 %v575
        %v789 = vpop.f32.mrf.mxu0
        %v790 = vadd.f32 0.0, %v789
        %v791 = vpop.f32.mrf.mxu0
        %v792 = vadd.f32 0.0, %v791
        %793 = vmatmul.bf16.gmra.mxu0 %v578
        %v794 = vpop.f32.mrf.mxu0
        %v795 = vadd.f32 0.0, %v794
        %v796 = vpop.f32.mrf.mxu0
        %v797 = vadd.f32 0.0, %v796
        %798 = vdwg.mxu0
        %799 = vmatpush.bf16.msra.mxu0 %v688
        %800 = vmatpush.bf16.msra.mxu0 %v687
        %801 = vmatpush.bf16.msra.mxu0 %v686
        %802 = vmatpush.bf16.msra.mxu0 %v685
        %803 = vmatpush.bf16.msra.mxu0 %v684
        %804 = vmatpush.bf16.msra.mxu0 %v683
        %805 = vmatpush.bf16.msra.mxu0 %v682
        %806 = vmatpush.bf16.msra.mxu0 %v681
        %807 = vmatmul.bf16.gmra.mxu0 %v552
        %v808 = vpop.f32.mrf.mxu0
        %v809 = vadd.f32 %v750, %v808
        %v810 = vpop.f32.mrf.mxu0
        %v811 = vadd.f32 %v752, %v810
        %812 = vmatmul.bf16.gmra.mxu0 %v555
        %v813 = vpop.f32.mrf.mxu0
        %v814 = vadd.f32 %v755, %v813
        %v815 = vpop.f32.mrf.mxu0
        %v816 = vadd.f32 %v757, %v815
        %817 = vmatmul.bf16.gmra.mxu0 %v558
        %v818 = vpop.f32.mrf.mxu0
        %v819 = vadd.f32 %v760, %v818
        %v820 = vpop.f32.mrf.mxu0
        %v821 = vadd.f32 %v762, %v820
        %822 = vmatmul.bf16.gmra.mxu0 %v561
        %v823 = vpop.f32.mrf.mxu0
        %v824 = vadd.f32 %v765, %v823
        %v825 = vpop.f32.mrf.mxu0
        %v826 = vadd.f32 %v767, %v825
        %827 = vmatmul.bf16.gmra.mxu0 %v564
        %v828 = vpop.f32.mrf.mxu0
        %v829 = vadd.f32 %v770, %v828
        %v830 = vpop.f32.mrf.mxu0
        %v831 = vadd.f32 %v772, %v830
        %832 = vmatmul.bf16.gmra.mxu0 %v567
        %v833 = vpop.f32.mrf.mxu0
        %v834 = vadd.f32 %v775, %v833
        %v835 = vpop.f32.mrf.mxu0
        %v836 = vadd.f32 %v777, %v835
        %837 = vmatmul.bf16.gmra.mxu0 %v570
        %v838 = vpop.f32.mrf.mxu0
        %v839 = vadd.f32 %v780, %v838
        %v840 = vpop.f32.mrf.mxu0
        %v841 = vadd.f32 %v782, %v840
        %842 = vmatmul.bf16.gmra.mxu0 %v573
        %v843 = vpop.f32.mrf.mxu0
        %v844 = vadd.f32 %v785, %v843
        %v845 = vpop.f32.mrf.mxu0
        %v846 = vadd.f32 %v787, %v845
        %847 = vmatmul.bf16.gmra.mxu0 %v576
        %v848 = vpop.f32.mrf.mxu0
        %v849 = vadd.f32 %v790, %v848
        %v850 = vpop.f32.mrf.mxu0
        %v851 = vadd.f32 %v792, %v850
        %852 = vmatmul.bf16.gmra.mxu0 %v579
        %v853 = vpop.f32.mrf.mxu0
        %v854 = vadd.f32 %v795, %v853
        %v855 = vpop.f32.mrf.mxu0
        %v856 = vadd.f32 %v797, %v855
        %857 = vdwg.mxu0
        %858 = vmatpush.bf16.msra.mxu0 0
        %859 = vmatpush.bf16.msra.mxu0 0
        %860 = vmatpush.bf16.msra.mxu0 0
        %861 = vmatpush.bf16.msra.mxu0 0
        %862 = vmatpush.bf16.msra.mxu0 0
        %863 = vmatpush.bf16.msra.mxu0 0
        %864 = vmatpush.bf16.msra.mxu0 %v690
        %865 = vmatpush.bf16.msra.mxu0 %v689
        %866 = vmatmul.bf16.gmra.mxu0 %v711
        %v867 = vpop.f32.mrf.mxu0
        %v868 = vadd.f32 %v809, %v867
        %v869 = vpop.f32.mrf.mxu0
        %v870 = vadd.f32 %v811, %v869
        %871 = vmatmul.bf16.gmra.mxu0 %v714
        %v872 = vpop.f32.mrf.mxu0
        %v873 = vadd.f32 %v814, %v872
        %v874 = vpop.f32.mrf.mxu0
        %v875 = vadd.f32 %v816, %v874
        %876 = vmatmul.bf16.gmra.mxu0 %v717
        %v877 = vpop.f32.mrf.mxu0
        %v878 = vadd.f32 %v819, %v877
        %v879 = vpop.f32.mrf.mxu0
        %v880 = vadd.f32 %v821, %v879
        %881 = vmatmul.bf16.gmra.mxu0 %v720
        %v882 = vpop.f32.mrf.mxu0
        %v883 = vadd.f32 %v824, %v882
        %v884 = vpop.f32.mrf.mxu0
        %v885 = vadd.f32 %v826, %v884
        %886 = vmatmul.bf16.gmra.mxu0 %v723
        %v887 = vpop.f32.mrf.mxu0
        %v888 = vadd.f32 %v829, %v887
        %v889 = vpop.f32.mrf.mxu0
        %v890 = vadd.f32 %v831, %v889
        %891 = vmatmul.bf16.gmra.mxu0 %v726
        %v892 = vpop.f32.mrf.mxu0
        %v893 = vadd.f32 %v834, %v892
        %v894 = vpop.f32.mrf.mxu0
        %v895 = vadd.f32 %v836, %v894
        %896 = vmatmul.bf16.gmra.mxu0 %v729
        %v897 = vpop.f32.mrf.mxu0
        %v898 = vadd.f32 %v839, %v897
        %v899 = vpop.f32.mrf.mxu0
        %v900 = vadd.f32 %v841, %v899
        %901 = vmatmul.bf16.gmra.mxu0 %v732
        %v902 = vpop.f32.mrf.mxu0
        %v903 = vadd.f32 %v844, %v902
        %v904 = vpop.f32.mrf.mxu0
        %v905 = vadd.f32 %v846, %v904
        %906 = vmatmul.bf16.gmra.mxu0 %v735
        %v907 = vpop.f32.mrf.mxu0
        %v908 = vadd.f32 %v849, %v907
        %v909 = vpop.f32.mrf.mxu0
        %v910 = vadd.f32 %v851, %v909
        %911 = vmatmul.bf16.gmra.mxu0 %v738
        %v912 = vpop.f32.mrf.mxu0
        %v913 = vadd.f32 %v854, %v912
        %v914 = vpop.f32.mrf.mxu0
        %v915 = vadd.f32 %v856, %v914
        %916 = vdwg.mxu0
        %vm917 = vcmask 523264
        %v918 = vsel %vm917, %v868, -inf
        %v919 = vsel %vm917, %v880, -inf
        %v920 = vmax.f32 %v918, %v919
        %v921 = vsel %vm917, %v893, -inf
        %v922 = vmax.f32 %v920, %v921
        %v923 = vsel %vm917, %v905, -inf
        %v924 = vmax.f32 %v922, %v923
        %v925 = vsel %vm917, %v870, -inf
        %v926 = vsel %vm917, %v883, -inf
        %v927 = vmax.f32 %v925, %v926
        %v928 = vsel %vm917, %v895, -inf
        %v929 = vmax.f32 %v927, %v928
        %v930 = vsel %vm917, %v908, -inf
        %v931 = vmax.f32 %v929, %v930
        %v932 = vsel %vm917, %v873, -inf
        %v933 = vsel %vm917, %v885, -inf
        %v934 = vmax.f32 %v932, %v933
        %v935 = vsel %vm917, %v898, -inf
        %v936 = vmax.f32 %v934, %v935
        %v937 = vsel %vm917, %v910, -inf
        %v938 = vmax.f32 %v936, %v937
        %v939 = vsel %vm917, %v875, -inf
        %v940 = vsel %vm917, %v888, -inf
        %v941 = vmax.f32 %v939, %v940
        %v942 = vsel %vm917, %v900, -inf
        %v943 = vmax.f32 %v941, %v942
        %v944 = vsel %vm917, %v913, -inf
        %v945 = vmax.f32 %v943, %v944
        %v946 = vsel %vm917, %v878, -inf
        %v947 = vsel %vm917, %v890, -inf
        %v948 = vmax.f32 %v946, %v947
        %v949 = vsel %vm917, %v903, -inf
        %v950 = vmax.f32 %v948, %v949
        %v951 = vsel %vm917, %v915, -inf
        %v952 = vmax.f32 %v950, %v951
        %v953 = vld [vmem:[%s2] sm:$0x1]
        %v955 = vperm.slane %v953, 0
        %v957 = vadd.f32 %v924, %v955
        %v958 = vadd.f32 %v931, %v955
        %v959 = vadd.f32 %v938, %v955
        %v960 = vadd.f32 %v945, %v955
        %v961 = vadd.f32 %v952, %v955
        %v962 = vmax.f32 %v957, 0.0
        %v963 = vmax.f32 %v958, 0.0
        %v964 = vmax.f32 %v959, 0.0
        %v965 = vmax.f32 %v960, 0.0
        %v966 = vmax.f32 %v961, 0.0
        %v967 = vpack.c.bf16 %v962, %v962
        %v968 = vpack.c.bf16 %v963, %v963
        %v969 = vpack.c.bf16 %v964, %v964
        %v970 = vpack.c.bf16 %v965, %v965
        %v971 = vpack.c.bf16 %v966, %v966
        %vm972 = vcmask 519168
        %973 = vst.msk [vmem:[%s362] sm:$0xf] %vm972, %v967
        %974 = vst.msk [vmem:[%s362 + $0x4] sm:$0xf] %vm972, %v968
        %975 = vst.msk [vmem:[%s362 + $0x8] sm:$0xf] %vm972, %v969
        %976 = vst.msk [vmem:[%s362 + $0xc] sm:$0xf] %vm972, %v970
        %977 = vst.msk [vmem:[%s362 + $0x10] sm:$0xf] %vm972, %v971
        %s978 = sand.u32 %s90, 1
        %s979 = sand.u32 %s90, 1
        %s980 = smul.addr %s979, 20
        %s981 = scalar_lea.vmem [#allocation3], %s980
        // Predicated region
        $region73: #{traffic_sign_net.4} parent=67 // pred_check
          %p982 = pneg %p100
        $region74: #{traffic_sign_net.4} parent=67 // pred_check_branch
          %984 = sbr.rel (%p982) target = $region76
        $region75: #{traffic_sign_net.4} parent=67 // pred_region
          %s985 = smul.u32 5, %s14
          %s986 = ssub.s32 9, %s985
          %p987 = scmp.lt.s32.totalorder %s986, 5
          %s988 = scalar_select %p987, %s986, 5
          %s989 = smul.u32 4, %s988
          %p990 = scmp.ne.s32.totalorder 0, %s989
          %s991 = smul.addr %s985, 4
          %s992 = scalar_lea.vmem %s3, %s991
          // Predicated region
          $region77: #{traffic_sign_net.4} parent=75 // pred_check
            %p993 = pneg %p990
          $region78: #{traffic_sign_net.4} parent=75 // pred_check_branch
            %995 = sbr.rel (%p993) target = $region80
          $region79: #{traffic_sign_net.4} parent=75 // pred_region
            // Predicated region
            $region81: #{traffic_sign_net.4} parent=79 // pred_check
              _
            $region82: #{traffic_sign_net.4} parent=79 // pred_check_branch
              %997 = sbr.rel target = $region84
            $region83: #{traffic_sign_net.4} parent=79 // pred_region
              // Predicated region
              $region103: #{traffic_sign_net.4} parent=83 // pred_check
                _
              $region104: #{traffic_sign_net.4} parent=83 // pred_check_branch
                %1056 = sbr.rel (0) target = $region106
              $region105: #{traffic_sign_net.4} parent=83 // pred_region
                %s1058 = ssub.s32 16, 1
                %s1059 = sdiv.u32.pop %s988, 5
                %s1060 = srem.u32.pop %s988, 5
                // While loop
                $region107: #{traffic_sign_net.4} parent=105 // loop_pre_header
                  _
                $region108: #{traffic_sign_net.4} parent=105 // loop_header
                  %s1062 = sphi 0, %s1064
                  %p1063 = scmp.ge.s32.totalorder %s1062, %s1059
                  %s1067 = sphi 0, %s1082
                  %s1068 = sphi %s981, %s1085
                  %s1069 = sphi %s992, %s1086
                $region109: #{traffic_sign_net.4} parent=105 // loop_header_branch
                  %1066 = sbr.rel (%p1063) target = $region113
                $region110: #{traffic_sign_net.4} parent=105 // loop_body
                  %v1070 = vld [vmem:[%s1068] sm:%s1058]
                  %1071 = vst [vmem:[%s1069] sm:%s1058] %v1070
                  %v1072 = vld [vmem:[%s1068 + $0x4] sm:%s1058]
                  %1073 = vst [vmem:[%s1069 + $0x4] sm:%s1058] %v1072
                  %v1074 = vld [vmem:[%s1068 + $0x8] sm:%s1058]
                  %1075 = vst [vmem:[%s1069 + $0x8] sm:%s1058] %v1074
                  %v1076 = vld [vmem:[%s1068 + $0xc] sm:%s1058]
                  %1077 = vst [vmem:[%s1069 + $0xc] sm:%s1058] %v1076
                  %v1078 = vld [vmem:[%s1068 + $0x10] sm:%s1058]
                  %1079 = vst [vmem:[%s1069 + $0x10] sm:%s1058] %v1078
                  %s1080 = sadd.s32 1, %s1067
                  %p1081 = scmp.ge.s32.totalorder %s1080, %s1059
                  %s1082 = scalar_select %p1081, 0, %s1080
                  %s1083 = smul.u32 %s1082, 20
                  %s1084 = smul.u32 %s1082, 20
                  %s1085 = scalar_lea.vmem %s981, %s1083 [#allocation3]
                  %s1086 = scalar_lea.vmem %s992, %s1084
                $region111: #{traffic_sign_net.4} parent=105 // loop_footer
                  %s1064 = sadd.s32 %s1062, 1
                $region112: #{traffic_sign_net.4} parent=105 // loop_footer_branch
                  %1061 = sbr.rel target = $region108
                $region113: #{traffic_sign_net.4} parent=105 // loop_exit
                  _
                %s1087 = sdiv.u32.pop %s988, 5
                %s1088 = srem.u32.pop %s988, 5
                %s1089 = smul.u32 %s1087, 5
                %s1090 = smul.u32 4, %s1089
                %s1091 = scalar_lea.vmem %s981, %s1090 [#allocation3]
                %s1092 = smul.u32 4, %s1089
                %s1093 = scalar_lea.vmem %s992, %s1092
                // While loop
                $region114: #{traffic_sign_net.4} parent=105 // loop_pre_header
                  _
                $region115: #{traffic_sign_net.4} parent=105 // loop_header
                  %s1095 = sphi 0, %s1097
                  %p1096 = scmp.ge.s32.totalorder %s1095, %s1088
                  %s1100 = sphi 0, %s1107
                  %s1101 = sphi %s1091, %s1110
                  %s1102 = sphi %s1093, %s1111
                $region116: #{traffic_sign_net.4} parent=105 // loop_header_branch
                  %1099 = sbr.rel (%p1096) target = $region120
                $region117: #{traffic_sign_net.4} parent=105 // loop_body
                  %v1103 = vld [vmem:[%s1101] sm:%s1058]
                  %1104 = vst [vmem:[%s1102] sm:%s1058] %v1103
                  %s1105 = sadd.s32 1, %s1100
                  %p1106 = scmp.ge.s32.totalorder %s1105, %s1088
                  %s1107 = scalar_select %p1106, 0, %s1105
                  %s1108 = smul.u32 %s1107, 4
                  %s1109 = smul.u32 %s1107, 4
                  %s1110 = scalar_lea.vmem %s1091, %s1108 [#allocation3]
                  %s1111 = scalar_lea.vmem %s1093, %s1109
                $region118: #{traffic_sign_net.4} parent=105 // loop_footer
                  %s1097 = sadd.s32 %s1095, 1
                $region119: #{traffic_sign_net.4} parent=105 // loop_footer_branch
                  %1094 = sbr.rel target = $region115
                $region120: #{traffic_sign_net.4} parent=105 // loop_exit
                  _
              $region106: #{traffic_sign_net.4} parent=83 // pred_fallthru
                _
            $region84: #{traffic_sign_net.4} parent=79 // pred_fallthru
              _
            // Predicated region
            $region85: #{traffic_sign_net.4} parent=79 // pred_check
              _
            $region86: #{traffic_sign_net.4} parent=79 // pred_check_branch
              %999 = sbr.rel (0) target = $region88
            $region87: #{traffic_sign_net.4} parent=79 // pred_region
              %s1001 = ssub.s32 16, 1
              %s1002 = sdiv.u32.pop %s988, 5
              %s1003 = srem.u32.pop %s988, 5
              // While loop
              $region89: #{traffic_sign_net.4} parent=87 // loop_pre_header
                _
              $region90: #{traffic_sign_net.4} parent=87 // loop_header
                %s1005 = sphi 0, %s1007
                %p1006 = scmp.ge.s32.totalorder %s1005, %s1002
                %s1010 = sphi 0, %s1025
                %s1011 = sphi %s981, %s1028
                %s1012 = sphi %s992, %s1029
              $region91: #{traffic_sign_net.4} parent=87 // loop_header_branch
                %1009 = sbr.rel (%p1006) target = $region95
              $region92: #{traffic_sign_net.4} parent=87 // loop_body
                %v1013 = vld [vmem:[%s1011] sm:%s1001]
                %1014 = vst [vmem:[%s1012] sm:%s1001] %v1013
                %v1015 = vld [vmem:[%s1011 + $0x4] sm:%s1001]
                %1016 = vst [vmem:[%s1012 + $0x4] sm:%s1001] %v1015
                %v1017 = vld [vmem:[%s1011 + $0x8] sm:%s1001]
                %1018 = vst [vmem:[%s1012 + $0x8] sm:%s1001] %v1017
                %v1019 = vld [vmem:[%s1011 + $0xc] sm:%s1001]
                %1020 = vst [vmem:[%s1012 + $0xc] sm:%s1001] %v1019
                %v1021 = vld [vmem:[%s1011 + $0x10] sm:%s1001]
                %1022 = vst [vmem:[%s1012 + $0x10] sm:%s1001] %v1021
                %s1023 = sadd.s32 1, %s1010
                %p1024 = scmp.ge.s32.totalorder %s1023, %s1002
                %s1025 = scalar_select %p1024, 0, %s1023
                %s1026 = smul.u32 %s1025, 20
                %s1027 = smul.u32 %s1025, 20
                %s1028 = scalar_lea.vmem %s981, %s1026 [#allocation3]
                %s1029 = scalar_lea.vmem %s992, %s1027
              $region93: #{traffic_sign_net.4} parent=87 // loop_footer
                %s1007 = sadd.s32 %s1005, 1
              $region94: #{traffic_sign_net.4} parent=87 // loop_footer_branch
                %1004 = sbr.rel target = $region90
              $region95: #{traffic_sign_net.4} parent=87 // loop_exit
                _
              %s1030 = sdiv.u32.pop %s988, 5
              %s1031 = srem.u32.pop %s988, 5
              %s1032 = smul.u32 %s1030, 5
              %s1033 = smul.u32 4, %s1032
              %s1034 = scalar_lea.vmem %s981, %s1033 [#allocation3]
              %s1035 = smul.u32 4, %s1032
              %s1036 = scalar_lea.vmem %s992, %s1035
              // While loop
              $region96: #{traffic_sign_net.4} parent=87 // loop_pre_header
                _
              $region97: #{traffic_sign_net.4} parent=87 // loop_header
                %s1038 = sphi 0, %s1040
                %p1039 = scmp.ge.s32.totalorder %s1038, %s1031
                %s1043 = sphi 0, %s1050
                %s1044 = sphi %s1034, %s1053
                %s1045 = sphi %s1036, %s1054
              $region98: #{traffic_sign_net.4} parent=87 // loop_header_branch
                %1042 = sbr.rel (%p1039) target = $region102
              $region99: #{traffic_sign_net.4} parent=87 // loop_body
                %v1046 = vld [vmem:[%s1044] sm:%s1001]
                %1047 = vst [vmem:[%s1045] sm:%s1001] %v1046
                %s1048 = sadd.s32 1, %s1043
                %p1049 = scmp.ge.s32.totalorder %s1048, %s1031
                %s1050 = scalar_select %p1049, 0, %s1048
                %s1051 = smul.u32 %s1050, 4
                %s1052 = smul.u32 %s1050, 4
                %s1053 = scalar_lea.vmem %s1034, %s1051 [#allocation3]
                %s1054 = scalar_lea.vmem %s1036, %s1052
              $region100: #{traffic_sign_net.4} parent=87 // loop_footer
                %s1040 = sadd.s32 %s1038, 1
              $region101: #{traffic_sign_net.4} parent=87 // loop_footer_branch
                %1037 = sbr.rel target = $region97
              $region102: #{traffic_sign_net.4} parent=87 // loop_exit
                _
            $region88: #{traffic_sign_net.4} parent=79 // pred_fallthru
              _
          $region80: #{traffic_sign_net.4} parent=75 // pred_fallthru
            _
          %1112 = vnop
        $region76: #{traffic_sign_net.4} parent=67 // pred_fallthru
          _
      $region68: #{traffic_sign_net.4} parent=5 // pred_fallthru
        _
      %p1113 = scmp.le.s32.totalorder 2, %s9
      // Predicated region
      $region121: #{traffic_sign_net.4} parent=5 // pred_check
        %p1114 = pneg %p1113
      $region122: #{traffic_sign_net.4} parent=5 // pred_check_branch
        %1116 = sbr.rel (%p1114) target = $region124
      $region123: #{traffic_sign_net.4} parent=5 // pred_region
        %s1117 = ssub.s32 %s9, 2
        // Predicated region
        $region125: #{traffic_sign_net.4} parent=123 // pred_check
          %p1118 = pneg %p106
        $region126: #{traffic_sign_net.4} parent=123 // pred_check_branch
          %1120 = sbr.rel (%p1118) target = $region128
        $region127: #{traffic_sign_net.4} parent=123 // pred_region
          %s1121 = sand.u32 %s91, 1
          %s1122 = sand.u32 %s91, 1
          %s1123 = smul.addr %s1122, 20
          %s1124 = scalar_lea.vmem [#allocation3], %s1123
        $region128: #{traffic_sign_net.4} parent=123 // pred_fallthru
          _
      $region124: #{traffic_sign_net.4} parent=5 // pred_fallthru
        _
    $region6: #{traffic_sign_net.4} parent=1 // loop_footer
      %s13 = sadd.s32 1, %s9
    $region7: #{traffic_sign_net.4} parent=1 // loop_footer_branch
      %8 = sbr.rel target = $region3
    $region8: #{traffic_sign_net.4} parent=1 // loop_exit
      _

// kernel: traffic_sign_net.5
$region0: #{traffic_sign_net.5}
  #allocation0 [shape = 'u32[]', space=smem, size = 0x4, offset = 0x4, fixed_abs, tag = 'smem constant byte address 0x4 - core index']
  #allocation1 [shape = 'u32[72,128]{1,0:T(1,128)}', space=vmem, size = 0x9000, scoped, tag = 'internal scratch']
  %s0 = inlined_call_operand.vmem [shape: bf16[16,2304], index: 0, kind: input, shape index: {}]
  %s1 = inlined_call_operand.vmem [shape: bf16[2304,128], index: 1, kind: input, shape index: {}]
  %s2 = inlined_call_operand.vmem [shape: f32[1,128], index: 2, kind: input, shape index: {}]
  %s3 = inlined_call_operand.vmem [shape: bf16[128,128], index: 3, kind: input, shape index: {}]
  %s4 = inlined_call_operand.vmem [shape: f32[1,128], index: 4, kind: input, shape index: {}]
  %s5 = inlined_call_operand.vmem [shape: f32[16,128], index: 5, kind: output, shape index: {}]
  %s6 = sld [smem:[#allocation0]]
  $region53: #{traffic_sign_net.5} parent=0
    _
  %s8 = ssub.s32 1, %s6
  %s9 = scalar_select 0, %s8, %s6
  loop: start=0, step=1, limit=4
  $region2: #{traffic_sign_net.5} parent=0 // loop_pre_header
    _
  $region3: #{traffic_sign_net.5} parent=0 // loop_header
    %s11 = sphi 0, %s15
    %p12 = scmp.ge.s32.totalorder %s11, 4
    %s21 = sphi 0, %s23
    %s24 = sphi 0, %s21
    %s25 = sphi 0, %s24
    %s41 = sphi 0, %s25
    %s45 = sphi 0, %s45
    %s47 = sphi 0, %s45
    %s48 = sphi 0, %s47
    %s62 = sphi 0, %s48
    %s66 = sphi 0, %s66
    %s68 = sphi 0, %s66
    %s69 = sphi 0, %s68
    %s83 = sphi 0, %s69
    %s87 = sphi 0, %s87
    %s89 = sphi 0, %s87
    %s90 = sphi 0, %s89
    %s104 = sphi 0, %s90
    %s108 = sphi 0, %s108
    %s110 = sphi 0, %s108
    %s111 = sphi 0, %s110
    %s125 = sphi 0, %s111
    %s131 = sphi 0, %s133
    %s134 = sphi 0, %s131
    %s135 = sphi 0, %s134
    %s151 = sphi 0, %s135
  $region4: #{traffic_sign_net.5} parent=0 // loop_header_branch
    %14 = sbr.rel (%p12) target = $region8
  $region5: #{traffic_sign_net.5} parent=0 // loop_body
    %s16 = ssub.s32 %s11, 1
    %s17 = ssub.s32 %s11, 2
    %s18 = sadd.s32 %s11, 1
    %s19 = ssub.s32 %s11, %s18
    %p20 = scmp.eq.s32.totalorder %s19, 0
    %s22 = sadd.s32 %s21, 1
    %s23 = scalar_select %p20, %s21, %s22
    %p26 = pneg %p20
    %p27 = scmp.eq.s32.totalorder %s11, 1
    %p28 = por %p26, %p27
    %p29 = scmp.ne.s32.totalorder %s21, %s24
    %p30 = scmp.eq.s32.totalorder %s11, 0
    %p31 = por %p29, %p30
    %p32 = scmp.ne.s32.totalorder %s21, %s24
    %p33 = scmp.eq.s32.totalorder %s16, 1
    %p34 = por %p32, %p33
    %p35 = scmp.ne.s32.totalorder %s24, %s25
    %p36 = scmp.eq.s32.totalorder %s16, 0
    %p37 = por %p35, %p36
    %p38 = scmp.ne.s32.totalorder %s24, %s25
    %p39 = scmp.eq.s32.totalorder %s17, 1
    %p40 = por %p38, %p39
    %p42 = scmp.ne.s32.totalorder %s25, %s41
    %p43 = scmp.eq.s32.totalorder %s17, 0
    %p44 = por %p42, %p43
    %s46 = sadd.s32 %s45, 1
    %p49 = scmp.eq.s32.totalorder %s11, 1
    %p50 = scmp.ne.s32.totalorder %s45, %s47
    %p51 = scmp.eq.s32.totalorder %s11, 0
    %p52 = por %p50, %p51
    %p53 = scmp.ne.s32.totalorder %s45, %s47
    %p54 = scmp.eq.s32.totalorder %s16, 1
    %p55 = por %p53, %p54
    %p56 = scmp.ne.s32.totalorder %s47, %s48
    %p57 = scmp.eq.s32.totalorder %s16, 0
    %p58 = por %p56, %p57
    %p59 = scmp.ne.s32.totalorder %s47, %s48
    %p60 = scmp.eq.s32.totalorder %s17, 1
    %p61 = por %p59, %p60
    %p63 = scmp.ne.s32.totalorder %s48, %s62
    %p64 = scmp.eq.s32.totalorder %s17, 0
    %p65 = por %p63, %p64
    %s67 = sadd.s32 %s66, 1
    %p70 = scmp.eq.s32.totalorder %s11, 1
    %p71 = scmp.ne.s32.totalorder %s66, %s68
    %p72 = scmp.eq.s32.totalorder %s11, 0
    %p73 = por %p71, %p72
    %p74 = scmp.ne.s32.totalorder %s66, %s68
    %p75 = scmp.eq.s32.totalorder %s16, 1
    %p76 = por %p74, %p75
    %p77 = scmp.ne.s32.totalorder %s68, %s69
    %p78 = scmp.eq.s32.totalorder %s16, 0
    %p79 = por %p77, %p78
    %p80 = scmp.ne.s32.totalorder %s68, %s69
    %p81 = scmp.eq.s32.totalorder %s17, 1
    %p82 = por %p80, %p81
    %p84 = scmp.ne.s32.totalorder %s69, %s83
    %p85 = scmp.eq.s32.totalorder %s17, 0
    %p86 = por %p84, %p85
    %s88 = sadd.s32 %s87, 1
    %p91 = scmp.eq.s32.totalorder %s11, 1
    %p92 = scmp.ne.s32.totalorder %s87, %s89
    %p93 = scmp.eq.s32.totalorder %s11, 0
    %p94 = por %p92, %p93
    %p95 = scmp.ne.s32.totalorder %s87, %s89
    %p96 = scmp.eq.s32.totalorder %s16, 1
    %p97 = por %p95, %p96
    %p98 = scmp.ne.s32.totalorder %s89, %s90
    %p99 = scmp.eq.s32.totalorder %s16, 0
    %p100 = por %p98, %p99
    %p101 = scmp.ne.s32.totalorder %s89, %s90
    %p102 = scmp.eq.s32.totalorder %s17, 1
    %p103 = por %p101, %p102
    %p105 = scmp.ne.s32.totalorder %s90, %s104
    %p106 = scmp.eq.s32.totalorder %s17, 0
    %p107 = por %p105, %p106
    %s109 = sadd.s32 %s108, 1
    %p112 = scmp.eq.s32.totalorder %s11, 1
    %p113 = scmp.ne.s32.totalorder %s108, %s110
    %p114 = scmp.eq.s32.totalorder %s11, 0
    %p115 = por %p113, %p114
    %p116 = scmp.ne.s32.totalorder %s108, %s110
    %p117 = scmp.eq.s32.totalorder %s16, 1
    %p118 = por %p116, %p117
    %p119 = scmp.ne.s32.totalorder %s110, %s111
    %p120 = scmp.eq.s32.totalorder %s16, 0
    %p121 = por %p119, %p120
    %p122 = scmp.ne.s32.totalorder %s110, %s111
    %p123 = scmp.eq.s32.totalorder %s17, 1
    %p124 = por %p122, %p123
    %p126 = scmp.ne.s32.totalorder %s111, %s125
    %p127 = scmp.eq.s32.totalorder %s17, 0
    %p128 = por %p126, %p127
    %s129 = ssub.s32 %s11, %s18
    %p130 = scmp.eq.s32.totalorder %s129, 0
    %s132 = sadd.s32 %s131, 1
    %s133 = scalar_select %p130, %s131, %s132
    %p136 = pneg %p130
    %p137 = scmp.eq.s32.totalorder %s11, 1
    %p138 = por %p136, %p137
    %p139 = scmp.ne.s32.totalorder %s131, %s134
    %p140 = scmp.eq.s32.totalorder %s11, 0
    %p141 = por %p139, %p140
    %p142 = scmp.ne.s32.totalorder %s131, %s134
    %p143 = scmp.eq.s32.totalorder %s16, 1
    %p144 = por %p142, %p143
    %p145 = scmp.ne.s32.totalorder %s134, %s135
    %p146 = scmp.eq.s32.totalorder %s16, 0
    %p147 = por %p145, %p146
    %p148 = scmp.ne.s32.totalorder %s134, %s135
    %p149 = scmp.eq.s32.totalorder %s17, 1
    %p150 = por %p148, %p149
    %p152 = scmp.ne.s32.totalorder %s135, %s151
    %p153 = scmp.eq.s32.totalorder %s17, 0
    %p154 = por %p152, %p153
    %p155 = scmp.le.s32.totalorder 1, %s11
    %p156 = scmp.lt.s32.totalorder %s11, 3
    %p157 = pnand %p155, %p156
    %p158 = pneg %p157
    // Predicated region
    $region9: #{traffic_sign_net.5} parent=5 // pred_check
      _
    $region10: #{traffic_sign_net.5} parent=5 // pred_check_branch
      %160 = sbr.rel (%p157) target = $region12
    $region11: #{traffic_sign_net.5} parent=5 // pred_region
      %s161 = ssub.s32 %s11, 1
      // Predicated region
      $region13: #{traffic_sign_net.5} parent=11 // pred_check
        %p162 = pneg %p58
      $region14: #{traffic_sign_net.5} parent=11 // pred_check_branch
        %164 = sbr.rel (%p162) target = $region16
      $region15: #{traffic_sign_net.5} parent=11 // pred_region
        _
      $region16: #{traffic_sign_net.5} parent=11 // pred_fallthru
        _
      // Predicated region
      $region17: #{traffic_sign_net.5} parent=11 // pred_check
        %p165 = pneg %p79
      $region18: #{traffic_sign_net.5} parent=11 // pred_check_branch
        %167 = sbr.rel (%p165) target = $region20
      $region19: #{traffic_sign_net.5} parent=11 // pred_region
        _
      $region20: #{traffic_sign_net.5} parent=11 // pred_fallthru
        _
      // Predicated region
      $region21: #{traffic_sign_net.5} parent=11 // pred_check
        %p168 = pneg %p100
      $region22: #{traffic_sign_net.5} parent=11 // pred_check_branch
        %170 = sbr.rel (%p168) target = $region24
      $region23: #{traffic_sign_net.5} parent=11 // pred_region
        _
      $region24: #{traffic_sign_net.5} parent=11 // pred_fallthru
        _
      // Predicated region
      $region25: #{traffic_sign_net.5} parent=11 // pred_check
        %p171 = pneg %p121
      $region26: #{traffic_sign_net.5} parent=11 // pred_check_branch
        %173 = sbr.rel (%p171) target = $region28
      $region27: #{traffic_sign_net.5} parent=11 // pred_region
        _
      $region28: #{traffic_sign_net.5} parent=11 // pred_fallthru
        _
    $region12: #{traffic_sign_net.5} parent=5 // pred_fallthru
      _
    %p174 = scmp.lt.s32.totalorder %s11, 2
    // Predicated region
    $region29: #{traffic_sign_net.5} parent=5 // pred_check
      %p175 = pneg %p174
    $region30: #{traffic_sign_net.5} parent=5 // pred_check_branch
      %177 = sbr.rel (%p175) target = $region32
    $region31: #{traffic_sign_net.5} parent=5 // pred_region
      // Predicated region
      $region33: #{traffic_sign_net.5} parent=31 // pred_check
        %p178 = pneg %p31
      $region34: #{traffic_sign_net.5} parent=31 // pred_check_branch
        %180 = sbr.rel (%p178) target = $region36
      $region35: #{traffic_sign_net.5} parent=31 // pred_region
        %p181 = scmp.lt.s32.totalorder %s11, 1
        %s182 = scalar_select %p181, %s11, 1
        %s183 = smul.addr %s182, 18
        %s184 = smul.addr %s183, 4
        %s185 = scalar_lea.vmem %s0, %s184
      $region36: #{traffic_sign_net.5} parent=31 // pred_fallthru
        _
    $region32: #{traffic_sign_net.5} parent=5 // pred_fallthru
      _
    %p186 = scmp.le.s32.totalorder 1, %s11
    %p187 = scmp.lt.s32.totalorder %s11, 3
    %p188 = pnand %p186, %p187
    %p189 = pneg %p188
    // Predicated region
    $region37: #{traffic_sign_net.5} parent=5 // pred_check
      _
    $region38: #{traffic_sign_net.5} parent=5 // pred_check_branch
      %191 = sbr.rel (%p188) target = $region40
    $region39: #{traffic_sign_net.5} parent=5 // pred_region
      %s192 = ssub.s32 %s11, 1
      %p193 = scmp.lt.s32.totalorder %s16, 1
      %s194 = scalar_select %p193, %s16, 1
      %s195 = smul.addr %s194, 18
      %s196 = smul.addr %s195, 4
      %s197 = scalar_lea.vmem %s0, %s196
      %p198 = pneg %p37
      %p199 = pneg %p34
      %p200 = pneg %p58
      %p201 = pneg %p55
      %p202 = pneg %p79
      %p203 = pneg %p76
      %p204 = pneg %p100
      %p205 = pneg %p97
      %p206 = pneg %p121
      %p207 = pneg %p118
      %p208 = pneg %p147
      %p209 = pneg %p144
      %p210 = scmp.lt.s32.totalorder %s16, 1
      %s211 = scalar_select %p210, %s16, 1
      %s212 = smul.addr %s211, 8
      %s213 = scalar_lea.vmem %s5, %s212
      %p214 = scmp.lt.s32.totalorder %s16, 1
      %s215 = scalar_select %p214, %s16, 1
      %s216 = smul.addr %s215, 18
      %s217 = smul.addr %s216, 4
      %s218 = scalar_lea.vmem %s0, %s217
      %p219 = scmp.lt.s32.totalorder %s16, 1
      %s220 = scalar_select %p219, %s16, 1
      %s221 = smul.addr %s220, 8
      %s222 = scalar_lea.vmem %s5, %s221
      %v223 = vld [vmem:[%s218] sm:$0xff]
      %v224 = vld [vmem:[%s218 + $0x8] sm:$0xff]
      %v225 = vld [vmem:[%s218 + $0x10] sm:$0xff]
      %v226 = vld [vmem:[%s218 + $0x18] sm:$0xff]
      %v227 = vld [vmem:[%s218 + $0x20] sm:$0xff]
      %v228 = vld [vmem:[%s218 + $0x28] sm:$0xff]
      %v229 = vld [vmem:[%s218 + $0x30] sm:$0xff]
      %v230 = vld [vmem:[%s218 + $0x38] sm:$0xff]
      %v231 = vld [vmem:[%s218 + $0x40] sm:$0xff]
      %v232 = vld [vmem:[%s1] sm:$0xf]
      %v233 = vld [vmem:[%s1 + $0x4] sm:$0xf]
      %v234 = vld [vmem:[%s1 + $0x8] sm:$0xf]
      %v235 = vld [vmem:[%s1 + $0xc] sm:$0xf]
      %v236 = vld [vmem:[%s1 + $0x10] sm:$0xf]
      %v237 = vld [vmem:[%s1 + $0x14] sm:$0xf]
      %v238 = vld [vmem:[%s1 + $0x18] sm:$0xf]
      %v239 = vld [vmem:[%s1 + $0x1c] sm:$0xf]
      %v240 = vld [vmem:[%s1 + $0x20] sm:$0xf]
      %v241 = vld [vmem:[%s1 + $0x24] sm:$0xf]
      %v242 = vld [vmem:[%s1 + $0x28] sm:$0xf]
      %v243 = vld [vmem:[%s1 + $0x2c] sm:$0xf]
      %v244 = vld [vmem:[%s1 + $0x30] sm:$0xf]
      %v245 = vld [vmem:[%s1 + $0x34] sm:$0xf]
      %v246 = vld [vmem:[%s1 + $0x38] sm:$0xf]
      %v247 = vld [vmem:[%s1 + $0x3c] sm:$0xf]
      %v248 = vld [vmem:[%s1 + $0x40] sm:$0xf]
      %v249 = vld [vmem:[%s1 + $0x44] sm:$0xf]
      %v250 = vld [vmem:[%s1 + $0x48] sm:$0xf]
      %v251 = vld [vmem:[%s1 + $0x4c] sm:$0xf]
      %v252 = vld [vmem:[%s1 + $0x50] sm:$0xf]
      %v253 = vld [vmem:[%s1 + $0x54] sm:$0xf]
      %v254 = vld [vmem:[%s1 + $0x58] sm:$0xf]
      %v255 = vld [vmem:[%s1 + $0x5c] sm:$0xf]
      %v256 = vld [vmem:[%s1 + $0x60] sm:$0xf]
      %v257 = vld [vmem:[%s1 + $0x64] sm:$0xf]
      %v258 = vld [vmem:[%s1 + $0x68] sm:$0xf]
      %v259 = vld [vmem:[%s1 + $0x6c] sm:$0xf]
      %v260 = vld [vmem:[%s1 + $0x70] sm:$0xf]
      %v261 = vld [vmem:[%s1 + $0x74] sm:$0xf]
      %v262 = vld [vmem:[%s1 + $0x78] sm:$0xf]
      %v263 = vld [vmem:[%s1 + $0x7c] sm:$0xf]
      %v264 = vld [vmem:[%s1 + $0x80] sm:$0xf]
      %v265 = vld [vmem:[%s1 + $0x84] sm:$0xf]
      %v266 = vld [vmem:[%s1 + $0x88] sm:$0xf]
      %v267 = vld [vmem:[%s1 + $0x8c] sm:$0xf]
      %v268 = vld [vmem:[%s1 + $0x90] sm:$0xf]
      %v269 = vld [vmem:[%s1 + $0x94] sm:$0xf]
      %v270 = vld [vmem:[%s1 + $0x98] sm:$0xf]
      %v271 = vld [vmem:[%s1 + $0x9c] sm:$0xf]
      %v272 = vld [vmem:[%s1 + $0xa0] sm:$0xf]
      %v273 = vld [vmem:[%s1 + $0xa4] sm:$0xf]
      %v274 = vld [vmem:[%s1 + $0xa8] sm:$0xf]
      %v275 = vld [vmem:[%s1 + $0xac] sm:$0xf]
      %v276 = vld [vmem:[%s1 + $0xb0] sm:$0xf]
      %v277 = vld [vmem:[%s1 + $0xb4] sm:$0xf]
      %v278 = vld [vmem:[%s1 + $0xb8] sm:$0xf]
      %v279 = vld [vmem:[%s1 + $0xbc] sm:$0xf]
      %v280 = vld [vmem:[%s1 + $0xc0] sm:$0xf]
      %v281 = vld [vmem:[%s1 + $0xc4] sm:$0xf]
      %v282 = vld [vmem:[%s1 + $0xc8] sm:$0xf]
      %v283 = vld [vmem:[%s1 + $0xcc] sm:$0xf]
      %v284 = vld [vmem:[%s1 + $0xd0] sm:$0xf]
      %v285 = vld [vmem:[%s1 + $0xd4] sm:$0xf]
      %v286 = vld [vmem:[%s1 + $0xd8] sm:$0xf]
      %v287 = vld [vmem:[%s1 + $0xdc] sm:$0xf]
      %v288 = vld [vmem:[%s1 + $0xe0] sm:$0xf]
      %v289 = vld [vmem:[%s1 + $0xe4] sm:$0xf]
      %v290 = vld [vmem:[%s1 + $0xe8] sm:$0xf]
      %v291 = vld [vmem:[%s1 + $0xec] sm:$0xf]
      %v292 = vld [vmem:[%s1 + $0xf0] sm:$0xf]
      %v293 = vld [vmem:[%s1 + $0xf4] sm:$0xf]
      %v294 = vld [vmem:[%s1 + $0xf8] sm:$0xf]
      %v295 = vld [vmem:[%s1 + $0xfc] sm:$0xf]
      %v296 = vld [vmem:[%s1 + $0x100] sm:$0xf]
      %v297 = vld [vmem:[%s1 + $0x104] sm:$0xf]
      %v298 = vld [vmem:[%s1 + $0x108] sm:$0xf]
      %v299 = vld [vmem:[%s1 + $0x10c] sm:$0xf]
      %v300 = vld [vmem:[%s1 + $0x110] sm:$0xf]
      %v301 = vld [vmem:[%s1 + $0x114] sm:$0xf]
      %v302 = vld [vmem:[%s1 + $0x118] sm:$0xf]
      %v303 = vld [vmem:[%s1 + $0x11c] sm:$0xf]
      %v304 = vld [vmem:[%s1 + $0x120] sm:$0xf]
      %v305 = vld [vmem:[%s1 + $0x124] sm:$0xf]
      %v306 = vld [vmem:[%s1 + $0x128] sm:$0xf]
      %v307 = vld [vmem:[%s1 + $0x12c] sm:$0xf]
      %v308 = vld [vmem:[%s1 + $0x130] sm:$0xf]
      %v309 = vld [vmem:[%s1 + $0x134] sm:$0xf]
      %v310 = vld [vmem:[%s1 + $0x138] sm:$0xf]
      %v311 = vld [vmem:[%s1 + $0x13c] sm:$0xf]
      %v312 = vld [vmem:[%s1 + $0x140] sm:$0xf]
      %v313 = vld [vmem:[%s1 + $0x144] sm:$0xf]
      %v314 = vld [vmem:[%s1 + $0x148] sm:$0xf]
      %v315 = vld [vmem:[%s1 + $0x14c] sm:$0xf]
      %v316 = vld [vmem:[%s1 + $0x150] sm:$0xf]
      %v317 = vld [vmem:[%s1 + $0x154] sm:$0xf]
      %v318 = vld [vmem:[%s1 + $0x158] sm:$0xf]
      %v319 = vld [vmem:[%s1 + $0x15c] sm:$0xf]
      %v320 = vld [vmem:[%s1 + $0x160] sm:$0xf]
      %v321 = vld [vmem:[%s1 + $0x164] sm:$0xf]
      %v322 = vld [vmem:[%s1 + $0x168] sm:$0xf]
      %v323 = vld [vmem:[%s1 + $0x16c] sm:$0xf]
      %v324 = vld [vmem:[%s1 + $0x170] sm:$0xf]
      %v325 = vld [vmem:[%s1 + $0x174] sm:$0xf]
      %v326 = vld [vmem:[%s1 + $0x178] sm:$0xf]
      %v327 = vld [vmem:[%s1 + $0x17c] sm:$0xf]
      %v328 = vld [vmem:[%s1 + $0x180] sm:$0xf]
      %v329 = vld [vmem:[%s1 + $0x184] sm:$0xf]
      %v330 = vld [vmem:[%s1 + $0x188] sm:$0xf]
      %v331 = vld [vmem:[%s1 + $0x18c] sm:$0xf]
      %v332 = vld [vmem:[%s1 + $0x190] sm:$0xf]
      %v333 = vld [vmem:[%s1 + $0x194] sm:$0xf]
      %v334 = vld [vmem:[%s1 + $0x198] sm:$0xf]
      %v335 = vld [vmem:[%s1 + $0x19c] sm:$0xf]
      %v336 = vld [vmem:[%s1 + $0x1a0] sm:$0xf]
      %v337 = vld [vmem:[%s1 + $0x1a4] sm:$0xf]
      %v338 = vld [vmem:[%s1 + $0x1a8] sm:$0xf]
      %v339 = vld [vmem:[%s1 + $0x1ac] sm:$0xf]
      %v340 = vld [vmem:[%s1 + $0x1b0] sm:$0xf]
      %v341 = vld [vmem:[%s1 + $0x1b4] sm:$0xf]
      %v342 = vld [vmem:[%s1 + $0x1b8] sm:$0xf]
      %v343 = vld [vmem:[%s1 + $0x1bc] sm:$0xf]
      %v344 = vld [vmem:[%s1 + $0x1c0] sm:$0xf]
      %v345 = vld [vmem:[%s1 + $0x1c4] sm:$0xf]
      %v346 = vld [vmem:[%s1 + $0x1c8] sm:$0xf]
      %v347 = vld [vmem:[%s1 + $0x1cc] sm:$0xf]
      %v348 = vld [vmem:[%s1 + $0x1d0] sm:$0xf]
      %v349 = vld [vmem:[%s1 + $0x1d4] sm:$0xf]
      %v350 = vld [vmem:[%s1 + $0x1d8] sm:$0xf]
      %v351 = vld [vmem:[%s1 + $0x1dc] sm:$0xf]
      %v352 = vld [vmem:[%s1 + $0x1e0] sm:$0xf]
      %v353 = vld [vmem:[%s1 + $0x1e4] sm:$0xf]
      %v354 = vld [vmem:[%s1 + $0x1e8] sm:$0xf]
      %v355 = vld [vmem:[%s1 + $0x1ec] sm:$0xf]
      %v356 = vld [vmem:[%s1 + $0x1f0] sm:$0xf]
      %v357 = vld [vmem:[%s1 + $0x1f4] sm:$0xf]
      %v358 = vld [vmem:[%s1 + $0x1f8] sm:$0xf]
      %v359 = vld [vmem:[%s1 + $0x1fc] sm:$0xf]
      %v360 = vld [vmem:[%s1 + $0x200] sm:$0xf]
      %v361 = vld [vmem:[%s1 + $0x204] sm:$0xf]
      %v362 = vld [vmem:[%s1 + $0x208] sm:$0xf]
      %v363 = vld [vmem:[%s1 + $0x20c] sm:$0xf]
      %v364 = vld [vmem:[%s1 + $0x210] sm:$0xf]
      %v365 = vld [vmem:[%s1 + $0x214] sm:$0xf]
      %v366 = vld [vmem:[%s1 + $0x218] sm:$0xf]
      %v367 = vld [vmem:[%s1 + $0x21c] sm:$0xf]
      %v368 = vld [vmem:[%s1 + $0x220] sm:$0xf]
      %v369 = vld [vmem:[%s1 + $0x224] sm:$0xf]
      %v370 = vld [vmem:[%s1 + $0x228] sm:$0xf]
      %v371 = vld [vmem:[%s1 + $0x22c] sm:$0xf]
      %v372 = vld [vmem:[%s1 + $0x230] sm:$0xf]
      %v373 = vld [vmem:[%s1 + $0x234] sm:$0xf]
      %v374 = vld [vmem:[%s1 + $0x238] sm:$0xf]
      %v375 = vld [vmem:[%s1 + $0x23c] sm:$0xf]
      %v376 = vld [vmem:[%s1 + $0x240] sm:$0xf]
      %v377 = vld [vmem:[%s1 + $0x244] sm:$0xf]
      %v378 = vld [vmem:[%s1 + $0x248] sm:$0xf]
      %v379 = vld [vmem:[%s1 + $0x24c] sm:$0xf]
      %v380 = vld [vmem:[%s1 + $0x250] sm:$0xf]
      %v381 = vld [vmem:[%s1 + $0x254] sm:$0xf]
      %v382 = vld [vmem:[%s1 + $0x258] sm:$0xf]
      %v383 = vld [vmem:[%s1 + $0x25c] sm:$0xf]
      %v384 = vld [vmem:[%s1 + $0x260] sm:$0xf]
      %v385 = vld [vmem:[%s1 + $0x264] sm:$0xf]
      %v386 = vld [vmem:[%s1 + $0x268] sm:$0xf]
      %v387 = vld [vmem:[%s1 + $0x26c] sm:$0xf]
      %v388 = vld [vmem:[%s1 + $0x270] sm:$0xf]
      %v389 = vld [vmem:[%s1 + $0x274] sm:$0xf]
      %v390 = vld [vmem:[%s1 + $0x278] sm:$0xf]
      %v391 = vld [vmem:[%s1 + $0x27c] sm:$0xf]
      %v392 = vld [vmem:[%s1 + $0x280] sm:$0xf]
      %v393 = vld [vmem:[%s1 + $0x284] sm:$0xf]
      %v394 = vld [vmem:[%s1 + $0x288] sm:$0xf]
      %v395 = vld [vmem:[%s1 + $0x28c] sm:$0xf]
      %v396 = vld [vmem:[%s1 + $0x290] sm:$0xf]
      %v397 = vld [vmem:[%s1 + $0x294] sm:$0xf]
      %v398 = vld [vmem:[%s1 + $0x298] sm:$0xf]
      %v399 = vld [vmem:[%s1 + $0x29c] sm:$0xf]
      %v400 = vld [vmem:[%s1 + $0x2a0] sm:$0xf]
      %v401 = vld [vmem:[%s1 + $0x2a4] sm:$0xf]
      %v402 = vld [vmem:[%s1 + $0x2a8] sm:$0xf]
      %v403 = vld [vmem:[%s1 + $0x2ac] sm:$0xf]
      %v404 = vld [vmem:[%s1 + $0x2b0] sm:$0xf]
      %v405 = vld [vmem:[%s1 + $0x2b4] sm:$0xf]
      %v406 = vld [vmem:[%s1 + $0x2b8] sm:$0xf]
      %v407 = vld [vmem:[%s1 + $0x2bc] sm:$0xf]
      %v408 = vld [vmem:[%s1 + $0x2c0] sm:$0xf]
      %v409 = vld [vmem:[%s1 + $0x2c4] sm:$0xf]
      %v410 = vld [vmem:[%s1 + $0x2c8] sm:$0xf]
      %v411 = vld [vmem:[%s1 + $0x2cc] sm:$0xf]
      %v412 = vld [vmem:[%s1 + $0x2d0] sm:$0xf]
      %v413 = vld [vmem:[%s1 + $0x2d4] sm:$0xf]
      %v414 = vld [vmem:[%s1 + $0x2d8] sm:$0xf]
      %v415 = vld [vmem:[%s1 + $0x2dc] sm:$0xf]
      %v416 = vld [vmem:[%s1 + $0x2e0] sm:$0xf]
      %v417 = vld [vmem:[%s1 + $0x2e4] sm:$0xf]
      %v418 = vld [vmem:[%s1 + $0x2e8] sm:$0xf]
      %v419 = vld [vmem:[%s1 + $0x2ec] sm:$0xf]
      %v420 = vld [vmem:[%s1 + $0x2f0] sm:$0xf]
      %v421 = vld [vmem:[%s1 + $0x2f4] sm:$0xf]
      %v422 = vld [vmem:[%s1 + $0x2f8] sm:$0xf]
      %v423 = vld [vmem:[%s1 + $0x2fc] sm:$0xf]
      %v424 = vld [vmem:[%s1 + $0x300] sm:$0xf]
      %v425 = vld [vmem:[%s1 + $0x304] sm:$0xf]
      %v426 = vld [vmem:[%s1 + $0x308] sm:$0xf]
      %v427 = vld [vmem:[%s1 + $0x30c] sm:$0xf]
      %v428 = vld [vmem:[%s1 + $0x310] sm:$0xf]
      %v429 = vld [vmem:[%s1 + $0x314] sm:$0xf]
      %v430 = vld [vmem:[%s1 + $0x318] sm:$0xf]
      %v431 = vld [vmem:[%s1 + $0x31c] sm:$0xf]
      %v432 = vld [vmem:[%s1 + $0x320] sm:$0xf]
      %v433 = vld [vmem:[%s1 + $0x324] sm:$0xf]
      %v434 = vld [vmem:[%s1 + $0x328] sm:$0xf]
      %v435 = vld [vmem:[%s1 + $0x32c] sm:$0xf]
      %v436 = vld [vmem:[%s1 + $0x330] sm:$0xf]
      %v437 = vld [vmem:[%s1 + $0x334] sm:$0xf]
      %v438 = vld [vmem:[%s1 + $0x338] sm:$0xf]
      %v439 = vld [vmem:[%s1 + $0x33c] sm:$0xf]
      %v440 = vld [vmem:[%s1 + $0x340] sm:$0xf]
      %v441 = vld [vmem:[%s1 + $0x344] sm:$0xf]
      %v442 = vld [vmem:[%s1 + $0x348] sm:$0xf]
      %v443 = vld [vmem:[%s1 + $0x34c] sm:$0xf]
      %v444 = vld [vmem:[%s1 + $0x350] sm:$0xf]
      %v445 = vld [vmem:[%s1 + $0x354] sm:$0xf]
      %v446 = vld [vmem:[%s1 + $0x358] sm:$0xf]
      %v447 = vld [vmem:[%s1 + $0x35c] sm:$0xf]
      %v448 = vld [vmem:[%s1 + $0x360] sm:$0xf]
      %v449 = vld [vmem:[%s1 + $0x364] sm:$0xf]
      %v450 = vld [vmem:[%s1 + $0x368] sm:$0xf]
      %v451 = vld [vmem:[%s1 + $0x36c] sm:$0xf]
      %v452 = vld [vmem:[%s1 + $0x370] sm:$0xf]
      %v453 = vld [vmem:[%s1 + $0x374] sm:$0xf]
      %v454 = vld [vmem:[%s1 + $0x378] sm:$0xf]
      %v455 = vld [vmem:[%s1 + $0x37c] sm:$0xf]
      %v456 = vld [vmem:[%s1 + $0x380] sm:$0xf]
      %v457 = vld [vmem:[%s1 + $0x384] sm:$0xf]
      %v458 = vld [vmem:[%s1 + $0x388] sm:$0xf]
      %v459 = vld [vmem:[%s1 + $0x38c] sm:$0xf]
      %v460 = vld [vmem:[%s1 + $0x390] sm:$0xf]
      %v461 = vld [vmem:[%s1 + $0x394] sm:$0xf]
      %v462 = vld [vmem:[%s1 + $0x398] sm:$0xf]
      %v463 = vld [vmem:[%s1 + $0x39c] sm:$0xf]
      %v464 = vld [vmem:[%s1 + $0x3a0] sm:$0xf]
      %v465 = vld [vmem:[%s1 + $0x3a4] sm:$0xf]
      %v466 = vld [vmem:[%s1 + $0x3a8] sm:$0xf]
      %v467 = vld [vmem:[%s1 + $0x3ac] sm:$0xf]
      %v468 = vld [vmem:[%s1 + $0x3b0] sm:$0xf]
      %v469 = vld [vmem:[%s1 + $0x3b4] sm:$0xf]
      %v470 = vld [vmem:[%s1 + $0x3b8] sm:$0xf]
      %v471 = vld [vmem:[%s1 + $0x3bc] sm:$0xf]
      %v472 = vld [vmem:[%s1 + $0x3c0] sm:$0xf]
      %v473 = vld [vmem:[%s1 + $0x3c4] sm:$0xf]
      %v474 = vld [vmem:[%s1 + $0x3c8] sm:$0xf]
      %v475 = vld [vmem:[%s1 + $0x3cc] sm:$0xf]
      %v476 = vld [vmem:[%s1 + $0x3d0] sm:$0xf]
      %v477 = vld [vmem:[%s1 + $0x3d4] sm:$0xf]
      %v478 = vld [vmem:[%s1 + $0x3d8] sm:$0xf]
      %v479 = vld [vmem:[%s1 + $0x3dc] sm:$0xf]
      %v480 = vld [vmem:[%s1 + $0x3e0] sm:$0xf]
      %v481 = vld [vmem:[%s1 + $0x3e4] sm:$0xf]
      %v482 = vld [vmem:[%s1 + $0x3e8] sm:$0xf]
      %v483 = vld [vmem:[%s1 + $0x3ec] sm:$0xf]
      %v484 = vld [vmem:[%s1 + $0x3f0] sm:$0xf]
      %v485 = vld [vmem:[%s1 + $0x3f4] sm:$0xf]
      %v486 = vld [vmem:[%s1 + $0x3f8] sm:$0xf]
      %v487 = vld [vmem:[%s1 + $0x3fc] sm:$0xf]
      %v488 = vld [vmem:[%s1 + $0x400] sm:$0xf]
      %v489 = vld [vmem:[%s1 + $0x404] sm:$0xf]
      %v490 = vld [vmem:[%s1 + $0x408] sm:$0xf]
      %v491 = vld [vmem:[%s1 + $0x40c] sm:$0xf]
      %v492 = vld [vmem:[%s1 + $0x410] sm:$0xf]
      %v493 = vld [vmem:[%s1 + $0x414] sm:$0xf]
      %v494 = vld [vmem:[%s1 + $0x418] sm:$0xf]
      %v495 = vld [vmem:[%s1 + $0x41c] sm:$0xf]
      %v496 = vld [vmem:[%s1 + $0x420] sm:$0xf]
      %v497 = vld [vmem:[%s1 + $0x424] sm:$0xf]
      %v498 = vld [vmem:[%s1 + $0x428] sm:$0xf]
      %v499 = vld [vmem:[%s1 + $0x42c] sm:$0xf]
      %v500 = vld [vmem:[%s1 + $0x430] sm:$0xf]
      %v501 = vld [vmem:[%s1 + $0x434] sm:$0xf]
      %v502 = vld [vmem:[%s1 + $0x438] sm:$0xf]
      %v503 = vld [vmem:[%s1 + $0x43c] sm:$0xf]
      %v504 = vld [vmem:[%s1 + $0x440] sm:$0xf]
      %v505 = vld [vmem:[%s1 + $0x444] sm:$0xf]
      %v506 = vld [vmem:[%s1 + $0x448] sm:$0xf]
      %v507 = vld [vmem:[%s1 + $0x44c] sm:$0xf]
      %v508 = vld [vmem:[%s1 + $0x450] sm:$0xf]
      %v509 = vld [vmem:[%s1 + $0x454] sm:$0xf]
      %v510 = vld [vmem:[%s1 + $0x458] sm:$0xf]
      %v511 = vld [vmem:[%s1 + $0x45c] sm:$0xf]
      %v512 = vld [vmem:[%s1 + $0x460] sm:$0xf]
      %v513 = vld [vmem:[%s1 + $0x464] sm:$0xf]
      %v514 = vld [vmem:[%s1 + $0x468] sm:$0xf]
      %v515 = vld [vmem:[%s1 + $0x46c] sm:$0xf]
      %v516 = vld [vmem:[%s1 + $0x470] sm:$0xf]
      %v517 = vld [vmem:[%s1 + $0x474] sm:$0xf]
      %v518 = vld [vmem:[%s1 + $0x478] sm:$0xf]
      %v519 = vld [vmem:[%s1 + $0x47c] sm:$0xf]
      %v520 = vld [vmem:[%s2] sm:$0x1]
      %v522 = vperm.slane %v520, 0
      %v533 = vunpack.c.l.b16 %v223
      %v534 = vunpack.c.h.b16 %v223
      %v535 = vunpack.c.l.b16 %v224
      %v536 = vunpack.c.h.b16 %v224
      %v537 = vunpack.c.l.b16 %v225
      %v538 = vunpack.c.h.b16 %v225
      %v539 = vunpack.c.l.b16 %v226
      %v540 = vunpack.c.h.b16 %v226
      %v541 = vunpack.c.l.b16 %v227
      %v542 = vunpack.c.h.b16 %v227
      %v543 = vunpack.c.l.b16 %v228
      %v544 = vunpack.c.h.b16 %v228
      %v545 = vunpack.c.l.b16 %v229
      %v546 = vunpack.c.h.b16 %v229
      %v547 = vunpack.c.l.b16 %v230
      %v548 = vunpack.c.h.b16 %v230
      %v549 = vunpack.c.l.b16 %v231
      %v550 = vunpack.c.h.b16 %v231
      %v551 = vpack.c.b16 %v533, %v533
      %v552 = vpack.c.b16 %v534, %v534
      %v553 = vpack.c.b16 %v535, %v535
      %v554 = vpack.c.b16 %v536, %v536
      %v555 = vpack.c.b16 %v537, %v537
      %v556 = vpack.c.b16 %v538, %v538
      %v557 = vpack.c.b16 %v539, %v539
      %v558 = vpack.c.b16 %v540, %v540
      %v559 = vpack.c.b16 %v541, %v541
      %v560 = vpack.c.b16 %v542, %v542
      %v561 = vpack.c.b16 %v543, %v543
      %v562 = vpack.c.b16 %v544, %v544
      %v563 = vpack.c.b16 %v545, %v545
      %v564 = vpack.c.b16 %v546, %v546
      %v565 = vpack.c.b16 %v547, %v547
      %v566 = vpack.c.b16 %v548, %v548
      %v567 = vpack.c.b16 %v549, %v549
      %v568 = vpack.c.b16 %v550, %v550
      %v875 = vunpack.c.l.b16 %v232
      %v876 = vunpack.c.l.b16 %v233
      %v877 = vunpack.c.l.b16 %v234
      %v878 = vunpack.c.l.b16 %v235
      %v879 = vunpack.c.l.b16 %v236
      %v880 = vunpack.c.l.b16 %v237
      %v881 = vunpack.c.l.b16 %v238
      %v882 = vunpack.c.l.b16 %v239
      %v883 = vunpack.c.l.b16 %v240
      %v884 = vunpack.c.l.b16 %v241
      %v885 = vunpack.c.l.b16 %v242
      %v886 = vunpack.c.l.b16 %v243
      %v887 = vunpack.c.l.b16 %v244
      %v888 = vunpack.c.l.b16 %v245
      %v889 = vunpack.c.l.b16 %v246
      %v890 = vunpack.c.l.b16 %v247
      %v891 = vunpack.c.l.b16 %v248
      %v892 = vunpack.c.l.b16 %v249
      %v893 = vunpack.c.l.b16 %v250
      %v894 = vunpack.c.l.b16 %v251
      %v895 = vunpack.c.l.b16 %v252
      %v896 = vunpack.c.l.b16 %v253
      %v897 = vunpack.c.l.b16 %v254
      %v898 = vunpack.c.l.b16 %v255
      %v899 = vunpack.c.l.b16 %v256
      %v900 = vunpack.c.l.b16 %v257
      %v901 = vunpack.c.l.b16 %v258
      %v902 = vunpack.c.l.b16 %v259
      %v903 = vunpack.c.l.b16 %v260
      %v904 = vunpack.c.l.b16 %v261
      %v905 = vunpack.c.l.b16 %v262
      %v906 = vunpack.c.l.b16 %v263
      %v907 = vunpack.c.l.b16 %v264
      %v908 = vunpack.c.l.b16 %v265
      %v909 = vunpack.c.l.b16 %v266
      %v910 = vunpack.c.l.b16 %v267
      %v911 = vunpack.c.l.b16 %v268
      %v912 = vunpack.c.l.b16 %v269
      %v913 = vunpack.c.l.b16 %v270
      %v914 = vunpack.c.l.b16 %v271
      %v915 = vunpack.c.l.b16 %v272
      %v916 = vunpack.c.l.b16 %v273
      %v917 = vunpack.c.l.b16 %v274
      %v918 = vunpack.c.l.b16 %v275
      %v919 = vunpack.c.l.b16 %v276
      %v920 = vunpack.c.l.b16 %v277
      %v921 = vunpack.c.l.b16 %v278
      %v922 = vunpack.c.l.b16 %v279
      %v923 = vunpack.c.l.b16 %v280
      %v924 = vunpack.c.l.b16 %v281
      %v925 = vunpack.c.l.b16 %v282
      %v926 = vunpack.c.l.b16 %v283
      %v927 = vunpack.c.l.b16 %v284
      %v928 = vunpack.c.l.b16 %v285
      %v929 = vunpack.c.l.b16 %v286
      %v930 = vunpack.c.l.b16 %v287
      %v931 = vunpack.c.l.b16 %v288
      %v932 = vunpack.c.l.b16 %v289
      %v933 = vunpack.c.l.b16 %v290
      %v934 = vunpack.c.l.b16 %v291
      %v935 = vunpack.c.l.b16 %v292
      %v936 = vunpack.c.l.b16 %v293
      %v937 = vunpack.c.l.b16 %v294
      %v938 = vunpack.c.l.b16 %v295
      %v939 = vunpack.c.l.b16 %v296
      %v940 = vunpack.c.l.b16 %v297
      %v941 = vunpack.c.l.b16 %v298
      %v942 = vunpack.c.l.b16 %v299
      %v943 = vunpack.c.l.b16 %v300
      %v944 = vunpack.c.l.b16 %v301
      %v945 = vunpack.c.l.b16 %v302
      %v946 = vunpack.c.l.b16 %v303
      %v947 = vunpack.c.l.b16 %v304
      %v948 = vunpack.c.l.b16 %v305
      %v949 = vunpack.c.l.b16 %v306
      %v950 = vunpack.c.l.b16 %v307
      %v951 = vunpack.c.l.b16 %v308
      %v952 = vunpack.c.l.b16 %v309
      %v953 = vunpack.c.l.b16 %v310
      %v954 = vunpack.c.l.b16 %v311
      %v955 = vunpack.c.l.b16 %v312
      %v956 = vunpack.c.l.b16 %v313
      %v957 = vunpack.c.l.b16 %v314
      %v958 = vunpack.c.l.b16 %v315
      %v959 = vunpack.c.l.b16 %v316
      %v960 = vunpack.c.l.b16 %v317
      %v961 = vunpack.c.l.b16 %v318
      %v962 = vunpack.c.l.b16 %v319
      %v963 = vunpack.c.l.b16 %v320
      %v964 = vunpack.c.l.b16 %v321
      %v965 = vunpack.c.l.b16 %v322
      %v966 = vunpack.c.l.b16 %v323
      %v967 = vunpack.c.l.b16 %v324
      %v968 = vunpack.c.l.b16 %v325
      %v969 = vunpack.c.l.b16 %v326
      %v970 = vunpack.c.l.b16 %v327
      %v971 = vunpack.c.l.b16 %v328
      %v972 = vunpack.c.l.b16 %v329
      %v973 = vunpack.c.l.b16 %v330
      %v974 = vunpack.c.l.b16 %v331
      %v975 = vunpack.c.l.b16 %v332
      %v976 = vunpack.c.l.b16 %v333
      %v977 = vunpack.c.l.b16 %v334
      %v978 = vunpack.c.l.b16 %v335
      %v979 = vunpack.c.l.b16 %v336
      %v980 = vunpack.c.l.b16 %v337
      %v981 = vunpack.c.l.b16 %v338
      %v982 = vunpack.c.l.b16 %v339
      %v983 = vunpack.c.l.b16 %v340
      %v984 = vunpack.c.l.b16 %v341
      %v985 = vunpack.c.l.b16 %v342
      %v986 = vunpack.c.l.b16 %v343
      %v987 = vunpack.c.l.b16 %v344
      %v988 = vunpack.c.l.b16 %v345
      %v989 = vunpack.c.l.b16 %v346
      %v990 = vunpack.c.l.b16 %v347
      %v991 = vunpack.c.l.b16 %v348
      %v992 = vunpack.c.l.b16 %v349
      %v993 = vunpack.c.l.b16 %v350
      %v994 = vunpack.c.l.b16 %v351
      %v995 = vunpack.c.l.b16 %v352
      %v996 = vunpack.c.l.b16 %v353
      %v997 = vunpack.c.l.b16 %v354
      %v998 = vunpack.c.l.b16 %v355
      %v999 = vunpack.c.l.b16 %v356
      %v1000 = vunpack.c.l.b16 %v357
      %v1001 = vunpack.c.l.b16 %v358
      %v1002 = vunpack.c.l.b16 %v359
      %v1003 = vunpack.c.l.b16 %v360
      %v1004 = vunpack.c.l.b16 %v361
      %v1005 = vunpack.c.l.b16 %v362
      %v1006 = vunpack.c.l.b16 %v363
      %v1007 = vunpack.c.l.b16 %v364
      %v1008 = vunpack.c.l.b16 %v365
      %v1009 = vunpack.c.l.b16 %v366
      %v1010 = vunpack.c.l.b16 %v367
      %v1011 = vunpack.c.l.b16 %v368
      %v1012 = vunpack.c.l.b16 %v369
      %v1013 = vunpack.c.l.b16 %v370
      %v1014 = vunpack.c.l.b16 %v371
      %v1015 = vunpack.c.l.b16 %v372
      %v1016 = vunpack.c.l.b16 %v373
      %v1017 = vunpack.c.l.b16 %v374
      %v1018 = vunpack.c.l.b16 %v375
      %v1019 = vunpack.c.l.b16 %v376
      %v1020 = vunpack.c.l.b16 %v377
      %v1021 = vunpack.c.l.b16 %v378
      %v1022 = vunpack.c.l.b16 %v379
      %v1023 = vunpack.c.l.b16 %v380
      %v1024 = vunpack.c.l.b16 %v381
      %v1025 = vunpack.c.l.b16 %v382
      %v1026 = vunpack.c.l.b16 %v383
      %v1027 = vunpack.c.l.b16 %v384
      %v1028 = vunpack.c.l.b16 %v385
      %v1029 = vunpack.c.l.b16 %v386
      %v1030 = vunpack.c.l.b16 %v387
      %v1031 = vunpack.c.l.b16 %v388
      %v1032 = vunpack.c.l.b16 %v389
      %v1033 = vunpack.c.l.b16 %v390
      %v1034 = vunpack.c.l.b16 %v391
      %v1035 = vunpack.c.l.b16 %v392
      %v1036 = vunpack.c.l.b16 %v393
      %v1037 = vunpack.c.l.b16 %v394
      %v1038 = vunpack.c.l.b16 %v395
      %v1039 = vunpack.c.l.b16 %v396
      %v1040 = vunpack.c.l.b16 %v397
      %v1041 = vunpack.c.l.b16 %v398
      %v1042 = vunpack.c.l.b16 %v399
      %v1043 = vunpack.c.l.b16 %v400
      %v1044 = vunpack.c.l.b16 %v401
      %v1045 = vunpack.c.l.b16 %v402
      %v1046 = vunpack.c.l.b16 %v403
      %v1047 = vunpack.c.l.b16 %v404
      %v1048 = vunpack.c.l.b16 %v405
      %v1049 = vunpack.c.l.b16 %v406
      %v1050 = vunpack.c.l.b16 %v407
      %v1051 = vunpack.c.l.b16 %v408
      %v1052 = vunpack.c.l.b16 %v409
      %v1053 = vunpack.c.l.b16 %v410
      %v1054 = vunpack.c.l.b16 %v411
      %v1055 = vunpack.c.l.b16 %v412
      %v1056 = vunpack.c.l.b16 %v413
      %v1057 = vunpack.c.l.b16 %v414
      %v1058 = vunpack.c.l.b16 %v415
      %v1059 = vunpack.c.l.b16 %v416
      %v1060 = vunpack.c.l.b16 %v417
      %v1061 = vunpack.c.l.b16 %v418
      %v1062 = vunpack.c.l.b16 %v419
      %v1063 = vunpack.c.l.b16 %v420
      %v1064 = vunpack.c.l.b16 %v421
      %v1065 = vunpack.c.l.b16 %v422
      %v1066 = vunpack.c.l.b16 %v423
      %v1067 = vunpack.c.l.b16 %v424
      %v1068 = vunpack.c.l.b16 %v425
      %v1069 = vunpack.c.l.b16 %v426
      %v1070 = vunpack.c.l.b16 %v427
      %v1071 = vunpack.c.l.b16 %v428
      %v1072 = vunpack.c.l.b16 %v429
      %v1073 = vunpack.c.l.b16 %v430
      %v1074 = vunpack.c.l.b16 %v431
      %v1075 = vunpack.c.l.b16 %v432
      %v1076 = vunpack.c.l.b16 %v433
      %v1077 = vunpack.c.l.b16 %v434
      %v1078 = vunpack.c.l.b16 %v435
      %v1079 = vunpack.c.l.b16 %v436
      %v1080 = vunpack.c.l.b16 %v437
      %v1081 = vunpack.c.l.b16 %v438
      %v1082 = vunpack.c.l.b16 %v439
      %v1083 = vunpack.c.l.b16 %v440
      %v1084 = vunpack.c.l.b16 %v441
      %v1085 = vunpack.c.l.b16 %v442
      %v1086 = vunpack.c.l.b16 %v443
      %v1087 = vunpack.c.l.b16 %v444
      %v1088 = vunpack.c.l.b16 %v445
      %v1089 = vunpack.c.l.b16 %v446
      %v1090 = vunpack.c.l.b16 %v447
      %v1091 = vunpack.c.l.b16 %v448
      %v1092 = vunpack.c.l.b16 %v449
      %v1093 = vunpack.c.l.b16 %v450
      %v1094 = vunpack.c.l.b16 %v451
      %v1095 = vunpack.c.l.b16 %v452
      %v1096 = vunpack.c.l.b16 %v453
      %v1097 = vunpack.c.l.b16 %v454
      %v1098 = vunpack.c.l.b16 %v455
      %v1099 = vunpack.c.l.b16 %v456
      %v1100 = vunpack.c.l.b16 %v457
      %v1101 = vunpack.c.l.b16 %v458
      %v1102 = vunpack.c.l.b16 %v459
      %v1103 = vunpack.c.l.b16 %v460
      %v1104 = vunpack.c.l.b16 %v461
      %v1105 = vunpack.c.l.b16 %v462
      %v1106 = vunpack.c.l.b16 %v463
      %v1107 = vunpack.c.l.b16 %v464
      %v1108 = vunpack.c.l.b16 %v465
      %v1109 = vunpack.c.l.b16 %v466
      %v1110 = vunpack.c.l.b16 %v467
      %v1111 = vunpack.c.l.b16 %v468
      %v1112 = vunpack.c.l.b16 %v469
      %v1113 = vunpack.c.l.b16 %v470
      %v1114 = vunpack.c.l.b16 %v471
      %v1115 = vunpack.c.l.b16 %v472
      %v1116 = vunpack.c.l.b16 %v473
      %v1117 = vunpack.c.l.b16 %v474
      %v1118 = vunpack.c.l.b16 %v475
      %v1119 = vunpack.c.l.b16 %v476
      %v1120 = vunpack.c.l.b16 %v477
      %v1121 = vunpack.c.l.b16 %v478
      %v1122 = vunpack.c.l.b16 %v479
      %v1123 = vunpack.c.l.b16 %v480
      %v1124 = vunpack.c.l.b16 %v481
      %v1125 = vunpack.c.l.b16 %v482
      %v1126 = vunpack.c.l.b16 %v483
      %v1127 = vunpack.c.l.b16 %v484
      %v1128 = vunpack.c.l.b16 %v485
      %v1129 = vunpack.c.l.b16 %v486
      %v1130 = vunpack.c.l.b16 %v487
      %v1131 = vunpack.c.l.b16 %v488
      %v1132 = vunpack.c.l.b16 %v489
      %v1133 = vunpack.c.l.b16 %v490
      %v1134 = vunpack.c.l.b16 %v491
      %v1135 = vunpack.c.l.b16 %v492
      %v1136 = vunpack.c.l.b16 %v493
      %v1137 = vunpack.c.l.b16 %v494
      %v1138 = vunpack.c.l.b16 %v495
      %v1139 = vunpack.c.l.b16 %v496
      %v1140 = vunpack.c.l.b16 %v497
      %v1141 = vunpack.c.l.b16 %v498
      %v1142 = vunpack.c.l.b16 %v499
      %v1143 = vunpack.c.l.b16 %v500
      %v1144 = vunpack.c.l.b16 %v501
      %v1145 = vunpack.c.l.b16 %v502
      %v1146 = vunpack.c.l.b16 %v503
      %v1147 = vunpack.c.l.b16 %v504
      %v1148 = vunpack.c.l.b16 %v505
      %v1149 = vunpack.c.l.b16 %v506
      %v1150 = vunpack.c.l.b16 %v507
      %v1151 = vunpack.c.l.b16 %v508
      %v1152 = vunpack.c.l.b16 %v509
      %v1153 = vunpack.c.l.b16 %v510
      %v1154 = vunpack.c.l.b16 %v511
      %v1155 = vunpack.c.l.b16 %v512
      %v1156 = vunpack.c.l.b16 %v513
      %v1157 = vunpack.c.l.b16 %v514
      %v1158 = vunpack.c.l.b16 %v515
      %v1159 = vunpack.c.l.b16 %v516
      %v1160 = vunpack.c.l.b16 %v517
      %v1161 = vunpack.c.l.b16 %v518
      %v1162 = vunpack.c.l.b16 %v519
      %v1163 = vpack.c.b16 %v876, %v875
      %v1164 = vpack.c.b16 %v878, %v877
      %v1165 = vpack.c.b16 %v880, %v879
      %v1166 = vpack.c.b16 %v882, %v881
      %v1167 = vpack.c.b16 %v884, %v883
      %v1168 = vpack.c.b16 %v886, %v885
      %v1169 = vpack.c.b16 %v888, %v887
      %v1170 = vpack.c.b16 %v890, %v889
      %v1171 = vpack.c.b16 %v892, %v891
      %v1172 = vpack.c.b16 %v894, %v893
      %v1173 = vpack.c.b16 %v896, %v895
      %v1174 = vpack.c.b16 %v898, %v897
      %v1175 = vpack.c.b16 %v900, %v899
      %v1176 = vpack.c.b16 %v902, %v901
      %v1177 = vpack.c.b16 %v904, %v903
      %v1178 = vpack.c.b16 %v906, %v905
      %v1179 = vpack.c.b16 %v908, %v907
      %v1180 = vpack.c.b16 %v910, %v909
      %v1181 = vpack.c.b16 %v912, %v911
      %v1182 = vpack.c.b16 %v914, %v913
      %v1183 = vpack.c.b16 %v916, %v915
      %v1184 = vpack.c.b16 %v918, %v917
      %v1185 = vpack.c.b16 %v920, %v919
      %v1186 = vpack.c.b16 %v922, %v921
      %v1187 = vpack.c.b16 %v924, %v923
      %v1188 = vpack.c.b16 %v926, %v925
      %v1189 = vpack.c.b16 %v928, %v927
      %v1190 = vpack.c.b16 %v930, %v929
      %v1191 = vpack.c.b16 %v932, %v931
      %v1192 = vpack.c.b16 %v934, %v933
      %v1193 = vpack.c.b16 %v936, %v935
      %v1194 = vpack.c.b16 %v938, %v937
      %v1195 = vpack.c.b16 %v940, %v939
      %v1196 = vpack.c.b16 %v942, %v941
      %v1197 = vpack.c.b16 %v944, %v943
      %v1198 = vpack.c.b16 %v946, %v945
      %v1199 = vpack.c.b16 %v948, %v947
      %v1200 = vpack.c.b16 %v950, %v949
      %v1201 = vpack.c.b16 %v952, %v951
      %v1202 = vpack.c.b16 %v954, %v953
      %v1203 = vpack.c.b16 %v956, %v955
      %v1204 = vpack.c.b16 %v958, %v957
      %v1205 = vpack.c.b16 %v960, %v959
      %v1206 = vpack.c.b16 %v962, %v961
      %v1207 = vpack.c.b16 %v964, %v963
      %v1208 = vpack.c.b16 %v966, %v965
      %v1209 = vpack.c.b16 %v968, %v967
      %v1210 = vpack.c.b16 %v970, %v969
      %v1211 = vpack.c.b16 %v972, %v971
      %v1212 = vpack.c.b16 %v974, %v973
      %v1213 = vpack.c.b16 %v976, %v975
      %v1214 = vpack.c.b16 %v978, %v977
      %v1215 = vpack.c.b16 %v980, %v979
      %v1216 = vpack.c.b16 %v982, %v981
      %v1217 = vpack.c.b16 %v984, %v983
      %v1218 = vpack.c.b16 %v986, %v985
      %v1219 = vpack.c.b16 %v988, %v987
      %v1220 = vpack.c.b16 %v990, %v989
      %v1221 = vpack.c.b16 %v992, %v991
      %v1222 = vpack.c.b16 %v994, %v993
      %v1223 = vpack.c.b16 %v996, %v995
      %v1224 = vpack.c.b16 %v998, %v997
      %v1225 = vpack.c.b16 %v1000, %v999
      %v1226 = vpack.c.b16 %v1002, %v1001
      %v1227 = vpack.c.b16 %v1004, %v1003
      %v1228 = vpack.c.b16 %v1006, %v1005
      %v1229 = vpack.c.b16 %v1008, %v1007
      %v1230 = vpack.c.b16 %v1010, %v1009
      %v1231 = vpack.c.b16 %v1012, %v1011
      %v1232 = vpack.c.b16 %v1014, %v1013
      %v1233 = vpack.c.b16 %v1016, %v1015
      %v1234 = vpack.c.b16 %v1018, %v1017
      %v1235 = vpack.c.b16 %v1020, %v1019
      %v1236 = vpack.c.b16 %v1022, %v1021
      %v1237 = vpack.c.b16 %v1024, %v1023
      %v1238 = vpack.c.b16 %v1026, %v1025
      %v1239 = vpack.c.b16 %v1028, %v1027
      %v1240 = vpack.c.b16 %v1030, %v1029
      %v1241 = vpack.c.b16 %v1032, %v1031
      %v1242 = vpack.c.b16 %v1034, %v1033
      %v1243 = vpack.c.b16 %v1036, %v1035
      %v1244 = vpack.c.b16 %v1038, %v1037
      %v1245 = vpack.c.b16 %v1040, %v1039
      %v1246 = vpack.c.b16 %v1042, %v1041
      %v1247 = vpack.c.b16 %v1044, %v1043
      %v1248 = vpack.c.b16 %v1046, %v1045
      %v1249 = vpack.c.b16 %v1048, %v1047
      %v1250 = vpack.c.b16 %v1050, %v1049
      %v1251 = vpack.c.b16 %v1052, %v1051
      %v1252 = vpack.c.b16 %v1054, %v1053
      %v1253 = vpack.c.b16 %v1056, %v1055
      %v1254 = vpack.c.b16 %v1058, %v1057
      %v1255 = vpack.c.b16 %v1060, %v1059
      %v1256 = vpack.c.b16 %v1062, %v1061
      %v1257 = vpack.c.b16 %v1064, %v1063
      %v1258 = vpack.c.b16 %v1066, %v1065
      %v1259 = vpack.c.b16 %v1068, %v1067
      %v1260 = vpack.c.b16 %v1070, %v1069
      %v1261 = vpack.c.b16 %v1072, %v1071
      %v1262 = vpack.c.b16 %v1074, %v1073
      %v1263 = vpack.c.b16 %v1076, %v1075
      %v1264 = vpack.c.b16 %v1078, %v1077
      %v1265 = vpack.c.b16 %v1080, %v1079
      %v1266 = vpack.c.b16 %v1082, %v1081
      %v1267 = vpack.c.b16 %v1084, %v1083
      %v1268 = vpack.c.b16 %v1086, %v1085
      %v1269 = vpack.c.b16 %v1088, %v1087
      %v1270 = vpack.c.b16 %v1090, %v1089
      %v1271 = vpack.c.b16 %v1092, %v1091
      %v1272 = vpack.c.b16 %v1094, %v1093
      %v1273 = vpack.c.b16 %v1096, %v1095
      %v1274 = vpack.c.b16 %v1098, %v1097
      %v1275 = vpack.c.b16 %v1100, %v1099
      %v1276 = vpack.c.b16 %v1102, %v1101
      %v1277 = vpack.c.b16 %v1104, %v1103
      %v1278 = vpack.c.b16 %v1106, %v1105
      %v1279 = vpack.c.b16 %v1108, %v1107
      %v1280 = vpack.c.b16 %v1110, %v1109
      %v1281 = vpack.c.b16 %v1112, %v1111
      %v1282 = vpack.c.b16 %v1114, %v1113
      %v1283 = vpack.c.b16 %v1116, %v1115
      %v1284 = vpack.c.b16 %v1118, %v1117
      %v1285 = vpack.c.b16 %v1120, %v1119
      %v1286 = vpack.c.b16 %v1122, %v1121
      %v1287 = vpack.c.b16 %v1124, %v1123
      %v1288 = vpack.c.b16 %v1126, %v1125
      %v1289 = vpack.c.b16 %v1128, %v1127
      %v1290 = vpack.c.b16 %v1130, %v1129
      %v1291 = vpack.c.b16 %v1132, %v1131
      %v1292 = vpack.c.b16 %v1134, %v1133
      %v1293 = vpack.c.b16 %v1136, %v1135
      %v1294 = vpack.c.b16 %v1138, %v1137
      %v1295 = vpack.c.b16 %v1140, %v1139
      %v1296 = vpack.c.b16 %v1142, %v1141
      %v1297 = vpack.c.b16 %v1144, %v1143
      %v1298 = vpack.c.b16 %v1146, %v1145
      %v1299 = vpack.c.b16 %v1148, %v1147
      %v1300 = vpack.c.b16 %v1150, %v1149
      %v1301 = vpack.c.b16 %v1152, %v1151
      %v1302 = vpack.c.b16 %v1154, %v1153
      %v1303 = vpack.c.b16 %v1156, %v1155
      %v1304 = vpack.c.b16 %v1158, %v1157
      %v1305 = vpack.c.b16 %v1160, %v1159
      %v1306 = vpack.c.b16 %v1162, %v1161
      %1451 = vmatpush.bf16.msra.mxu0 %v1170
      %1452 = vmatpush.bf16.msra.mxu0 %v1169
      %1453 = vmatpush.bf16.msra.mxu0 %v1168
      %1454 = vmatpush.bf16.msra.mxu0 %v1167
      %1455 = vmatpush.bf16.msra.mxu0 %v1166
      %1456 = vmatpush.bf16.msra.mxu0 %v1165
      %1457 = vmatpush.bf16.msra.mxu0 %v1164
      %1458 = vmatpush.bf16.msra.mxu0 %v1163
      %1459 = vmatmul.bf16.gmra.mxu0 %v551
      %v1460 = vpop.f32.mrf.mxu0
      %v1461 = vadd.f32 %v522, %v1460
      %v1462 = vpop.f32.mrf.mxu0
      %1463 = vdwg.mxu0
      %1464 = vmatpush.bf16.msra.mxu0 %v1178
      %1465 = vmatpush.bf16.msra.mxu0 %v1177
      %1466 = vmatpush.bf16.msra.mxu0 %v1176
      %1467 = vmatpush.bf16.msra.mxu0 %v1175
      %1468 = vmatpush.bf16.msra.mxu0 %v1174
      %1469 = vmatpush.bf16.msra.mxu0 %v1173
      %1470 = vmatpush.bf16.msra.mxu0 %v1172
      %1471 = vmatpush.bf16.msra.mxu0 %v1171
      %1472 = vmatmul.bf16.gmra.mxu0 %v552
      %v1473 = vpop.f32.mrf.mxu0
      %v1474 = vadd.f32 %v1461, %v1473
      %v1475 = vpop.f32.mrf.mxu0
      %1476 = vdwg.mxu0
      %1477 = vmatpush.bf16.msra.mxu0 %v1186
      %1478 = vmatpush.bf16.msra.mxu0 %v1185
      %1479 = vmatpush.bf16.msra.mxu0 %v1184
      %1480 = vmatpush.bf16.msra.mxu0 %v1183
      %1481 = vmatpush.bf16.msra.mxu0 %v1182
      %1482 = vmatpush.bf16.msra.mxu0 %v1181
      %1483 = vmatpush.bf16.msra.mxu0 %v1180
      %1484 = vmatpush.bf16.msra.mxu0 %v1179
      %1485 = vmatmul.bf16.gmra.mxu0 %v553
      %v1486 = vpop.f32.mrf.mxu0
      %v1487 = vadd.f32 %v1474, %v1486
      %v1488 = vpop.f32.mrf.mxu0
      %1489 = vdwg.mxu0
      %1490 = vmatpush.bf16.msra.mxu0 %v1194
      %1491 = vmatpush.bf16.msra.mxu0 %v1193
      %1492 = vmatpush.bf16.msra.mxu0 %v1192
      %1493 = vmatpush.bf16.msra.mxu0 %v1191
      %1494 = vmatpush.bf16.msra.mxu0 %v1190
      %1495 = vmatpush.bf16.msra.mxu0 %v1189
      %1496 = vmatpush.bf16.msra.mxu0 %v1188
      %1497 = vmatpush.bf16.msra.mxu0 %v1187
      %1498 = vmatmul.bf16.gmra.mxu0 %v554
      %v1499 = vpop.f32.mrf.mxu0
      %v1500 = vadd.f32 %v1487, %v1499
      %v1501 = vpop.f32.mrf.mxu0
      %1502 = vdwg.mxu0
      %1503 = vmatpush.bf16.msra.mxu0 %v1202
      %1504 = vmatpush.bf16.msra.mxu0 %v1201
      %1505 = vmatpush.bf16.msra.mxu0 %v1200
      %1506 = vmatpush.bf16.msra.mxu0 %v1199
      %1507 = vmatpush.bf16.msra.mxu0 %v1198
      %1508 = vmatpush.bf16.msra.mxu0 %v1197
      %1509 = vmatpush.bf16.msra.mxu0 %v1196
      %1510 = vmatpush.bf16.msra.mxu0 %v1195
      %1511 = vmatmul.bf16.gmra.mxu0 %v555
      %v1512 = vpop.f32.mrf.mxu0
      %v1513 = vadd.f32 %v1500, %v1512
      %v1514 = vpop.f32.mrf.mxu0
      %1515 = vdwg.mxu0
      %1516 = vmatpush.bf16.msra.mxu0 %v1210
      %1517 = vmatpush.bf16.msra.mxu0 %v1209
      %1518 = vmatpush.bf16.msra.mxu0 %v1208
      %1519 = vmatpush.bf16.msra.mxu0 %v1207
      %1520 = vmatpush.bf16.msra.mxu0 %v1206
      %1521 = vmatpush.bf16.msra.mxu0 %v1205
      %1522 = vmatpush.bf16.msra.mxu0 %v1204
      %1523 = vmatpush.bf16.msra.mxu0 %v1203
      %1524 = vmatmul.bf16.gmra.mxu0 %v556
      %v1525 = vpop.f32.mrf.mxu0
      %v1526 = vadd.f32 %v1513, %v1525
      %v1527 = vpop.f32.mrf.mxu0
      %1528 = vdwg.mxu0
      %1529 = vmatpush.bf16.msra.mxu0 %v1218
      %1530 = vmatpush.bf16.msra.mxu0 %v1217
      %1531 = vmatpush.bf16.msra.mxu0 %v1216
      %1532 = vmatpush.bf16.msra.mxu0 %v1215
      %1533 = vmatpush.bf16.msra.mxu0 %v1214
      %1534 = vmatpush.bf16.msra.mxu0 %v1213
      %1535 = vmatpush.bf16.msra.mxu0 %v1212
      %1536 = vmatpush.bf16.msra.mxu0 %v1211
      %1537 = vmatmul.bf16.gmra.mxu0 %v557
      %v1538 = vpop.f32.mrf.mxu0
      %v1539 = vadd.f32 %v1526, %v1538
      %v1540 = vpop.f32.mrf.mxu0
      %1541 = vdwg.mxu0
      %1542 = vmatpush.bf16.msra.mxu0 %v1226
      %1543 = vmatpush.bf16.msra.mxu0 %v1225
      %1544 = vmatpush.bf16.msra.mxu0 %v1224
      %1545 = vmatpush.bf16.msra.mxu0 %v1223
      %1546 = vmatpush.bf16.msra.mxu0 %v1222
      %1547 = vmatpush.bf16.msra.mxu0 %v1221
      %1548 = vmatpush.bf16.msra.mxu0 %v1220
      %1549 = vmatpush.bf16.msra.mxu0 %v1219
      %1550 = vmatmul.bf16.gmra.mxu0 %v558
      %v1551 = vpop.f32.mrf.mxu0
      %v1552 = vadd.f32 %v1539, %v1551
      %v1553 = vpop.f32.mrf.mxu0
      %1554 = vdwg.mxu0
      %1555 = vmatpush.bf16.msra.mxu0 %v1234
      %1556 = vmatpush.bf16.msra.mxu0 %v1233
      %1557 = vmatpush.bf16.msra.mxu0 %v1232
      %1558 = vmatpush.bf16.msra.mxu0 %v1231
      %1559 = vmatpush.bf16.msra.mxu0 %v1230
      %1560 = vmatpush.bf16.msra.mxu0 %v1229
      %1561 = vmatpush.bf16.msra.mxu0 %v1228
      %1562 = vmatpush.bf16.msra.mxu0 %v1227
      %1563 = vmatmul.bf16.gmra.mxu0 %v559
      %v1564 = vpop.f32.mrf.mxu0
      %v1565 = vadd.f32 %v1552, %v1564
      %v1566 = vpop.f32.mrf.mxu0
      %1567 = vdwg.mxu0
      %1568 = vmatpush.bf16.msra.mxu0 %v1242
      %1569 = vmatpush.bf16.msra.mxu0 %v1241
      %1570 = vmatpush.bf16.msra.mxu0 %v1240
      %1571 = vmatpush.bf16.msra.mxu0 %v1239
      %1572 = vmatpush.bf16.msra.mxu0 %v1238
      %1573 = vmatpush.bf16.msra.mxu0 %v1237
      %1574 = vmatpush.bf16.msra.mxu0 %v1236
      %1575 = vmatpush.bf16.msra.mxu0 %v1235
      %1576 = vmatmul.bf16.gmra.mxu0 %v560
      %v1577 = vpop.f32.mrf.mxu0
      %v1578 = vadd.f32 %v1565, %v1577
      %v1579 = vpop.f32.mrf.mxu0
      %1580 = vdwg.mxu0
      %1581 = vmatpush.bf16.msra.mxu0 %v1250
      %1582 = vmatpush.bf16.msra.mxu0 %v1249
      %1583 = vmatpush.bf16.msra.mxu0 %v1248
      %1584 = vmatpush.bf16.msra.mxu0 %v1247
      %1585 = vmatpush.bf16.msra.mxu0 %v1246
      %1586 = vmatpush.bf16.msra.mxu0 %v1245
      %1587 = vmatpush.bf16.msra.mxu0 %v1244
      %1588 = vmatpush.bf16.msra.mxu0 %v1243
      %1589 = vmatmul.bf16.gmra.mxu0 %v561
      %v1590 = vpop.f32.mrf.mxu0
      %v1591 = vadd.f32 %v1578, %v1590
      %v1592 = vpop.f32.mrf.mxu0
      %1593 = vdwg.mxu0
      %1594 = vmatpush.bf16.msra.mxu0 %v1258
      %1595 = vmatpush.bf16.msra.mxu0 %v1257
      %1596 = vmatpush.bf16.msra.mxu0 %v1256
      %1597 = vmatpush.bf16.msra.mxu0 %v1255
      %1598 = vmatpush.bf16.msra.mxu0 %v1254
      %1599 = vmatpush.bf16.msra.mxu0 %v1253
      %1600 = vmatpush.bf16.msra.mxu0 %v1252
      %1601 = vmatpush.bf16.msra.mxu0 %v1251
      %1602 = vmatmul.bf16.gmra.mxu0 %v562
      %v1603 = vpop.f32.mrf.mxu0
      %v1604 = vadd.f32 %v1591, %v1603
      %v1605 = vpop.f32.mrf.mxu0
      %1606 = vdwg.mxu0
      %1607 = vmatpush.bf16.msra.mxu0 %v1266
      %1608 = vmatpush.bf16.msra.mxu0 %v1265
      %1609 = vmatpush.bf16.msra.mxu0 %v1264
      %1610 = vmatpush.bf16.msra.mxu0 %v1263
      %1611 = vmatpush.bf16.msra.mxu0 %v1262
      %1612 = vmatpush.bf16.msra.mxu0 %v1261
      %1613 = vmatpush.bf16.msra.mxu0 %v1260
      %1614 = vmatpush.bf16.msra.mxu0 %v1259
      %1615 = vmatmul.bf16.gmra.mxu0 %v563
      %v1616 = vpop.f32.mrf.mxu0
      %v1617 = vadd.f32 %v1604, %v1616
      %v1618 = vpop.f32.mrf.mxu0
      %1619 = vdwg.mxu0
      %1620 = vmatpush.bf16.msra.mxu0 %v1274
      %1621 = vmatpush.bf16.msra.mxu0 %v1273
      %1622 = vmatpush.bf16.msra.mxu0 %v1272
      %1623 = vmatpush.bf16.msra.mxu0 %v1271
      %1624 = vmatpush.bf16.msra.mxu0 %v1270
      %1625 = vmatpush.bf16.msra.mxu0 %v1269
      %1626 = vmatpush.bf16.msra.mxu0 %v1268
      %1627 = vmatpush.bf16.msra.mxu0 %v1267
      %1628 = vmatmul.bf16.gmra.mxu0 %v564
      %v1629 = vpop.f32.mrf.mxu0
      %v1630 = vadd.f32 %v1617, %v1629
      %v1631 = vpop.f32.mrf.mxu0
      %1632 = vdwg.mxu0
      %1633 = vmatpush.bf16.msra.mxu0 %v1282
      %1634 = vmatpush.bf16.msra.mxu0 %v1281
      %1635 = vmatpush.bf16.msra.mxu0 %v1280
      %1636 = vmatpush.bf16.msra.mxu0 %v1279
      %1637 = vmatpush.bf16.msra.mxu0 %v1278
      %1638 = vmatpush.bf16.msra.mxu0 %v1277
      %1639 = vmatpush.bf16.msra.mxu0 %v1276
      %1640 = vmatpush.bf16.msra.mxu0 %v1275
      %1641 = vmatmul.bf16.gmra.mxu0 %v565
      %v1642 = vpop.f32.mrf.mxu0
      %v1643 = vadd.f32 %v1630, %v1642
      %v1644 = vpop.f32.mrf.mxu0
      %1645 = vdwg.mxu0
      %1646 = vmatpush.bf16.msra.mxu0 %v1290
      %1647 = vmatpush.bf16.msra.mxu0 %v1289
      %1648 = vmatpush.bf16.msra.mxu0 %v1288
      %1649 = vmatpush.bf16.msra.mxu0 %v1287
      %1650 = vmatpush.bf16.msra.mxu0 %v1286
      %1651 = vmatpush.bf16.msra.mxu0 %v1285
      %1652 = vmatpush.bf16.msra.mxu0 %v1284
      %1653 = vmatpush.bf16.msra.mxu0 %v1283
      %1654 = vmatmul.bf16.gmra.mxu0 %v566
      %v1655 = vpop.f32.mrf.mxu0
      %v1656 = vadd.f32 %v1643, %v1655
      %v1657 = vpop.f32.mrf.mxu0
      %1658 = vdwg.mxu0
      %1659 = vmatpush.bf16.msra.mxu0 %v1298
      %1660 = vmatpush.bf16.msra.mxu0 %v1297
      %1661 = vmatpush.bf16.msra.mxu0 %v1296
      %1662 = vmatpush.bf16.msra.mxu0 %v1295
      %1663 = vmatpush.bf16.msra.mxu0 %v1294
      %1664 = vmatpush.bf16.msra.mxu0 %v1293
      %1665 = vmatpush.bf16.msra.mxu0 %v1292
      %1666 = vmatpush.bf16.msra.mxu0 %v1291
      %1667 = vmatmul.bf16.gmra.mxu0 %v567
      %v1668 = vpop.f32.mrf.mxu0
      %v1669 = vadd.f32 %v1656, %v1668
      %v1670 = vpop.f32.mrf.mxu0
      %1671 = vdwg.mxu0
      %1672 = vmatpush.bf16.msra.mxu0 %v1306
      %1673 = vmatpush.bf16.msra.mxu0 %v1305
      %1674 = vmatpush.bf16.msra.mxu0 %v1304
      %1675 = vmatpush.bf16.msra.mxu0 %v1303
      %1676 = vmatpush.bf16.msra.mxu0 %v1302
      %1677 = vmatpush.bf16.msra.mxu0 %v1301
      %1678 = vmatpush.bf16.msra.mxu0 %v1300
      %1679 = vmatpush.bf16.msra.mxu0 %v1299
      %1680 = vmatmul.bf16.gmra.mxu0 %v568
      %v1681 = vpop.f32.mrf.mxu0
      %v1682 = vadd.f32 %v1669, %v1681
      %v1683 = vpop.f32.mrf.mxu0
      %1684 = vdwg.mxu0
      %v1685 = vmax.f32 %v1682, 0.0
      %v1686 = vpack.c.bf16 %v1685, %v1685
      %v1687 = vld [vmem:[%s3] sm:$0xf]
      %v1688 = vld [vmem:[%s3 + $0x4] sm:$0xf]
      %v1689 = vld [vmem:[%s3 + $0x8] sm:$0xf]
      %v1690 = vld [vmem:[%s3 + $0xc] sm:$0xf]
      %v1691 = vld [vmem:[%s3 + $0x10] sm:$0xf]
      %v1692 = vld [vmem:[%s3 + $0x14] sm:$0xf]
      %v1693 = vld [vmem:[%s3 + $0x18] sm:$0xf]
      %v1694 = vld [vmem:[%s3 + $0x1c] sm:$0xf]
      %v1695 = vld [vmem:[%s3 + $0x20] sm:$0xf]
      %v1696 = vld [vmem:[%s3 + $0x24] sm:$0xf]
      %v1697 = vld [vmem:[%s3 + $0x28] sm:$0xf]
      %v1698 = vld [vmem:[%s3 + $0x2c] sm:$0xf]
      %v1699 = vld [vmem:[%s3 + $0x30] sm:$0xf]
      %v1700 = vld [vmem:[%s3 + $0x34] sm:$0xf]
      %v1701 = vld [vmem:[%s3 + $0x38] sm:$0xf]
      %v1702 = vld [vmem:[%s3 + $0x3c] sm:$0xf]
      %v1703 = vld [vmem:[%s4] sm:$0x1]
      %v1705 = vperm.slane %v1703, 0
      %v1723 = vunpack.c.l.b16 %v1687
      %v1724 = vunpack.c.l.b16 %v1688
      %v1725 = vunpack.c.l.b16 %v1689
      %v1726 = vunpack.c.l.b16 %v1690
      %v1727 = vunpack.c.l.b16 %v1691
      %v1728 = vunpack.c.l.b16 %v1692
      %v1729 = vunpack.c.l.b16 %v1693
      %v1730 = vunpack.c.l.b16 %v1694
      %v1731 = vunpack.c.l.b16 %v1695
      %v1732 = vunpack.c.l.b16 %v1696
      %v1733 = vunpack.c.l.b16 %v1697
      %v1734 = vunpack.c.l.b16 %v1698
      %v1735 = vunpack.c.l.b16 %v1699
      %v1736 = vunpack.c.l.b16 %v1700
      %v1737 = vunpack.c.l.b16 %v1701
      %v1738 = vunpack.c.l.b16 %v1702
      %v1739 = vpack.c.b16 %v1724, %v1723
      %v1740 = vpack.c.b16 %v1726, %v1725
      %v1741 = vpack.c.b16 %v1728, %v1727
      %v1742 = vpack.c.b16 %v1730, %v1729
      %v1743 = vpack.c.b16 %v1732, %v1731
      %v1744 = vpack.c.b16 %v1734, %v1733
      %v1745 = vpack.c.b16 %v1736, %v1735
      %v1746 = vpack.c.b16 %v1738, %v1737
      %1755 = vmatpush.bf16.msra.mxu0 %v1746
      %1756 = vmatpush.bf16.msra.mxu0 %v1745
      %1757 = vmatpush.bf16.msra.mxu0 %v1744
      %1758 = vmatpush.bf16.msra.mxu0 %v1743
      %1759 = vmatpush.bf16.msra.mxu0 %v1742
      %1760 = vmatpush.bf16.msra.mxu0 %v1741
      %1761 = vmatpush.bf16.msra.mxu0 %v1740
      %1762 = vmatpush.bf16.msra.mxu0 %v1739
      %1763 = vmatmul.bf16.gmra.mxu0 %v1686
      %v1764 = vpop.f32.mrf.mxu0
      %v1765 = vadd.f32 %v1705, %v1764
      %v1766 = vpop.f32.mrf.mxu0
      %1767 = vdwg.mxu0
      %1768 = vst [vmem:[%s222] sm:$0xff] %v1765
      %p1769 = scmp.lt.s32.totalorder %s16, 1
      %s1770 = scalar_select %p1769, %s16, 1
      %s1771 = smul.addr %s1770, 8
      %s1772 = scalar_lea.vmem %s5, %s1771
      // Predicated region
      $region41: #{traffic_sign_net.5} parent=39 // pred_check
        %p1773 = pneg %p144
      $region42: #{traffic_sign_net.5} parent=39 // pred_check_branch
        %1775 = sbr.rel (%p1773) target = $region44
      $region43: #{traffic_sign_net.5} parent=39 // pred_region
        _
      $region44: #{traffic_sign_net.5} parent=39 // pred_fallthru
        _
    $region40: #{traffic_sign_net.5} parent=5 // pred_fallthru
      _
    %p1776 = scmp.le.s32.totalorder 2, %s11
    // Predicated region
    $region45: #{traffic_sign_net.5} parent=5 // pred_check
      %p1777 = pneg %p1776
    $region46: #{traffic_sign_net.5} parent=5 // pred_check_branch
      %1779 = sbr.rel (%p1777) target = $region48
    $region47: #{traffic_sign_net.5} parent=5 // pred_region
      %s1780 = ssub.s32 %s11, 2
      // Predicated region
      $region49: #{traffic_sign_net.5} parent=47 // pred_check
        %p1781 = pneg %p150
      $region50: #{traffic_sign_net.5} parent=47 // pred_check_branch
        %1783 = sbr.rel (%p1781) target = $region52
      $region51: #{traffic_sign_net.5} parent=47 // pred_region
        %p1784 = scmp.lt.s32.totalorder %s17, 1
        %s1785 = scalar_select %p1784, %s17, 1
        %s1786 = smul.addr %s1785, 8
        %s1787 = scalar_lea.vmem %s5, %s1786
      $region52: #{traffic_sign_net.5} parent=47 // pred_fallthru
        _
    $region48: #{traffic_sign_net.5} parent=5 // pred_fallthru
      _
  $region6: #{traffic_sign_net.5} parent=0 // loop_footer
    %s15 = sadd.s32 1, %s11
  $region7: #{traffic_sign_net.5} parent=0 // loop_footer_branch
    %10 = sbr.rel target = $region3
  $region8: #{traffic_sign_net.5} parent=0 // loop_exit
    _

</llo_original>
